<compile_context>
chip_gen: v6e
topology: v6e:2x2x1
jax: 0.10.0
libtpu: 0.0.40
codegen_flags: <defaults>
</compile_context>

<pallas_src>
import math

import jax
import jax.numpy as jnp
from jax.experimental import pallas as pl
from jax.experimental.pallas import tpu as pltpu

# ---------------------------------------------------------------------------
# Model hyper-parameters (small, but structurally consistent with the module:
# pre_hidden=879 is the resized vocab size of the MLM head).
# ---------------------------------------------------------------------------
VOCAB = 879            # pre_hidden -> resize_token_embeddings(879)
VOCAB_PAD = 896        # 7 * 128 -> lane-dense decoder weight / logits
SEQ = 8                # small sequence length (<= 512 max_length)
D = 32                 # hidden size (small stand-in for 768)
H = 2                  # attention heads
DH = D // H            # per-head dim
FFN = 64               # intermediate size
LAYERS = 2             # encoder layers
EPS = 1e-5
PAD_IDX = 1            # RoBERTa padding_idx (positions start at PAD_IDX + 1)


def _gelu(x):
    # tanh-approximation GELU. (HF RoBERTa default is exact erf GELU; the
    # tanh form is numerically very close and guaranteed to lower on TPU.)
    c = math.sqrt(2.0 / math.pi)
    return 0.5 * x * (1.0 + jnp.tanh(c * (x + 0.044715 * x * x * x)))


def _layernorm(x, g, b):
    mean = jnp.mean(x, axis=-1, keepdims=True)
    var = jnp.mean((x - mean) ** 2, axis=-1, keepdims=True)
    return (x - mean) * jax.lax.rsqrt(var + EPS) * g + b


# ---------------------------------------------------------------------------
# Single fused Pallas kernel: token ids -> logits (whole forward pass)
# ---------------------------------------------------------------------------
def _fused_forward_kernel(
    ids_ref,                                    # SMEM (S,) int32
    wemb_ref, embc_ref, eg_ref, eb_ref,         # embeddings
    wqkv_ref, bqkv_ref, wo_ref, bo_ref,         # per-layer (stacked) attention
    ln1g_ref, ln1b_ref,
    w1_ref, b1_ref, w2_ref, b2_ref,             # per-layer (stacked) FFN
    ln2g_ref, ln2b_ref,
    hdw_ref, hdb_ref, hlg_ref, hlb_ref,         # MLM head dense + LN
    decw_ref, decb_ref,                         # decoder (D -> VOCAB_PAD)
    out_ref,                                    # (S, VOCAB_PAD) f32
):
    # ---- embedding lookup as a one-hot matmul (ids come from SMEM) --------
    ids_col = jnp.concatenate(
        [jnp.full((1, 1), ids_ref[i], jnp.int32) for i in range(SEQ)], axis=0
    )                                                           # (S, 1)
    onehot = (
        jax.lax.broadcasted_iota(jnp.int32, (SEQ, VOCAB_PAD), 1) == ids_col
    ).astype(jnp.float32)                                       # (S, VOCAB_PAD)
    h = jnp.dot(onehot, wemb_ref[...], preferred_element_type=jnp.float32)
    h = h + embc_ref[...]                                       # + pos + type
    h = _layernorm(h, eg_ref[...], eb_ref[...])

    scale = 1.0 / math.sqrt(DH)

    # ---- encoder layers (statically unrolled) ------------------------------
    for l in range(LAYERS):
        # fused QKV projection: (S, D) @ (D, 3D)
        qkv = jnp.dot(h, wqkv_ref[l], preferred_element_type=jnp.float32)
        qkv = qkv + bqkv_ref[l]

        ctx_heads = []
        for hd in range(H):
            q = qkv[:, hd * DH: (hd + 1) * DH]                  # (S, DH)
            k = qkv[:, D + hd * DH: D + (hd + 1) * DH]          # (S, DH)
            v = qkv[:, 2 * D + hd * DH: 2 * D + (hd + 1) * DH]  # (S, DH)
            s = jax.lax.dot_general(
                q, k, (((1,), (1,)), ((), ())),
                preferred_element_type=jnp.float32) * scale     # (S, S)
            s = s - jnp.max(s, axis=-1, keepdims=True)
            p = jnp.exp(s)
            p = p * pl.reciprocal(jnp.sum(p, axis=-1, keepdims=True),
                                  approx=True)
            ctx_heads.append(
                jnp.dot(p, v, preferred_element_type=jnp.float32))  # (S, DH)
        ctx = jnp.concatenate(ctx_heads, axis=-1)               # (S, D)

        attn_out = jnp.dot(ctx, wo_ref[l],
                           preferred_element_type=jnp.float32) + bo_ref[l]
        h = _layernorm(attn_out + h, ln1g_ref[l], ln1b_ref[l])

        ff = _gelu(jnp.dot(h, w1_ref[l],
                           preferred_element_type=jnp.float32) + b1_ref[l])
        ff = jnp.dot(ff, w2_ref[l],
                     preferred_element_type=jnp.float32) + b2_ref[l]
        h = _layernorm(ff + h, ln2g_ref[l], ln2b_ref[l])

    # ---- MLM head: dense + gelu + LN + decoder -----------------------------
    hh = _gelu(jnp.dot(h, hdw_ref[...],
                       preferred_element_type=jnp.float32) + hdb_ref[...])
    hh = _layernorm(hh, hlg_ref[...], hlb_ref[...])
    logits = jnp.dot(hh, decw_ref[...],
                     preferred_element_type=jnp.float32) + decb_ref[...]
    out_ref[...] = logits.astype(out_ref.dtype)


# ---------------------------------------------------------------------------
# Parameter initialization (deterministic, synthetic).  Per-layer weights are
# stacked along a leading LAYERS axis so the fused kernel has a fixed arity.
# ---------------------------------------------------------------------------
def init_params(key):
    def nrm(k, shape, scale=0.02):
        return scale * jax.random.normal(k, shape, dtype=jnp.float32)

    keys = iter(jax.random.split(key, 4 + 4 * LAYERS + 4))

    word = nrm(next(keys), (VOCAB, D))
    p = {
        # pad vocab rows to VOCAB_PAD (ids never reach the padded rows)
        "word_emb": jnp.pad(word, ((0, VOCAB_PAD - VOCAB), (0, 0))),
        # HF RoBERTa: max_position_embeddings = 512 + padding_idx + 1 = 514
        "pos_emb": nrm(next(keys), (514, D)),
        "type_emb": nrm(next(keys), (1, D)),
        "emb_ln_g": jnp.ones((1, D), jnp.float32),
        "emb_ln_b": jnp.zeros((1, D), jnp.float32),
        # stacked encoder-layer params
        "wqkv": jnp.stack([nrm(next(keys), (D, 3 * D)) for _ in range(LAYERS)]),
        "bqkv": jnp.zeros((LAYERS, 1, 3 * D), jnp.float32),
        "wo": jnp.stack([nrm(next(keys), (D, D)) for _ in range(LAYERS)]),
        "bo": jnp.zeros((LAYERS, 1, D), jnp.float32),
        "ln1_g": jnp.ones((LAYERS, 1, D), jnp.float32),
        "ln1_b": jnp.zeros((LAYERS, 1, D), jnp.float32),
        "w1": jnp.stack([nrm(next(keys), (D, FFN)) for _ in range(LAYERS)]),
        "b1": jnp.zeros((LAYERS, 1, FFN), jnp.float32),
        "w2": jnp.stack([nrm(next(keys), (FFN, D)) for _ in range(LAYERS)]),
        "b2": jnp.zeros((LAYERS, 1, D), jnp.float32),
        "ln2_g": jnp.ones((LAYERS, 1, D), jnp.float32),
        "ln2_b": jnp.zeros((LAYERS, 1, D), jnp.float32),
        # RobertaLMHead: dense(D->D) + gelu + LayerNorm + decoder(D->VOCAB) + bias
        "head_dense_w": nrm(next(keys), (D, D)),
        "head_dense_b": jnp.zeros((1, D), jnp.float32),
        "head_ln_g": jnp.ones((1, D), jnp.float32),
        "head_ln_b": jnp.zeros((1, D), jnp.float32),
        # decoder padded to lane-dense VOCAB_PAD columns (extra cols are zero)
        "decoder_w": jnp.pad(nrm(next(keys), (D, VOCAB)),
                             ((0, 0), (0, VOCAB_PAD - VOCAB))),
        "decoder_b": jnp.zeros((1, VOCAB_PAD), jnp.float32),
    }
    return p


# ---------------------------------------------------------------------------
# Forward pass: one fused pallas_call, tiny JAX glue outside
# ---------------------------------------------------------------------------
@jax.jit
def pre_chemberta_forward(token_ids, params):
    """token_ids: (SEQ,) int32 -> logits (SEQ, VOCAB), like logits.squeeze(0)."""
    # RoBERTa position ids start at padding_idx + 1 (= 2) for non-padded tokens.
    emb_const = params["pos_emb"][PAD_IDX + 1: PAD_IDX + 1 + SEQ] + params["type_emb"]

    args = (
        token_ids,
        params["word_emb"], emb_const, params["emb_ln_g"], params["emb_ln_b"],
        params["wqkv"], params["bqkv"], params["wo"], params["bo"],
        params["ln1_g"], params["ln1_b"],
        params["w1"], params["b1"], params["w2"], params["b2"],
        params["ln2_g"], params["ln2_b"],
        params["head_dense_w"], params["head_dense_b"],
        params["head_ln_g"], params["head_ln_b"],
        params["decoder_w"], params["decoder_b"],
    )
    n_vmem_inputs = len(args) - 1   # everything except token_ids

    logits_padded = pl.pallas_call(
        _fused_forward_kernel,
        out_shape=jax.ShapeDtypeStruct((SEQ, VOCAB_PAD), jnp.float32),
        in_specs=[pl.BlockSpec(memory_space=pltpu.MemorySpace.SMEM)]
        + [pl.BlockSpec(memory_space=pltpu.MemorySpace.VMEM)] * n_vmem_inputs,
        out_specs=pl.BlockSpec(memory_space=pltpu.MemorySpace.VMEM),
    )(*args)

    return logits_padded[:, :VOCAB]


if __name__ == "__main__":
    key = jax.random.PRNGKey(0)
    k_param, k_tok = jax.random.split(key)
    params = init_params(k_param)
    # synthetic "tokenized SMILES" ids (the real tokenizer is untranslatable)
    token_ids = jax.random.randint(k_tok, (SEQ,), 0, VOCAB, dtype=jnp.int32)

    logits = pre_chemberta_forward(token_ids, params)
    jax.block_until_ready(logits)
    assert logits.shape == (SEQ, VOCAB) and logits.dtype == jnp.float32
    assert bool(jnp.all(jnp.isfinite(logits)))
    print("KERNEL_OK")
</pallas_src>

<mosaic_0001>
module attributes {stable_mosaic.version = 11 : i64} {
  func.func @_fused_forward_kernel(%arg0: memref<8xi32, #tpu.memory_space<smem>>, %arg1: memref<896x32xf32, #tpu.memory_space<vmem>>, %arg2: memref<8x32xf32, #tpu.memory_space<vmem>>, %arg3: memref<1x32xf32, #tpu.memory_space<vmem>>, %arg4: memref<1x32xf32, #tpu.memory_space<vmem>>, %arg5: memref<2x32x96xf32, #tpu.memory_space<vmem>>, %arg6: memref<2x1x96xf32, #tpu.memory_space<vmem>>, %arg7: memref<2x32x32xf32, #tpu.memory_space<vmem>>, %arg8: memref<2x1x32xf32, #tpu.memory_space<vmem>>, %arg9: memref<2x1x32xf32, #tpu.memory_space<vmem>>, %arg10: memref<2x1x32xf32, #tpu.memory_space<vmem>>, %arg11: memref<2x32x64xf32, #tpu.memory_space<vmem>>, %arg12: memref<2x1x64xf32, #tpu.memory_space<vmem>>, %arg13: memref<2x64x32xf32, #tpu.memory_space<vmem>>, %arg14: memref<2x1x32xf32, #tpu.memory_space<vmem>>, %arg15: memref<2x1x32xf32, #tpu.memory_space<vmem>>, %arg16: memref<2x1x32xf32, #tpu.memory_space<vmem>>, %arg17: memref<32x32xf32, #tpu.memory_space<vmem>>, %arg18: memref<1x32xf32, #tpu.memory_space<vmem>>, %arg19: memref<1x32xf32, #tpu.memory_space<vmem>>, %arg20: memref<1x32xf32, #tpu.memory_space<vmem>>, %arg21: memref<32x896xf32, #tpu.memory_space<vmem>>, %arg22: memref<1x896xf32, #tpu.memory_space<vmem>>, %arg23: memref<8x896xf32, #tpu.memory_space<vmem>>) attributes {dimension_semantics = [], scalar_prefetch = 0 : i64, scratch_operands = 0 : i64, tpu.core_type = #tpu.core_type<tc>} {
    %c0 = arith.constant 0 : index
    %0 = memref.load %arg0[%c0] : memref<8xi32, #tpu.memory_space<smem>>
    %1 = vector.broadcast %0 : i32 to vector<1x1xi32>
    %c1 = arith.constant 1 : index
    %2 = memref.load %arg0[%c1] : memref<8xi32, #tpu.memory_space<smem>>
    %3 = vector.broadcast %2 : i32 to vector<1x1xi32>
    %c2 = arith.constant 2 : index
    %4 = memref.load %arg0[%c2] : memref<8xi32, #tpu.memory_space<smem>>
    %5 = vector.broadcast %4 : i32 to vector<1x1xi32>
    %c3 = arith.constant 3 : index
    %6 = memref.load %arg0[%c3] : memref<8xi32, #tpu.memory_space<smem>>
    %7 = vector.broadcast %6 : i32 to vector<1x1xi32>
    %c4 = arith.constant 4 : index
    %8 = memref.load %arg0[%c4] : memref<8xi32, #tpu.memory_space<smem>>
    %9 = vector.broadcast %8 : i32 to vector<1x1xi32>
    %c5 = arith.constant 5 : index
    %10 = memref.load %arg0[%c5] : memref<8xi32, #tpu.memory_space<smem>>
    %11 = vector.broadcast %10 : i32 to vector<1x1xi32>
    %c6 = arith.constant 6 : index
    %12 = memref.load %arg0[%c6] : memref<8xi32, #tpu.memory_space<smem>>
    %13 = vector.broadcast %12 : i32 to vector<1x1xi32>
    %c7 = arith.constant 7 : index
    %14 = memref.load %arg0[%c7] : memref<8xi32, #tpu.memory_space<smem>>
    %15 = vector.broadcast %14 : i32 to vector<1x1xi32>
    %16 = tpu.concatenate %1, %3, %5, %7, %9, %11, %13, %15 in 0 : vector<1x1xi32>, vector<1x1xi32>, vector<1x1xi32>, vector<1x1xi32>, vector<1x1xi32>, vector<1x1xi32>, vector<1x1xi32>, vector<1x1xi32> -> vector<8x1xi32>
    %17 = tpu.iota {dimensions = array<i32: 1>} : vector<8x896xi32>
    %18 = vector.broadcast %16 : vector<8x1xi32> to vector<8x896xi32>
    %19 = arith.cmpi eq, %17, %18 : vector<8x896xi32>
    %20 = arith.extui %19 : vector<8x896xi1> to vector<8x896xi32>
    %21 = arith.sitofp %20 : vector<8x896xi32> to vector<8x896xf32>
    %c0_0 = arith.constant 0 : index
    %c0_1 = arith.constant 0 : index
    %22 = vector.load %arg1[%c0_0, %c0_1] : memref<896x32xf32, #tpu.memory_space<vmem>>, vector<896x32xf32>
    %cst = arith.constant dense<0.000000e+00> : vector<8x32xf32>
    %23 = tpu.matmul %21, %22, %cst {dimension_numbers = #tpu.dot_dimension_numbers<[1], [0], [0], [1], [0, 0, 1, 1], [], []>} : vector<8x896xf32>, vector<896x32xf32>, vector<8x32xf32> -> vector<8x32xf32>
    %c0_2 = arith.constant 0 : index
    %c0_3 = arith.constant 0 : index
    %24 = vector.load %arg2[%c0_2, %c0_3] : memref<8x32xf32, #tpu.memory_space<vmem>>, vector<8x32xf32>
    %25 = arith.addf %23, %24 : vector<8x32xf32>
    %c0_4 = arith.constant 0 : index
    %c0_5 = arith.constant 0 : index
    %26 = vector.load %arg3[%c0_4, %c0_5] : memref<1x32xf32, #tpu.memory_space<vmem>>, vector<1x32xf32>
    %c0_6 = arith.constant 0 : index
    %c0_7 = arith.constant 0 : index
    %27 = vector.load %arg4[%c0_6, %c0_7] : memref<1x32xf32, #tpu.memory_space<vmem>>, vector<1x32xf32>
    %cst_8 = arith.constant dense<0.000000e+00> : vector<8xf32>
    %28 = vector.multi_reduction <add>, %25, %cst_8 [1] : vector<8x32xf32> to vector<8xf32>
    %29 = vector.shape_cast %28 : vector<8xf32> to vector<8x1xf32>
    %cst_9 = arith.constant 3.200000e+01 : f32
    %30 = vector.broadcast %cst_9 : f32 to vector<8x1xf32>
    %31 = arith.divf %29, %30 : vector<8x1xf32>
    %32 = vector.broadcast %31 : vector<8x1xf32> to vector<8x32xf32>
    %33 = arith.subf %25, %32 : vector<8x32xf32>
    %34 = arith.mulf %33, %33 : vector<8x32xf32>
    %cst_10 = arith.constant dense<0.000000e+00> : vector<8xf32>
    %35 = vector.multi_reduction <add>, %34, %cst_10 [1] : vector<8x32xf32> to vector<8xf32>
    %36 = vector.shape_cast %35 : vector<8xf32> to vector<8x1xf32>
    %cst_11 = arith.constant 3.200000e+01 : f32
    %37 = vector.broadcast %cst_11 : f32 to vector<8x1xf32>
    %38 = arith.divf %36, %37 : vector<8x1xf32>
    %39 = vector.broadcast %31 : vector<8x1xf32> to vector<8x32xf32>
    %40 = arith.subf %25, %39 : vector<8x32xf32>
    %cst_12 = arith.constant 9.99999974E-6 : f32
    %41 = vector.broadcast %cst_12 : f32 to vector<8x1xf32>
    %42 = arith.addf %38, %41 : vector<8x1xf32>
    %43 = math.rsqrt %42 : vector<8x1xf32>
    %44 = vector.broadcast %43 : vector<8x1xf32> to vector<8x32xf32>
    %45 = arith.mulf %40, %44 : vector<8x32xf32>
    %46 = vector.broadcast %26 : vector<1x32xf32> to vector<8x32xf32>
    %47 = arith.mulf %45, %46 : vector<8x32xf32>
    %48 = vector.broadcast %27 : vector<1x32xf32> to vector<8x32xf32>
    %49 = arith.addf %47, %48 : vector<8x32xf32>
    %c0_13 = arith.constant 0 : index
    %c0_14 = arith.constant 0 : index
    %c0_15 = arith.constant 0 : index
    %50 = vector.load %arg5[%c0_13, %c0_14, %c0_15] : memref<2x32x96xf32, #tpu.memory_space<vmem>>, vector<1x32x96xf32>
    %51 = vector.shape_cast %50 : vector<1x32x96xf32> to vector<32x96xf32>
    %cst_16 = arith.constant dense<0.000000e+00> : vector<8x96xf32>
    %52 = tpu.matmul %49, %51, %cst_16 {dimension_numbers = #tpu.dot_dimension_numbers<[1], [0], [0], [1], [0, 0, 1, 1], [], []>} : vector<8x32xf32>, vector<32x96xf32>, vector<8x96xf32> -> vector<8x96xf32>
    %c0_17 = arith.constant 0 : index
    %c0_18 = arith.constant 0 : index
    %c0_19 = arith.constant 0 : index
    %53 = vector.load %arg6[%c0_17, %c0_18, %c0_19] : memref<2x1x96xf32, #tpu.memory_space<vmem>>, vector<1x1x96xf32>
    %54 = vector.shape_cast %53 : vector<1x1x96xf32> to vector<1x96xf32>
    %55 = vector.broadcast %54 : vector<1x96xf32> to vector<8x96xf32>
    %56 = arith.addf %52, %55 : vector<8x96xf32>
    %57 = vector.extract_strided_slice %56 {offsets = [0, 0], sizes = [8, 16], strides = [1, 1]} : vector<8x96xf32> to vector<8x16xf32>
    %58 = vector.extract_strided_slice %56 {offsets = [0, 32], sizes = [8, 16], strides = [1, 1]} : vector<8x96xf32> to vector<8x16xf32>
    %59 = vector.extract_strided_slice %56 {offsets = [0, 64], sizes = [8, 16], strides = [1, 1]} : vector<8x96xf32> to vector<8x16xf32>
    %cst_20 = arith.constant dense<0.000000e+00> : vector<8x8xf32>
    %60 = tpu.matmul %57, %58, %cst_20 {dimension_numbers = #tpu.dot_dimension_numbers<[1], [1], [0], [0], [0, 0, 1, 0], [], []>} : vector<8x16xf32>, vector<8x16xf32>, vector<8x8xf32> -> vector<8x8xf32>
    %cst_21 = arith.constant 2.500000e-01 : f32
    %61 = vector.broadcast %cst_21 : f32 to vector<8x8xf32>
    %62 = arith.mulf %60, %61 : vector<8x8xf32>
    %cst_22 = arith.constant dense<0xFF800000> : vector<8xf32>
    %63 = vector.multi_reduction <maximumf>, %62, %cst_22 [1] : vector<8x8xf32> to vector<8xf32>
    %64 = vector.shape_cast %63 : vector<8xf32> to vector<8x1xf32>
    %65 = vector.broadcast %64 : vector<8x1xf32> to vector<8x8xf32>
    %66 = arith.subf %62, %65 : vector<8x8xf32>
    %67 = math.exp %66 : vector<8x8xf32>
    %cst_23 = arith.constant dense<0.000000e+00> : vector<8xf32>
    %68 = vector.multi_reduction <add>, %67, %cst_23 [1] : vector<8x8xf32> to vector<8xf32>
    %69 = vector.shape_cast %68 : vector<8xf32> to vector<8x1xf32>
    %70 = tpu.reciprocal %69 {approx = true} : vector<8x1xf32> -> vector<8x1xf32>
    %71 = vector.broadcast %70 : vector<8x1xf32> to vector<8x8xf32>
    %72 = arith.mulf %67, %71 : vector<8x8xf32>
    %cst_24 = arith.constant dense<0.000000e+00> : vector<8x16xf32>
    %73 = tpu.matmul %72, %59, %cst_24 {dimension_numbers = #tpu.dot_dimension_numbers<[1], [0], [0], [1], [0, 0, 1, 1], [], []>} : vector<8x8xf32>, vector<8x16xf32>, vector<8x16xf32> -> vector<8x16xf32>
    %74 = vector.extract_strided_slice %56 {offsets = [0, 16], sizes = [8, 16], strides = [1, 1]} : vector<8x96xf32> to vector<8x16xf32>
    %75 = vector.extract_strided_slice %56 {offsets = [0, 48], sizes = [8, 16], strides = [1, 1]} : vector<8x96xf32> to vector<8x16xf32>
    %76 = vector.extract_strided_slice %56 {offsets = [0, 80], sizes = [8, 16], strides = [1, 1]} : vector<8x96xf32> to vector<8x16xf32>
    %cst_25 = arith.constant dense<0.000000e+00> : vector<8x8xf32>
    %77 = tpu.matmul %74, %75, %cst_25 {dimension_numbers = #tpu.dot_dimension_numbers<[1], [1], [0], [0], [0, 0, 1, 0], [], []>} : vector<8x16xf32>, vector<8x16xf32>, vector<8x8xf32> -> vector<8x8xf32>
    %cst_26 = arith.constant 2.500000e-01 : f32
    %78 = vector.broadcast %cst_26 : f32 to vector<8x8xf32>
    %79 = arith.mulf %77, %78 : vector<8x8xf32>
    %cst_27 = arith.constant dense<0xFF800000> : vector<8xf32>
    %80 = vector.multi_reduction <maximumf>, %79, %cst_27 [1] : vector<8x8xf32> to vector<8xf32>
    %81 = vector.shape_cast %80 : vector<8xf32> to vector<8x1xf32>
    %82 = vector.broadcast %81 : vector<8x1xf32> to vector<8x8xf32>
    %83 = arith.subf %79, %82 : vector<8x8xf32>
    %84 = math.exp %83 : vector<8x8xf32>
    %cst_28 = arith.constant dense<0.000000e+00> : vector<8xf32>
    %85 = vector.multi_reduction <add>, %84, %cst_28 [1] : vector<8x8xf32> to vector<8xf32>
    %86 = vector.shape_cast %85 : vector<8xf32> to vector<8x1xf32>
    %87 = tpu.reciprocal %86 {approx = true} : vector<8x1xf32> -> vector<8x1xf32>
    %88 = vector.broadcast %87 : vector<8x1xf32> to vector<8x8xf32>
    %89 = arith.mulf %84, %88 : vector<8x8xf32>
    %cst_29 = arith.constant dense<0.000000e+00> : vector<8x16xf32>
    %90 = tpu.matmul %89, %76, %cst_29 {dimension_numbers = #tpu.dot_dimension_numbers<[1], [0], [0], [1], [0, 0, 1, 1], [], []>} : vector<8x8xf32>, vector<8x16xf32>, vector<8x16xf32> -> vector<8x16xf32>
    %91 = tpu.concatenate %73, %90 in 1 : vector<8x16xf32>, vector<8x16xf32> -> vector<8x32xf32>
    %c0_30 = arith.constant 0 : index
    %c0_31 = arith.constant 0 : index
    %c0_32 = arith.constant 0 : index
    %92 = vector.load %arg7[%c0_30, %c0_31, %c0_32] : memref<2x32x32xf32, #tpu.memory_space<vmem>>, vector<1x32x32xf32>
    %93 = vector.shape_cast %92 : vector<1x32x32xf32> to vector<32x32xf32>
    %cst_33 = arith.constant dense<0.000000e+00> : vector<8x32xf32>
    %94 = tpu.matmul %91, %93, %cst_33 {dimension_numbers = #tpu.dot_dimension_numbers<[1], [0], [0], [1], [0, 0, 1, 1], [], []>} : vector<8x32xf32>, vector<32x32xf32>, vector<8x32xf32> -> vector<8x32xf32>
    %c0_34 = arith.constant 0 : index
    %c0_35 = arith.constant 0 : index
    %c0_36 = arith.constant 0 : index
    %95 = vector.load %arg8[%c0_34, %c0_35, %c0_36] : memref<2x1x32xf32, #tpu.memory_space<vmem>>, vector<1x1x32xf32>
    %96 = vector.shape_cast %95 : vector<1x1x32xf32> to vector<1x32xf32>
    %97 = vector.broadcast %96 : vector<1x32xf32> to vector<8x32xf32>
    %98 = arith.addf %94, %97 : vector<8x32xf32>
    %99 = arith.addf %98, %49 : vector<8x32xf32>
    %c0_37 = arith.constant 0 : index
    %c0_38 = arith.constant 0 : index
    %c0_39 = arith.constant 0 : index
    %100 = vector.load %arg9[%c0_37, %c0_38, %c0_39] : memref<2x1x32xf32, #tpu.memory_space<vmem>>, vector<1x1x32xf32>
    %101 = vector.shape_cast %100 : vector<1x1x32xf32> to vector<1x32xf32>
    %c0_40 = arith.constant 0 : index
    %c0_41 = arith.constant 0 : index
    %c0_42 = arith.constant 0 : index
    %102 = vector.load %arg10[%c0_40, %c0_41, %c0_42] : memref<2x1x32xf32, #tpu.memory_space<vmem>>, vector<1x1x32xf32>
    %103 = vector.shape_cast %102 : vector<1x1x32xf32> to vector<1x32xf32>
    %cst_43 = arith.constant dense<0.000000e+00> : vector<8xf32>
    %104 = vector.multi_reduction <add>, %99, %cst_43 [1] : vector<8x32xf32> to vector<8xf32>
    %105 = vector.shape_cast %104 : vector<8xf32> to vector<8x1xf32>
    %cst_44 = arith.constant 3.200000e+01 : f32
    %106 = vector.broadcast %cst_44 : f32 to vector<8x1xf32>
    %107 = arith.divf %105, %106 : vector<8x1xf32>
    %108 = vector.broadcast %107 : vector<8x1xf32> to vector<8x32xf32>
    %109 = arith.subf %99, %108 : vector<8x32xf32>
    %110 = arith.mulf %109, %109 : vector<8x32xf32>
    %cst_45 = arith.constant dense<0.000000e+00> : vector<8xf32>
    %111 = vector.multi_reduction <add>, %110, %cst_45 [1] : vector<8x32xf32> to vector<8xf32>
    %112 = vector.shape_cast %111 : vector<8xf32> to vector<8x1xf32>
    %cst_46 = arith.constant 3.200000e+01 : f32
    %113 = vector.broadcast %cst_46 : f32 to vector<8x1xf32>
    %114 = arith.divf %112, %113 : vector<8x1xf32>
    %115 = vector.broadcast %107 : vector<8x1xf32> to vector<8x32xf32>
    %116 = arith.subf %99, %115 : vector<8x32xf32>
    %cst_47 = arith.constant 9.99999974E-6 : f32
    %117 = vector.broadcast %cst_47 : f32 to vector<8x1xf32>
    %118 = arith.addf %114, %117 : vector<8x1xf32>
    %119 = math.rsqrt %118 : vector<8x1xf32>
    %120 = vector.broadcast %119 : vector<8x1xf32> to vector<8x32xf32>
    %121 = arith.mulf %116, %120 : vector<8x32xf32>
    %122 = vector.broadcast %101 : vector<1x32xf32> to vector<8x32xf32>
    %123 = arith.mulf %121, %122 : vector<8x32xf32>
    %124 = vector.broadcast %103 : vector<1x32xf32> to vector<8x32xf32>
    %125 = arith.addf %123, %124 : vector<8x32xf32>
    %c0_48 = arith.constant 0 : index
    %c0_49 = arith.constant 0 : index
    %c0_50 = arith.constant 0 : index
    %126 = vector.load %arg11[%c0_48, %c0_49, %c0_50] : memref<2x32x64xf32, #tpu.memory_space<vmem>>, vector<1x32x64xf32>
    %127 = vector.shape_cast %126 : vector<1x32x64xf32> to vector<32x64xf32>
    %cst_51 = arith.constant dense<0.000000e+00> : vector<8x64xf32>
    %128 = tpu.matmul %125, %127, %cst_51 {dimension_numbers = #tpu.dot_dimension_numbers<[1], [0], [0], [1], [0, 0, 1, 1], [], []>} : vector<8x32xf32>, vector<32x64xf32>, vector<8x64xf32> -> vector<8x64xf32>
    %c0_52 = arith.constant 0 : index
    %c0_53 = arith.constant 0 : index
    %c0_54 = arith.constant 0 : index
    %129 = vector.load %arg12[%c0_52, %c0_53, %c0_54] : memref<2x1x64xf32, #tpu.memory_space<vmem>>, vector<1x1x64xf32>
    %130 = vector.shape_cast %129 : vector<1x1x64xf32> to vector<1x64xf32>
    %131 = vector.broadcast %130 : vector<1x64xf32> to vector<8x64xf32>
    %132 = arith.addf %128, %131 : vector<8x64xf32>
    %cst_55 = arith.constant 5.000000e-01 : f32
    %133 = vector.broadcast %cst_55 : f32 to vector<8x64xf32>
    %134 = arith.mulf %133, %132 : vector<8x64xf32>
    %cst_56 = arith.constant 4.471500e-02 : f32
    %135 = vector.broadcast %cst_56 : f32 to vector<8x64xf32>
    %136 = arith.mulf %135, %132 : vector<8x64xf32>
    %137 = arith.mulf %136, %132 : vector<8x64xf32>
    %138 = arith.mulf %137, %132 : vector<8x64xf32>
    %139 = arith.addf %132, %138 : vector<8x64xf32>
    %cst_57 = arith.constant 0.797884583 : f32
    %140 = vector.broadcast %cst_57 : f32 to vector<8x64xf32>
    %141 = arith.mulf %140, %139 : vector<8x64xf32>
    %142 = math.tanh %141 : vector<8x64xf32>
    %cst_58 = arith.constant 1.000000e+00 : f32
    %143 = vector.broadcast %cst_58 : f32 to vector<8x64xf32>
    %144 = arith.addf %143, %142 : vector<8x64xf32>
    %145 = arith.mulf %134, %144 : vector<8x64xf32>
    %c0_59 = arith.constant 0 : index
    %c0_60 = arith.constant 0 : index
    %c0_61 = arith.constant 0 : index
    %146 = vector.load %arg13[%c0_59, %c0_60, %c0_61] : memref<2x64x32xf32, #tpu.memory_space<vmem>>, vector<1x64x32xf32>
    %147 = vector.shape_cast %146 : vector<1x64x32xf32> to vector<64x32xf32>
    %cst_62 = arith.constant dense<0.000000e+00> : vector<8x32xf32>
    %148 = tpu.matmul %145, %147, %cst_62 {dimension_numbers = #tpu.dot_dimension_numbers<[1], [0], [0], [1], [0, 0, 1, 1], [], []>} : vector<8x64xf32>, vector<64x32xf32>, vector<8x32xf32> -> vector<8x32xf32>
    %c0_63 = arith.constant 0 : index
    %c0_64 = arith.constant 0 : index
    %c0_65 = arith.constant 0 : index
    %149 = vector.load %arg14[%c0_63, %c0_64, %c0_65] : memref<2x1x32xf32, #tpu.memory_space<vmem>>, vector<1x1x32xf32>
    %150 = vector.shape_cast %149 : vector<1x1x32xf32> to vector<1x32xf32>
    %151 = vector.broadcast %150 : vector<1x32xf32> to vector<8x32xf32>
    %152 = arith.addf %148, %151 : vector<8x32xf32>
    %153 = arith.addf %152, %125 : vector<8x32xf32>
    %c0_66 = arith.constant 0 : index
    %c0_67 = arith.constant 0 : index
    %c0_68 = arith.constant 0 : index
    %154 = vector.load %arg15[%c0_66, %c0_67, %c0_68] : memref<2x1x32xf32, #tpu.memory_space<vmem>>, vector<1x1x32xf32>
    %155 = vector.shape_cast %154 : vector<1x1x32xf32> to vector<1x32xf32>
    %c0_69 = arith.constant 0 : index
    %c0_70 = arith.constant 0 : index
    %c0_71 = arith.constant 0 : index
    %156 = vector.load %arg16[%c0_69, %c0_70, %c0_71] : memref<2x1x32xf32, #tpu.memory_space<vmem>>, vector<1x1x32xf32>
    %157 = vector.shape_cast %156 : vector<1x1x32xf32> to vector<1x32xf32>
    %cst_72 = arith.constant dense<0.000000e+00> : vector<8xf32>
    %158 = vector.multi_reduction <add>, %153, %cst_72 [1] : vector<8x32xf32> to vector<8xf32>
    %159 = vector.shape_cast %158 : vector<8xf32> to vector<8x1xf32>
    %cst_73 = arith.constant 3.200000e+01 : f32
    %160 = vector.broadcast %cst_73 : f32 to vector<8x1xf32>
    %161 = arith.divf %159, %160 : vector<8x1xf32>
    %162 = vector.broadcast %161 : vector<8x1xf32> to vector<8x32xf32>
    %163 = arith.subf %153, %162 : vector<8x32xf32>
    %164 = arith.mulf %163, %163 : vector<8x32xf32>
    %cst_74 = arith.constant dense<0.000000e+00> : vector<8xf32>
    %165 = vector.multi_reduction <add>, %164, %cst_74 [1] : vector<8x32xf32> to vector<8xf32>
    %166 = vector.shape_cast %165 : vector<8xf32> to vector<8x1xf32>
    %cst_75 = arith.constant 3.200000e+01 : f32
    %167 = vector.broadcast %cst_75 : f32 to vector<8x1xf32>
    %168 = arith.divf %166, %167 : vector<8x1xf32>
    %169 = vector.broadcast %161 : vector<8x1xf32> to vector<8x32xf32>
    %170 = arith.subf %153, %169 : vector<8x32xf32>
    %cst_76 = arith.constant 9.99999974E-6 : f32
    %171 = vector.broadcast %cst_76 : f32 to vector<8x1xf32>
    %172 = arith.addf %168, %171 : vector<8x1xf32>
    %173 = math.rsqrt %172 : vector<8x1xf32>
    %174 = vector.broadcast %173 : vector<8x1xf32> to vector<8x32xf32>
    %175 = arith.mulf %170, %174 : vector<8x32xf32>
    %176 = vector.broadcast %155 : vector<1x32xf32> to vector<8x32xf32>
    %177 = arith.mulf %175, %176 : vector<8x32xf32>
    %178 = vector.broadcast %157 : vector<1x32xf32> to vector<8x32xf32>
    %179 = arith.addf %177, %178 : vector<8x32xf32>
    %c1_77 = arith.constant 1 : index
    %c0_78 = arith.constant 0 : index
    %c0_79 = arith.constant 0 : index
    %180 = vector.load %arg5[%c1_77, %c0_78, %c0_79] : memref<2x32x96xf32, #tpu.memory_space<vmem>>, vector<1x32x96xf32>
    %181 = vector.shape_cast %180 : vector<1x32x96xf32> to vector<32x96xf32>
    %cst_80 = arith.constant dense<0.000000e+00> : vector<8x96xf32>
    %182 = tpu.matmul %179, %181, %cst_80 {dimension_numbers = #tpu.dot_dimension_numbers<[1], [0], [0], [1], [0, 0, 1, 1], [], []>} : vector<8x32xf32>, vector<32x96xf32>, vector<8x96xf32> -> vector<8x96xf32>
    %c1_81 = arith.constant 1 : index
    %c0_82 = arith.constant 0 : index
    %c0_83 = arith.constant 0 : index
    %183 = vector.load %arg6[%c1_81, %c0_82, %c0_83] : memref<2x1x96xf32, #tpu.memory_space<vmem>>, vector<1x1x96xf32>
    %184 = vector.shape_cast %183 : vector<1x1x96xf32> to vector<1x96xf32>
    %185 = vector.broadcast %184 : vector<1x96xf32> to vector<8x96xf32>
    %186 = arith.addf %182, %185 : vector<8x96xf32>
    %187 = vector.extract_strided_slice %186 {offsets = [0, 0], sizes = [8, 16], strides = [1, 1]} : vector<8x96xf32> to vector<8x16xf32>
    %188 = vector.extract_strided_slice %186 {offsets = [0, 32], sizes = [8, 16], strides = [1, 1]} : vector<8x96xf32> to vector<8x16xf32>
    %189 = vector.extract_strided_slice %186 {offsets = [0, 64], sizes = [8, 16], strides = [1, 1]} : vector<8x96xf32> to vector<8x16xf32>
    %cst_84 = arith.constant dense<0.000000e+00> : vector<8x8xf32>
    %190 = tpu.matmul %187, %188, %cst_84 {dimension_numbers = #tpu.dot_dimension_numbers<[1], [1], [0], [0], [0, 0, 1, 0], [], []>} : vector<8x16xf32>, vector<8x16xf32>, vector<8x8xf32> -> vector<8x8xf32>
    %cst_85 = arith.constant 2.500000e-01 : f32
    %191 = vector.broadcast %cst_85 : f32 to vector<8x8xf32>
    %192 = arith.mulf %190, %191 : vector<8x8xf32>
    %cst_86 = arith.constant dense<0xFF800000> : vector<8xf32>
    %193 = vector.multi_reduction <maximumf>, %192, %cst_86 [1] : vector<8x8xf32> to vector<8xf32>
    %194 = vector.shape_cast %193 : vector<8xf32> to vector<8x1xf32>
    %195 = vector.broadcast %194 : vector<8x1xf32> to vector<8x8xf32>
    %196 = arith.subf %192, %195 : vector<8x8xf32>
    %197 = math.exp %196 : vector<8x8xf32>
    %cst_87 = arith.constant dense<0.000000e+00> : vector<8xf32>
    %198 = vector.multi_reduction <add>, %197, %cst_87 [1] : vector<8x8xf32> to vector<8xf32>
    %199 = vector.shape_cast %198 : vector<8xf32> to vector<8x1xf32>
    %200 = tpu.reciprocal %199 {approx = true} : vector<8x1xf32> -> vector<8x1xf32>
    %201 = vector.broadcast %200 : vector<8x1xf32> to vector<8x8xf32>
    %202 = arith.mulf %197, %201 : vector<8x8xf32>
    %cst_88 = arith.constant dense<0.000000e+00> : vector<8x16xf32>
    %203 = tpu.matmul %202, %189, %cst_88 {dimension_numbers = #tpu.dot_dimension_numbers<[1], [0], [0], [1], [0, 0, 1, 1], [], []>} : vector<8x8xf32>, vector<8x16xf32>, vector<8x16xf32> -> vector<8x16xf32>
    %204 = vector.extract_strided_slice %186 {offsets = [0, 16], sizes = [8, 16], strides = [1, 1]} : vector<8x96xf32> to vector<8x16xf32>
    %205 = vector.extract_strided_slice %186 {offsets = [0, 48], sizes = [8, 16], strides = [1, 1]} : vector<8x96xf32> to vector<8x16xf32>
    %206 = vector.extract_strided_slice %186 {offsets = [0, 80], sizes = [8, 16], strides = [1, 1]} : vector<8x96xf32> to vector<8x16xf32>
    %cst_89 = arith.constant dense<0.000000e+00> : vector<8x8xf32>
    %207 = tpu.matmul %204, %205, %cst_89 {dimension_numbers = #tpu.dot_dimension_numbers<[1], [1], [0], [0], [0, 0, 1, 0], [], []>} : vector<8x16xf32>, vector<8x16xf32>, vector<8x8xf32> -> vector<8x8xf32>
    %cst_90 = arith.constant 2.500000e-01 : f32
    %208 = vector.broadcast %cst_90 : f32 to vector<8x8xf32>
    %209 = arith.mulf %207, %208 : vector<8x8xf32>
    %cst_91 = arith.constant dense<0xFF800000> : vector<8xf32>
    %210 = vector.multi_reduction <maximumf>, %209, %cst_91 [1] : vector<8x8xf32> to vector<8xf32>
    %211 = vector.shape_cast %210 : vector<8xf32> to vector<8x1xf32>
    %212 = vector.broadcast %211 : vector<8x1xf32> to vector<8x8xf32>
    %213 = arith.subf %209, %212 : vector<8x8xf32>
    %214 = math.exp %213 : vector<8x8xf32>
    %cst_92 = arith.constant dense<0.000000e+00> : vector<8xf32>
    %215 = vector.multi_reduction <add>, %214, %cst_92 [1] : vector<8x8xf32> to vector<8xf32>
    %216 = vector.shape_cast %215 : vector<8xf32> to vector<8x1xf32>
    %217 = tpu.reciprocal %216 {approx = true} : vector<8x1xf32> -> vector<8x1xf32>
    %218 = vector.broadcast %217 : vector<8x1xf32> to vector<8x8xf32>
    %219 = arith.mulf %214, %218 : vector<8x8xf32>
    %cst_93 = arith.constant dense<0.000000e+00> : vector<8x16xf32>
    %220 = tpu.matmul %219, %206, %cst_93 {dimension_numbers = #tpu.dot_dimension_numbers<[1], [0], [0], [1], [0, 0, 1, 1], [], []>} : vector<8x8xf32>, vector<8x16xf32>, vector<8x16xf32> -> vector<8x16xf32>
    %221 = tpu.concatenate %203, %220 in 1 : vector<8x16xf32>, vector<8x16xf32> -> vector<8x32xf32>
    %c1_94 = arith.constant 1 : index
    %c0_95 = arith.constant 0 : index
    %c0_96 = arith.constant 0 : index
    %222 = vector.load %arg7[%c1_94, %c0_95, %c0_96] : memref<2x32x32xf32, #tpu.memory_space<vmem>>, vector<1x32x32xf32>
    %223 = vector.shape_cast %222 : vector<1x32x32xf32> to vector<32x32xf32>
    %cst_97 = arith.constant dense<0.000000e+00> : vector<8x32xf32>
    %224 = tpu.matmul %221, %223, %cst_97 {dimension_numbers = #tpu.dot_dimension_numbers<[1], [0], [0], [1], [0, 0, 1, 1], [], []>} : vector<8x32xf32>, vector<32x32xf32>, vector<8x32xf32> -> vector<8x32xf32>
    %c1_98 = arith.constant 1 : index
    %c0_99 = arith.constant 0 : index
    %c0_100 = arith.constant 0 : index
    %225 = vector.load %arg8[%c1_98, %c0_99, %c0_100] : memref<2x1x32xf32, #tpu.memory_space<vmem>>, vector<1x1x32xf32>
    %226 = vector.shape_cast %225 : vector<1x1x32xf32> to vector<1x32xf32>
    %227 = vector.broadcast %226 : vector<1x32xf32> to vector<8x32xf32>
    %228 = arith.addf %224, %227 : vector<8x32xf32>
    %229 = arith.addf %228, %179 : vector<8x32xf32>
    %c1_101 = arith.constant 1 : index
    %c0_102 = arith.constant 0 : index
    %c0_103 = arith.constant 0 : index
    %230 = vector.load %arg9[%c1_101, %c0_102, %c0_103] : memref<2x1x32xf32, #tpu.memory_space<vmem>>, vector<1x1x32xf32>
    %231 = vector.shape_cast %230 : vector<1x1x32xf32> to vector<1x32xf32>
    %c1_104 = arith.constant 1 : index
    %c0_105 = arith.constant 0 : index
    %c0_106 = arith.constant 0 : index
    %232 = vector.load %arg10[%c1_104, %c0_105, %c0_106] : memref<2x1x32xf32, #tpu.memory_space<vmem>>, vector<1x1x32xf32>
    %233 = vector.shape_cast %232 : vector<1x1x32xf32> to vector<1x32xf32>
    %cst_107 = arith.constant dense<0.000000e+00> : vector<8xf32>
    %234 = vector.multi_reduction <add>, %229, %cst_107 [1] : vector<8x32xf32> to vector<8xf32>
    %235 = vector.shape_cast %234 : vector<8xf32> to vector<8x1xf32>
    %cst_108 = arith.constant 3.200000e+01 : f32
    %236 = vector.broadcast %cst_108 : f32 to vector<8x1xf32>
    %237 = arith.divf %235, %236 : vector<8x1xf32>
    %238 = vector.broadcast %237 : vector<8x1xf32> to vector<8x32xf32>
    %239 = arith.subf %229, %238 : vector<8x32xf32>
    %240 = arith.mulf %239, %239 : vector<8x32xf32>
    %cst_109 = arith.constant dense<0.000000e+00> : vector<8xf32>
    %241 = vector.multi_reduction <add>, %240, %cst_109 [1] : vector<8x32xf32> to vector<8xf32>
    %242 = vector.shape_cast %241 : vector<8xf32> to vector<8x1xf32>
    %cst_110 = arith.constant 3.200000e+01 : f32
    %243 = vector.broadcast %cst_110 : f32 to vector<8x1xf32>
    %244 = arith.divf %242, %243 : vector<8x1xf32>
    %245 = vector.broadcast %237 : vector<8x1xf32> to vector<8x32xf32>
    %246 = arith.subf %229, %245 : vector<8x32xf32>
    %cst_111 = arith.constant 9.99999974E-6 : f32
    %247 = vector.broadcast %cst_111 : f32 to vector<8x1xf32>
    %248 = arith.addf %244, %247 : vector<8x1xf32>
    %249 = math.rsqrt %248 : vector<8x1xf32>
    %250 = vector.broadcast %249 : vector<8x1xf32> to vector<8x32xf32>
    %251 = arith.mulf %246, %250 : vector<8x32xf32>
    %252 = vector.broadcast %231 : vector<1x32xf32> to vector<8x32xf32>
    %253 = arith.mulf %251, %252 : vector<8x32xf32>
    %254 = vector.broadcast %233 : vector<1x32xf32> to vector<8x32xf32>
    %255 = arith.addf %253, %254 : vector<8x32xf32>
    %c1_112 = arith.constant 1 : index
    %c0_113 = arith.constant 0 : index
    %c0_114 = arith.constant 0 : index
    %256 = vector.load %arg11[%c1_112, %c0_113, %c0_114] : memref<2x32x64xf32, #tpu.memory_space<vmem>>, vector<1x32x64xf32>
    %257 = vector.shape_cast %256 : vector<1x32x64xf32> to vector<32x64xf32>
    %cst_115 = arith.constant dense<0.000000e+00> : vector<8x64xf32>
    %258 = tpu.matmul %255, %257, %cst_115 {dimension_numbers = #tpu.dot_dimension_numbers<[1], [0], [0], [1], [0, 0, 1, 1], [], []>} : vector<8x32xf32>, vector<32x64xf32>, vector<8x64xf32> -> vector<8x64xf32>
    %c1_116 = arith.constant 1 : index
    %c0_117 = arith.constant 0 : index
    %c0_118 = arith.constant 0 : index
    %259 = vector.load %arg12[%c1_116, %c0_117, %c0_118] : memref<2x1x64xf32, #tpu.memory_space<vmem>>, vector<1x1x64xf32>
    %260 = vector.shape_cast %259 : vector<1x1x64xf32> to vector<1x64xf32>
    %261 = vector.broadcast %260 : vector<1x64xf32> to vector<8x64xf32>
    %262 = arith.addf %258, %261 : vector<8x64xf32>
    %cst_119 = arith.constant 5.000000e-01 : f32
    %263 = vector.broadcast %cst_119 : f32 to vector<8x64xf32>
    %264 = arith.mulf %263, %262 : vector<8x64xf32>
    %cst_120 = arith.constant 4.471500e-02 : f32
    %265 = vector.broadcast %cst_120 : f32 to vector<8x64xf32>
    %266 = arith.mulf %265, %262 : vector<8x64xf32>
    %267 = arith.mulf %266, %262 : vector<8x64xf32>
    %268 = arith.mulf %267, %262 : vector<8x64xf32>
    %269 = arith.addf %262, %268 : vector<8x64xf32>
    %cst_121 = arith.constant 0.797884583 : f32
    %270 = vector.broadcast %cst_121 : f32 to vector<8x64xf32>
    %271 = arith.mulf %270, %269 : vector<8x64xf32>
    %272 = math.tanh %271 : vector<8x64xf32>
    %cst_122 = arith.constant 1.000000e+00 : f32
    %273 = vector.broadcast %cst_122 : f32 to vector<8x64xf32>
    %274 = arith.addf %273, %272 : vector<8x64xf32>
    %275 = arith.mulf %264, %274 : vector<8x64xf32>
    %c1_123 = arith.constant 1 : index
    %c0_124 = arith.constant 0 : index
    %c0_125 = arith.constant 0 : index
    %276 = vector.load %arg13[%c1_123, %c0_124, %c0_125] : memref<2x64x32xf32, #tpu.memory_space<vmem>>, vector<1x64x32xf32>
    %277 = vector.shape_cast %276 : vector<1x64x32xf32> to vector<64x32xf32>
    %cst_126 = arith.constant dense<0.000000e+00> : vector<8x32xf32>
    %278 = tpu.matmul %275, %277, %cst_126 {dimension_numbers = #tpu.dot_dimension_numbers<[1], [0], [0], [1], [0, 0, 1, 1], [], []>} : vector<8x64xf32>, vector<64x32xf32>, vector<8x32xf32> -> vector<8x32xf32>
    %c1_127 = arith.constant 1 : index
    %c0_128 = arith.constant 0 : index
    %c0_129 = arith.constant 0 : index
    %279 = vector.load %arg14[%c1_127, %c0_128, %c0_129] : memref<2x1x32xf32, #tpu.memory_space<vmem>>, vector<1x1x32xf32>
    %280 = vector.shape_cast %279 : vector<1x1x32xf32> to vector<1x32xf32>
    %281 = vector.broadcast %280 : vector<1x32xf32> to vector<8x32xf32>
    %282 = arith.addf %278, %281 : vector<8x32xf32>
    %283 = arith.addf %282, %255 : vector<8x32xf32>
    %c1_130 = arith.constant 1 : index
    %c0_131 = arith.constant 0 : index
    %c0_132 = arith.constant 0 : index
    %284 = vector.load %arg15[%c1_130, %c0_131, %c0_132] : memref<2x1x32xf32, #tpu.memory_space<vmem>>, vector<1x1x32xf32>
    %285 = vector.shape_cast %284 : vector<1x1x32xf32> to vector<1x32xf32>
    %c1_133 = arith.constant 1 : index
    %c0_134 = arith.constant 0 : index
    %c0_135 = arith.constant 0 : index
    %286 = vector.load %arg16[%c1_133, %c0_134, %c0_135] : memref<2x1x32xf32, #tpu.memory_space<vmem>>, vector<1x1x32xf32>
    %287 = vector.shape_cast %286 : vector<1x1x32xf32> to vector<1x32xf32>
    %cst_136 = arith.constant dense<0.000000e+00> : vector<8xf32>
    %288 = vector.multi_reduction <add>, %283, %cst_136 [1] : vector<8x32xf32> to vector<8xf32>
    %289 = vector.shape_cast %288 : vector<8xf32> to vector<8x1xf32>
    %cst_137 = arith.constant 3.200000e+01 : f32
    %290 = vector.broadcast %cst_137 : f32 to vector<8x1xf32>
    %291 = arith.divf %289, %290 : vector<8x1xf32>
    %292 = vector.broadcast %291 : vector<8x1xf32> to vector<8x32xf32>
    %293 = arith.subf %283, %292 : vector<8x32xf32>
    %294 = arith.mulf %293, %293 : vector<8x32xf32>
    %cst_138 = arith.constant dense<0.000000e+00> : vector<8xf32>
    %295 = vector.multi_reduction <add>, %294, %cst_138 [1] : vector<8x32xf32> to vector<8xf32>
    %296 = vector.shape_cast %295 : vector<8xf32> to vector<8x1xf32>
    %cst_139 = arith.constant 3.200000e+01 : f32
    %297 = vector.broadcast %cst_139 : f32 to vector<8x1xf32>
    %298 = arith.divf %296, %297 : vector<8x1xf32>
    %299 = vector.broadcast %291 : vector<8x1xf32> to vector<8x32xf32>
    %300 = arith.subf %283, %299 : vector<8x32xf32>
    %cst_140 = arith.constant 9.99999974E-6 : f32
    %301 = vector.broadcast %cst_140 : f32 to vector<8x1xf32>
    %302 = arith.addf %298, %301 : vector<8x1xf32>
    %303 = math.rsqrt %302 : vector<8x1xf32>
    %304 = vector.broadcast %303 : vector<8x1xf32> to vector<8x32xf32>
    %305 = arith.mulf %300, %304 : vector<8x32xf32>
    %306 = vector.broadcast %285 : vector<1x32xf32> to vector<8x32xf32>
    %307 = arith.mulf %305, %306 : vector<8x32xf32>
    %308 = vector.broadcast %287 : vector<1x32xf32> to vector<8x32xf32>
    %309 = arith.addf %307, %308 : vector<8x32xf32>
    %c0_141 = arith.constant 0 : index
    %c0_142 = arith.constant 0 : index
    %310 = vector.load %arg17[%c0_141, %c0_142] : memref<32x32xf32, #tpu.memory_space<vmem>>, vector<32x32xf32>
    %cst_143 = arith.constant dense<0.000000e+00> : vector<8x32xf32>
    %311 = tpu.matmul %309, %310, %cst_143 {dimension_numbers = #tpu.dot_dimension_numbers<[1], [0], [0], [1], [0, 0, 1, 1], [], []>} : vector<8x32xf32>, vector<32x32xf32>, vector<8x32xf32> -> vector<8x32xf32>
    %c0_144 = arith.constant 0 : index
    %c0_145 = arith.constant 0 : index
    %312 = vector.load %arg18[%c0_144, %c0_145] : memref<1x32xf32, #tpu.memory_space<vmem>>, vector<1x32xf32>
    %313 = vector.broadcast %312 : vector<1x32xf32> to vector<8x32xf32>
    %314 = arith.addf %311, %313 : vector<8x32xf32>
    %cst_146 = arith.constant 5.000000e-01 : f32
    %315 = vector.broadcast %cst_146 : f32 to vector<8x32xf32>
    %316 = arith.mulf %315, %314 : vector<8x32xf32>
    %cst_147 = arith.constant 4.471500e-02 : f32
    %317 = vector.broadcast %cst_147 : f32 to vector<8x32xf32>
    %318 = arith.mulf %317, %314 : vector<8x32xf32>
    %319 = arith.mulf %318, %314 : vector<8x32xf32>
    %320 = arith.mulf %319, %314 : vector<8x32xf32>
    %321 = arith.addf %314, %320 : vector<8x32xf32>
    %cst_148 = arith.constant 0.797884583 : f32
    %322 = vector.broadcast %cst_148 : f32 to vector<8x32xf32>
    %323 = arith.mulf %322, %321 : vector<8x32xf32>
    %324 = math.tanh %323 : vector<8x32xf32>
    %cst_149 = arith.constant 1.000000e+00 : f32
    %325 = vector.broadcast %cst_149 : f32 to vector<8x32xf32>
    %326 = arith.addf %325, %324 : vector<8x32xf32>
    %327 = arith.mulf %316, %326 : vector<8x32xf32>
    %c0_150 = arith.constant 0 : index
    %c0_151 = arith.constant 0 : index
    %328 = vector.load %arg19[%c0_150, %c0_151] : memref<1x32xf32, #tpu.memory_space<vmem>>, vector<1x32xf32>
    %c0_152 = arith.constant 0 : index
    %c0_153 = arith.constant 0 : index
    %329 = vector.load %arg20[%c0_152, %c0_153] : memref<1x32xf32, #tpu.memory_space<vmem>>, vector<1x32xf32>
    %cst_154 = arith.constant dense<0.000000e+00> : vector<8xf32>
    %330 = vector.multi_reduction <add>, %327, %cst_154 [1] : vector<8x32xf32> to vector<8xf32>
    %331 = vector.shape_cast %330 : vector<8xf32> to vector<8x1xf32>
    %cst_155 = arith.constant 3.200000e+01 : f32
    %332 = vector.broadcast %cst_155 : f32 to vector<8x1xf32>
    %333 = arith.divf %331, %332 : vector<8x1xf32>
    %334 = vector.broadcast %333 : vector<8x1xf32> to vector<8x32xf32>
    %335 = arith.subf %327, %334 : vector<8x32xf32>
    %336 = arith.mulf %335, %335 : vector<8x32xf32>
    %cst_156 = arith.constant dense<0.000000e+00> : vector<8xf32>
    %337 = vector.multi_reduction <add>, %336, %cst_156 [1] : vector<8x32xf32> to vector<8xf32>
    %338 = vector.shape_cast %337 : vector<8xf32> to vector<8x1xf32>
    %cst_157 = arith.constant 3.200000e+01 : f32
    %339 = vector.broadcast %cst_157 : f32 to vector<8x1xf32>
    %340 = arith.divf %338, %339 : vector<8x1xf32>
    %341 = vector.broadcast %333 : vector<8x1xf32> to vector<8x32xf32>
    %342 = arith.subf %327, %341 : vector<8x32xf32>
    %cst_158 = arith.constant 9.99999974E-6 : f32
    %343 = vector.broadcast %cst_158 : f32 to vector<8x1xf32>
    %344 = arith.addf %340, %343 : vector<8x1xf32>
    %345 = math.rsqrt %344 : vector<8x1xf32>
    %346 = vector.broadcast %345 : vector<8x1xf32> to vector<8x32xf32>
    %347 = arith.mulf %342, %346 : vector<8x32xf32>
    %348 = vector.broadcast %328 : vector<1x32xf32> to vector<8x32xf32>
    %349 = arith.mulf %347, %348 : vector<8x32xf32>
    %350 = vector.broadcast %329 : vector<1x32xf32> to vector<8x32xf32>
    %351 = arith.addf %349, %350 : vector<8x32xf32>
    %c0_159 = arith.constant 0 : index
    %c0_160 = arith.constant 0 : index
    %352 = vector.load %arg21[%c0_159, %c0_160] : memref<32x896xf32, #tpu.memory_space<vmem>>, vector<32x896xf32>
    %cst_161 = arith.constant dense<0.000000e+00> : vector<8x896xf32>
    %353 = tpu.matmul %351, %352, %cst_161 {dimension_numbers = #tpu.dot_dimension_numbers<[1], [0], [0], [1], [0, 0, 1, 1], [], []>} : vector<8x32xf32>, vector<32x896xf32>, vector<8x896xf32> -> vector<8x896xf32>
    %c0_162 = arith.constant 0 : index
    %c0_163 = arith.constant 0 : index
    %354 = vector.load %arg22[%c0_162, %c0_163] : memref<1x896xf32, #tpu.memory_space<vmem>>, vector<1x896xf32>
    %355 = vector.broadcast %354 : vector<1x896xf32> to vector<8x896xf32>
    %356 = arith.addf %353, %355 : vector<8x896xf32>
    %c0_164 = arith.constant 0 : index
    %c0_165 = arith.constant 0 : index
    %357 = vector.load %arg23[%c0_164, %c0_165] : memref<8x896xf32, #tpu.memory_space<vmem>>, vector<8x896xf32>
    tpu.vector_store %arg23[%c0_164, %c0_165], %356 {strides = array<i32>} : memref<8x896xf32, #tpu.memory_space<vmem>>, vector<8x896xf32>,
    return
  }
}

</mosaic_0001>

<llo_original>
// kernel: pre_chemberta_forward.1
$region0: #{pre_chemberta_forward.1}
  #allocation0 [shape = 'u32[]', space=smem, size = 0x4, offset = 0x4, fixed_abs, tag = 'smem constant byte address 0x4 - core index']
  #allocation1 [shape = 'u32[144,128]{1,0:T(1,128)}', space=vmem, size = 0x12000, scoped, tag = 'internal scratch']
  %s0 = inlined_call_operand.vmem [shape: s32[8], index: 0, kind: input, shape index: {}]
  %s1 = inlined_call_operand.vmem [shape: f32[896,32], index: 1, kind: input, shape index: {}]
  %s2 = inlined_call_operand.vmem [shape: f32[8,32], index: 2, kind: input, shape index: {}]
  %s3 = inlined_call_operand.vmem [shape: f32[1,32], index: 3, kind: input, shape index: {}]
  %s4 = inlined_call_operand.vmem [shape: f32[1,32], index: 4, kind: input, shape index: {}]
  %s5 = inlined_call_operand.vmem [shape: f32[2,32,96], index: 5, kind: input, shape index: {}]
  %s6 = inlined_call_operand.vmem [shape: f32[2,1,96], index: 6, kind: input, shape index: {}]
  %s7 = inlined_call_operand.vmem [shape: f32[2,32,32], index: 7, kind: input, shape index: {}]
  %s8 = inlined_call_operand.vmem [shape: f32[2,1,32], index: 8, kind: input, shape index: {}]
  %s9 = inlined_call_operand.vmem [shape: f32[2,1,32], index: 9, kind: input, shape index: {}]
  %s10 = inlined_call_operand.vmem [shape: f32[2,1,32], index: 10, kind: input, shape index: {}]
  %s11 = inlined_call_operand.vmem [shape: f32[2,32,64], index: 11, kind: input, shape index: {}]
  %s12 = inlined_call_operand.vmem [shape: f32[2,1,64], index: 12, kind: input, shape index: {}]
  %s13 = inlined_call_operand.vmem [shape: f32[2,64,32], index: 13, kind: input, shape index: {}]
  %s14 = inlined_call_operand.vmem [shape: f32[2,1,32], index: 14, kind: input, shape index: {}]
  %s15 = inlined_call_operand.vmem [shape: f32[2,1,32], index: 15, kind: input, shape index: {}]
  %s16 = inlined_call_operand.vmem [shape: f32[2,1,32], index: 16, kind: input, shape index: {}]
  %s17 = inlined_call_operand.vmem [shape: f32[32,32], index: 17, kind: input, shape index: {}]
  %s18 = inlined_call_operand.vmem [shape: f32[1,32], index: 18, kind: input, shape index: {}]
  %s19 = inlined_call_operand.vmem [shape: f32[1,32], index: 19, kind: input, shape index: {}]
  %s20 = inlined_call_operand.vmem [shape: f32[1,32], index: 20, kind: input, shape index: {}]
  %s21 = inlined_call_operand.vmem [shape: f32[32,896], index: 21, kind: input, shape index: {}]
  %s22 = inlined_call_operand.vmem [shape: f32[1,896], index: 22, kind: input, shape index: {}]
  %s23 = inlined_call_operand.hbm [shape: f32[8,896], index: 23, kind: output, shape index: {}]
  %s24 = sld [smem:[#allocation0]]
  $region106: #{pre_chemberta_forward.1} parent=0
    _
  %s26 = ssub.s32 1, %s24
  %s27 = scalar_select 0, %s26, %s24
  $region1: #{pre_chemberta_forward.1} parent=0
    #allocation2 [shape = 'u8[512]{0}', space=smem, size = 0x200, scoped, tag = 'input window, operand 0, single buffered']
    #allocation3 [shape = 's32[1]{0}', space=sflag, size = 0x4, scoped, tag = 'scoped memory for pre_chemberta_forward.1']
    #allocation4 [shape = 's32[1]{0}', space=sflag, size = 0x4, scoped, tag = 'scoped memory for pre_chemberta_forward.1']
    #allocation5 [shape = 'u8[28672]{0}', space=vmem, size = 0x7000, scoped, tag = 'output window, operand 0, single buffered']
    %28 = vsyncpa [#allocation4], 0
    %29 = vsyncpa [#allocation3], 0
    // Predicated region
    $region2: #{pre_chemberta_forward.1} parent=1 // pred_check
      _
    $region3: #{pre_chemberta_forward.1} parent=1 // pred_check_branch
      %31 = sbr.rel (0) target = $region5
    $region4: #{pre_chemberta_forward.1} parent=1 // pred_region
      %s33 = ssub.s32 16, 16
      %34 = vsyncadd [#allocation4], %s33
      %s36 = sshll.u32 %s0, 4
      %s37 = int_to_ptr.vmem [resolvable:$true] %s36
      %39 = dma.vmem_to_smem %s37, 16, [#allocation2], [#allocation4]
    $region5: #{pre_chemberta_forward.1} parent=1 // pred_fallthru
      _
    // Predicated region
    $region6: #{pre_chemberta_forward.1} parent=1 // pred_check
      _
    $region7: #{pre_chemberta_forward.1} parent=1 // pred_check_branch
      %41 = sbr.rel (0) target = $region9
    $region8: #{pre_chemberta_forward.1} parent=1 // pred_region
      _
    $region9: #{pre_chemberta_forward.1} parent=1 // pred_fallthru
      _
    // Predicated region
    $region10: #{pre_chemberta_forward.1} parent=1 // pred_check
      _
    $region11: #{pre_chemberta_forward.1} parent=1 // pred_check_branch
      %43 = sbr.rel (0) target = $region13
    $region12: #{pre_chemberta_forward.1} parent=1 // pred_region
      _
    $region13: #{pre_chemberta_forward.1} parent=1 // pred_fallthru
      _
    // Predicated region
    $region14: #{pre_chemberta_forward.1} parent=1 // pred_check
      _
    $region15: #{pre_chemberta_forward.1} parent=1 // pred_check_branch
      %45 = sbr.rel (0) target = $region17
    $region16: #{pre_chemberta_forward.1} parent=1 // pred_region
      _
    $region17: #{pre_chemberta_forward.1} parent=1 // pred_fallthru
      _
    // Predicated region
    $region18: #{pre_chemberta_forward.1} parent=1 // pred_check
      _
    $region19: #{pre_chemberta_forward.1} parent=1 // pred_check_branch
      %47 = sbr.rel (0) target = $region21
    $region20: #{pre_chemberta_forward.1} parent=1 // pred_region
      _
    $region21: #{pre_chemberta_forward.1} parent=1 // pred_fallthru
      _
    // Predicated region
    $region22: #{pre_chemberta_forward.1} parent=1 // pred_check
      _
    $region23: #{pre_chemberta_forward.1} parent=1 // pred_check_branch
      %49 = sbr.rel (0) target = $region25
    $region24: #{pre_chemberta_forward.1} parent=1 // pred_region
      _
    $region25: #{pre_chemberta_forward.1} parent=1 // pred_fallthru
      _
    // Predicated region
    $region26: #{pre_chemberta_forward.1} parent=1 // pred_check
      _
    $region27: #{pre_chemberta_forward.1} parent=1 // pred_check_branch
      %51 = sbr.rel (0) target = $region29
    $region28: #{pre_chemberta_forward.1} parent=1 // pred_region
      _
    $region29: #{pre_chemberta_forward.1} parent=1 // pred_fallthru
      _
    // Predicated region
    $region30: #{pre_chemberta_forward.1} parent=1 // pred_check
      _
    $region31: #{pre_chemberta_forward.1} parent=1 // pred_check_branch
      %53 = sbr.rel (0) target = $region33
    $region32: #{pre_chemberta_forward.1} parent=1 // pred_region
      _
    $region33: #{pre_chemberta_forward.1} parent=1 // pred_fallthru
      _
    // Predicated region
    $region34: #{pre_chemberta_forward.1} parent=1 // pred_check
      _
    $region35: #{pre_chemberta_forward.1} parent=1 // pred_check_branch
      %55 = sbr.rel (0) target = $region37
    $region36: #{pre_chemberta_forward.1} parent=1 // pred_region
      _
    $region37: #{pre_chemberta_forward.1} parent=1 // pred_fallthru
      _
    // Predicated region
    $region38: #{pre_chemberta_forward.1} parent=1 // pred_check
      _
    $region39: #{pre_chemberta_forward.1} parent=1 // pred_check_branch
      %57 = sbr.rel (0) target = $region41
    $region40: #{pre_chemberta_forward.1} parent=1 // pred_region
      _
    $region41: #{pre_chemberta_forward.1} parent=1 // pred_fallthru
      _
    // Predicated region
    $region42: #{pre_chemberta_forward.1} parent=1 // pred_check
      _
    $region43: #{pre_chemberta_forward.1} parent=1 // pred_check_branch
      %59 = sbr.rel (0) target = $region45
    $region44: #{pre_chemberta_forward.1} parent=1 // pred_region
      _
    $region45: #{pre_chemberta_forward.1} parent=1 // pred_fallthru
      _
    // Predicated region
    $region46: #{pre_chemberta_forward.1} parent=1 // pred_check
      _
    $region47: #{pre_chemberta_forward.1} parent=1 // pred_check_branch
      %61 = sbr.rel (0) target = $region49
    $region48: #{pre_chemberta_forward.1} parent=1 // pred_region
      _
    $region49: #{pre_chemberta_forward.1} parent=1 // pred_fallthru
      _
    // Predicated region
    $region50: #{pre_chemberta_forward.1} parent=1 // pred_check
      _
    $region51: #{pre_chemberta_forward.1} parent=1 // pred_check_branch
      %63 = sbr.rel (0) target = $region53
    $region52: #{pre_chemberta_forward.1} parent=1 // pred_region
      _
    $region53: #{pre_chemberta_forward.1} parent=1 // pred_fallthru
      _
    // Predicated region
    $region54: #{pre_chemberta_forward.1} parent=1 // pred_check
      _
    $region55: #{pre_chemberta_forward.1} parent=1 // pred_check_branch
      %65 = sbr.rel (0) target = $region57
    $region56: #{pre_chemberta_forward.1} parent=1 // pred_region
      _
    $region57: #{pre_chemberta_forward.1} parent=1 // pred_fallthru
      _
    // Predicated region
    $region58: #{pre_chemberta_forward.1} parent=1 // pred_check
      _
    $region59: #{pre_chemberta_forward.1} parent=1 // pred_check_branch
      %67 = sbr.rel (0) target = $region61
    $region60: #{pre_chemberta_forward.1} parent=1 // pred_region
      _
    $region61: #{pre_chemberta_forward.1} parent=1 // pred_fallthru
      _
    // Predicated region
    $region62: #{pre_chemberta_forward.1} parent=1 // pred_check
      _
    $region63: #{pre_chemberta_forward.1} parent=1 // pred_check_branch
      %69 = sbr.rel (0) target = $region65
    $region64: #{pre_chemberta_forward.1} parent=1 // pred_region
      _
    $region65: #{pre_chemberta_forward.1} parent=1 // pred_fallthru
      _
    // Predicated region
    $region66: #{pre_chemberta_forward.1} parent=1 // pred_check
      _
    $region67: #{pre_chemberta_forward.1} parent=1 // pred_check_branch
      %71 = sbr.rel (0) target = $region69
    $region68: #{pre_chemberta_forward.1} parent=1 // pred_region
      _
    $region69: #{pre_chemberta_forward.1} parent=1 // pred_fallthru
      _
    // Predicated region
    $region70: #{pre_chemberta_forward.1} parent=1 // pred_check
      _
    $region71: #{pre_chemberta_forward.1} parent=1 // pred_check_branch
      %73 = sbr.rel (0) target = $region73
    $region72: #{pre_chemberta_forward.1} parent=1 // pred_region
      _
    $region73: #{pre_chemberta_forward.1} parent=1 // pred_fallthru
      _
    // Predicated region
    $region74: #{pre_chemberta_forward.1} parent=1 // pred_check
      _
    $region75: #{pre_chemberta_forward.1} parent=1 // pred_check_branch
      %75 = sbr.rel (0) target = $region77
    $region76: #{pre_chemberta_forward.1} parent=1 // pred_region
      _
    $region77: #{pre_chemberta_forward.1} parent=1 // pred_fallthru
      _
    // Predicated region
    $region78: #{pre_chemberta_forward.1} parent=1 // pred_check
      _
    $region79: #{pre_chemberta_forward.1} parent=1 // pred_check_branch
      %77 = sbr.rel (0) target = $region81
    $region80: #{pre_chemberta_forward.1} parent=1 // pred_region
      _
    $region81: #{pre_chemberta_forward.1} parent=1 // pred_fallthru
      _
    // Predicated region
    $region82: #{pre_chemberta_forward.1} parent=1 // pred_check
      _
    $region83: #{pre_chemberta_forward.1} parent=1 // pred_check_branch
      %79 = sbr.rel (0) target = $region85
    $region84: #{pre_chemberta_forward.1} parent=1 // pred_region
      _
    $region85: #{pre_chemberta_forward.1} parent=1 // pred_fallthru
      _
    // Predicated region
    $region86: #{pre_chemberta_forward.1} parent=1 // pred_check
      _
    $region87: #{pre_chemberta_forward.1} parent=1 // pred_check_branch
      %81 = sbr.rel (0) target = $region89
    $region88: #{pre_chemberta_forward.1} parent=1 // pred_region
      _
    $region89: #{pre_chemberta_forward.1} parent=1 // pred_fallthru
      _
    // Predicated region
    $region90: #{pre_chemberta_forward.1} parent=1 // pred_check
      _
    $region91: #{pre_chemberta_forward.1} parent=1 // pred_check_branch
      %83 = sbr.rel (0) target = $region93
    $region92: #{pre_chemberta_forward.1} parent=1 // pred_region
      _
    $region93: #{pre_chemberta_forward.1} parent=1 // pred_fallthru
      _
    // Predicated region
    $region94: #{pre_chemberta_forward.1} parent=1 // pred_check
      _
    $region95: #{pre_chemberta_forward.1} parent=1 // pred_check_branch
      %85 = sbr.rel (0) target = $region97
    $region96: #{pre_chemberta_forward.1} parent=1 // pred_region
      %86 = dma.done [#allocation4], 16
    $region97: #{pre_chemberta_forward.1} parent=1 // pred_fallthru
      _
    %87 = sfence
    %s88 = sld [smem:[#allocation2]]
    %v89 = vstv %s88
    %s90 = sld [smem:[#allocation2 + $0x1]]
    %v91 = vstv %s90
    %s92 = sld [smem:[#allocation2 + $0x2]]
    %v93 = vstv %s92
    %s94 = sld [smem:[#allocation2 + $0x3]]
    %v95 = vstv %s94
    %s96 = sld [smem:[#allocation2 + $0x4]]
    %v97 = vstv %s96
    %s98 = sld [smem:[#allocation2 + $0x5]]
    %v99 = vstv %s98
    %s100 = sld [smem:[#allocation2 + $0x6]]
    %v101 = vstv %s100
    %s102 = sld [smem:[#allocation2 + $0x7]]
    %v103 = vstv %s102
    %vm104 = vcmask 1040384
    %v105 = vsel %vm104, %v89, %v91
    %vm106 = vcmask 1041408
    %v107 = vsel %vm106, %v105, %v93
    %vm108 = vcmask 1042432
    %v109 = vsel %vm108, %v107, %v95
    %vm110 = vcmask 1043456
    %v111 = vsel %vm110, %v109, %v97
    %vm112 = vcmask 1044480
    %v113 = vsel %vm112, %v111, %v99
    %vm114 = vcmask 1045504
    %v115 = vsel %vm114, %v113, %v101
    %vm116 = vcmask 1046528
    %v117 = vsel %vm116, %v115, %v103
    %v118 = vlaneseq
    %v119 = vand.u32 %v118, 127
    %v120 = vadd.s32 %v119, 128
    %v121 = vadd.s32 %v119, 256
    %v122 = vadd.s32 %v119, 384
    %v123 = vadd.s32 %v119, 512
    %v124 = vadd.s32 %v119, 640
    %v125 = vadd.s32 %v119, 768
    %126 = vset.pattern.permute.xlu0 0
    %127 = vperm.xlu0 %126, %v117
    %v128 = vpop.permute.xlu0 %127
    %vm129 = vcmp.eq.s32.totalorder %v119, %v128
    %vm130 = vcmp.eq.s32.totalorder %v120, %v128
    %vm131 = vcmp.eq.s32.totalorder %v121, %v128
    %vm132 = vcmp.eq.s32.totalorder %v122, %v128
    %vm133 = vcmp.eq.s32.totalorder %v123, %v128
    %vm134 = vcmp.eq.s32.totalorder %v124, %v128
    %vm135 = vcmp.eq.s32.totalorder %v125, %v128
    %v136 = vsel %vm129, 1, 0
    %v137 = vsel %vm130, 1, 0
    %v138 = vsel %vm131, 1, 0
    %v139 = vsel %vm132, 1, 0
    %v140 = vsel %vm133, 1, 0
    %v141 = vsel %vm134, 1, 0
    %v142 = vsel %vm135, 1, 0
    %v143 = vcvt.s32.f32 %v136
    %v144 = vcvt.s32.f32 %v137
    %v145 = vcvt.s32.f32 %v138
    %v146 = vcvt.s32.f32 %v139
    %v147 = vcvt.s32.f32 %v140
    %v148 = vcvt.s32.f32 %v141
    %v149 = vcvt.s32.f32 %v142
    %v150 = vld [vmem:[%s1] sm:$0xff]
    %v151 = vld [vmem:[%s1 + $0x8] sm:$0xff]
    %v152 = vld [vmem:[%s1 + $0x10] sm:$0xff]
    %v153 = vld [vmem:[%s1 + $0x18] sm:$0xff]
    %v154 = vld [vmem:[%s1 + $0x20] sm:$0xff]
    %v155 = vld [vmem:[%s1 + $0x28] sm:$0xff]
    %v156 = vld [vmem:[%s1 + $0x30] sm:$0xff]
    %v157 = vld [vmem:[%s1 + $0x38] sm:$0xff]
    %v158 = vld [vmem:[%s1 + $0x40] sm:$0xff]
    %v159 = vld [vmem:[%s1 + $0x48] sm:$0xff]
    %v160 = vld [vmem:[%s1 + $0x50] sm:$0xff]
    %v161 = vld [vmem:[%s1 + $0x58] sm:$0xff]
    %v162 = vld [vmem:[%s1 + $0x60] sm:$0xff]
    %v163 = vld [vmem:[%s1 + $0x68] sm:$0xff]
    %v164 = vld [vmem:[%s1 + $0x70] sm:$0xff]
    %v165 = vld [vmem:[%s1 + $0x78] sm:$0xff]
    %v166 = vld [vmem:[%s1 + $0x80] sm:$0xff]
    %v167 = vld [vmem:[%s1 + $0x88] sm:$0xff]
    %v168 = vld [vmem:[%s1 + $0x90] sm:$0xff]
    %v169 = vld [vmem:[%s1 + $0x98] sm:$0xff]
    %v170 = vld [vmem:[%s1 + $0xa0] sm:$0xff]
    %v171 = vld [vmem:[%s1 + $0xa8] sm:$0xff]
    %v172 = vld [vmem:[%s1 + $0xb0] sm:$0xff]
    %v173 = vld [vmem:[%s1 + $0xb8] sm:$0xff]
    %v174 = vld [vmem:[%s1 + $0xc0] sm:$0xff]
    %v175 = vld [vmem:[%s1 + $0xc8] sm:$0xff]
    %v176 = vld [vmem:[%s1 + $0xd0] sm:$0xff]
    %v177 = vld [vmem:[%s1 + $0xd8] sm:$0xff]
    %v178 = vld [vmem:[%s1 + $0xe0] sm:$0xff]
    %v179 = vld [vmem:[%s1 + $0xe8] sm:$0xff]
    %v180 = vld [vmem:[%s1 + $0xf0] sm:$0xff]
    %v181 = vld [vmem:[%s1 + $0xf8] sm:$0xff]
    %v182 = vld [vmem:[%s1 + $0x100] sm:$0xff]
    %v183 = vld [vmem:[%s1 + $0x108] sm:$0xff]
    %v184 = vld [vmem:[%s1 + $0x110] sm:$0xff]
    %v185 = vld [vmem:[%s1 + $0x118] sm:$0xff]
    %v186 = vld [vmem:[%s1 + $0x120] sm:$0xff]
    %v187 = vld [vmem:[%s1 + $0x128] sm:$0xff]
    %v188 = vld [vmem:[%s1 + $0x130] sm:$0xff]
    %v189 = vld [vmem:[%s1 + $0x138] sm:$0xff]
    %v190 = vld [vmem:[%s1 + $0x140] sm:$0xff]
    %v191 = vld [vmem:[%s1 + $0x148] sm:$0xff]
    %v192 = vld [vmem:[%s1 + $0x150] sm:$0xff]
    %v193 = vld [vmem:[%s1 + $0x158] sm:$0xff]
    %v194 = vld [vmem:[%s1 + $0x160] sm:$0xff]
    %v195 = vld [vmem:[%s1 + $0x168] sm:$0xff]
    %v196 = vld [vmem:[%s1 + $0x170] sm:$0xff]
    %v197 = vld [vmem:[%s1 + $0x178] sm:$0xff]
    %v198 = vld [vmem:[%s1 + $0x180] sm:$0xff]
    %v199 = vld [vmem:[%s1 + $0x188] sm:$0xff]
    %v200 = vld [vmem:[%s1 + $0x190] sm:$0xff]
    %v201 = vld [vmem:[%s1 + $0x198] sm:$0xff]
    %v202 = vld [vmem:[%s1 + $0x1a0] sm:$0xff]
    %v203 = vld [vmem:[%s1 + $0x1a8] sm:$0xff]
    %v204 = vld [vmem:[%s1 + $0x1b0] sm:$0xff]
    %v205 = vld [vmem:[%s1 + $0x1b8] sm:$0xff]
    %v206 = vld [vmem:[%s1 + $0x1c0] sm:$0xff]
    %v207 = vld [vmem:[%s1 + $0x1c8] sm:$0xff]
    %v208 = vld [vmem:[%s1 + $0x1d0] sm:$0xff]
    %v209 = vld [vmem:[%s1 + $0x1d8] sm:$0xff]
    %v210 = vld [vmem:[%s1 + $0x1e0] sm:$0xff]
    %v211 = vld [vmem:[%s1 + $0x1e8] sm:$0xff]
    %v212 = vld [vmem:[%s1 + $0x1f0] sm:$0xff]
    %v213 = vld [vmem:[%s1 + $0x1f8] sm:$0xff]
    %v214 = vld [vmem:[%s1 + $0x200] sm:$0xff]
    %v215 = vld [vmem:[%s1 + $0x208] sm:$0xff]
    %v216 = vld [vmem:[%s1 + $0x210] sm:$0xff]
    %v217 = vld [vmem:[%s1 + $0x218] sm:$0xff]
    %v218 = vld [vmem:[%s1 + $0x220] sm:$0xff]
    %v219 = vld [vmem:[%s1 + $0x228] sm:$0xff]
    %v220 = vld [vmem:[%s1 + $0x230] sm:$0xff]
    %v221 = vld [vmem:[%s1 + $0x238] sm:$0xff]
    %v222 = vld [vmem:[%s1 + $0x240] sm:$0xff]
    %v223 = vld [vmem:[%s1 + $0x248] sm:$0xff]
    %v224 = vld [vmem:[%s1 + $0x250] sm:$0xff]
    %v225 = vld [vmem:[%s1 + $0x258] sm:$0xff]
    %v226 = vld [vmem:[%s1 + $0x260] sm:$0xff]
    %v227 = vld [vmem:[%s1 + $0x268] sm:$0xff]
    %v228 = vld [vmem:[%s1 + $0x270] sm:$0xff]
    %v229 = vld [vmem:[%s1 + $0x278] sm:$0xff]
    %v230 = vld [vmem:[%s1 + $0x280] sm:$0xff]
    %v231 = vld [vmem:[%s1 + $0x288] sm:$0xff]
    %v232 = vld [vmem:[%s1 + $0x290] sm:$0xff]
    %v233 = vld [vmem:[%s1 + $0x298] sm:$0xff]
    %v234 = vld [vmem:[%s1 + $0x2a0] sm:$0xff]
    %v235 = vld [vmem:[%s1 + $0x2a8] sm:$0xff]
    %v236 = vld [vmem:[%s1 + $0x2b0] sm:$0xff]
    %v237 = vld [vmem:[%s1 + $0x2b8] sm:$0xff]
    %v238 = vld [vmem:[%s1 + $0x2c0] sm:$0xff]
    %v239 = vld [vmem:[%s1 + $0x2c8] sm:$0xff]
    %v240 = vld [vmem:[%s1 + $0x2d0] sm:$0xff]
    %v241 = vld [vmem:[%s1 + $0x2d8] sm:$0xff]
    %v242 = vld [vmem:[%s1 + $0x2e0] sm:$0xff]
    %v243 = vld [vmem:[%s1 + $0x2e8] sm:$0xff]
    %v244 = vld [vmem:[%s1 + $0x2f0] sm:$0xff]
    %v245 = vld [vmem:[%s1 + $0x2f8] sm:$0xff]
    %v246 = vld [vmem:[%s1 + $0x300] sm:$0xff]
    %v247 = vld [vmem:[%s1 + $0x308] sm:$0xff]
    %v248 = vld [vmem:[%s1 + $0x310] sm:$0xff]
    %v249 = vld [vmem:[%s1 + $0x318] sm:$0xff]
    %v250 = vld [vmem:[%s1 + $0x320] sm:$0xff]
    %v251 = vld [vmem:[%s1 + $0x328] sm:$0xff]
    %v252 = vld [vmem:[%s1 + $0x330] sm:$0xff]
    %v253 = vld [vmem:[%s1 + $0x338] sm:$0xff]
    %v254 = vld [vmem:[%s1 + $0x340] sm:$0xff]
    %v255 = vld [vmem:[%s1 + $0x348] sm:$0xff]
    %v256 = vld [vmem:[%s1 + $0x350] sm:$0xff]
    %v257 = vld [vmem:[%s1 + $0x358] sm:$0xff]
    %v258 = vld [vmem:[%s1 + $0x360] sm:$0xff]
    %v259 = vld [vmem:[%s1 + $0x368] sm:$0xff]
    %v260 = vld [vmem:[%s1 + $0x370] sm:$0xff]
    %v261 = vld [vmem:[%s1 + $0x378] sm:$0xff]
    %v262 = vld [vmem:[%s2] sm:$0xff]
    %263 = vmatprep.subr.mxu0 0.0
    %264 = vmatpush1.msra.mxu0 %v165
    %265 = vmatprep.subr.mxu0 0.0
    %266 = vmatpush1.msra.mxu0 %v164
    %267 = vmatprep.subr.mxu0 0.0
    %268 = vmatpush1.msra.mxu0 %v163
    %269 = vmatprep.subr.mxu0 0.0
    %270 = vmatpush1.msra.mxu0 %v162
    %271 = vmatprep.subr.mxu0 0.0
    %272 = vmatpush1.msra.mxu0 %v161
    %273 = vmatprep.subr.mxu0 0.0
    %274 = vmatpush1.msra.mxu0 %v160
    %275 = vmatprep.subr.mxu0 0.0
    %276 = vmatpush1.msra.mxu0 %v159
    %277 = vmatprep.subr.mxu0 0.0
    %278 = vmatpush1.msra.mxu0 %v158
    %279 = vmatprep.subr.mxu0 0.0
    %280 = vmatpush1.msra.mxu0 %v157
    %281 = vmatprep.subr.mxu0 0.0
    %282 = vmatpush1.msra.mxu0 %v156
    %283 = vmatprep.subr.mxu0 0.0
    %284 = vmatpush1.msra.mxu0 %v155
    %285 = vmatprep.subr.mxu0 0.0
    %286 = vmatpush1.msra.mxu0 %v154
    %287 = vmatprep.subr.mxu0 0.0
    %288 = vmatpush1.msra.mxu0 %v153
    %289 = vmatprep.subr.mxu0 0.0
    %290 = vmatpush1.msra.mxu0 %v152
    %291 = vmatprep.subr.mxu0 0.0
    %292 = vmatpush1.msra.mxu0 %v151
    %293 = vmatprep.subr.mxu0 0.0
    %294 = vmatpush1.msra.mxu0 %v150
    %295 = vmatprep.subr.mxu0 0.0
    %296 = vmatpush2.msra.mxu0 %v181
    %297 = vmatprep.subr.mxu0 0.0
    %298 = vmatpush2.msra.mxu0 %v180
    %299 = vmatprep.subr.mxu0 0.0
    %300 = vmatpush2.msra.mxu0 %v179
    %301 = vmatprep.subr.mxu0 0.0
    %302 = vmatpush2.msra.mxu0 %v178
    %303 = vmatprep.subr.mxu0 0.0
    %304 = vmatpush2.msra.mxu0 %v177
    %305 = vmatprep.subr.mxu0 0.0
    %306 = vmatpush2.msra.mxu0 %v176
    %307 = vmatprep.subr.mxu0 0.0
    %308 = vmatpush2.msra.mxu0 %v175
    %309 = vmatprep.subr.mxu0 0.0
    %310 = vmatpush2.msra.mxu0 %v174
    %311 = vmatprep.subr.mxu0 0.0
    %312 = vmatpush2.msra.mxu0 %v173
    %313 = vmatprep.subr.mxu0 0.0
    %314 = vmatpush2.msra.mxu0 %v172
    %315 = vmatprep.subr.mxu0 0.0
    %316 = vmatpush2.msra.mxu0 %v171
    %317 = vmatprep.subr.mxu0 0.0
    %318 = vmatpush2.msra.mxu0 %v170
    %319 = vmatprep.subr.mxu0 0.0
    %320 = vmatpush2.msra.mxu0 %v169
    %321 = vmatprep.subr.mxu0 0.0
    %322 = vmatpush2.msra.mxu0 %v168
    %323 = vmatprep.subr.mxu0 0.0
    %324 = vmatpush2.msra.mxu0 %v167
    %325 = vmatprep.subr.mxu0 0.0
    %326 = vmatpush2.msra.mxu0 %v166
    %327 = vmatprep.mubr.f32.mxu0 %v144
    %328 = vmatmul.mubr.f32.gmra.mxu0 %v143
    %v329 = vpop.f32.mrf.mxu0
    %v330 = vadd.f32 %v262, %v329
    %v331 = vpop.f32.mrf.mxu0
    %332 = vdwg.mxu0
    %333 = vmatprep.subr.mxu0 0.0
    %334 = vmatpush1.msra.mxu0 %v197
    %335 = vmatprep.subr.mxu0 0.0
    %336 = vmatpush1.msra.mxu0 %v196
    %337 = vmatprep.subr.mxu0 0.0
    %338 = vmatpush1.msra.mxu0 %v195
    %339 = vmatprep.subr.mxu0 0.0
    %340 = vmatpush1.msra.mxu0 %v194
    %341 = vmatprep.subr.mxu0 0.0
    %342 = vmatpush1.msra.mxu0 %v193
    %343 = vmatprep.subr.mxu0 0.0
    %344 = vmatpush1.msra.mxu0 %v192
    %345 = vmatprep.subr.mxu0 0.0
    %346 = vmatpush1.msra.mxu0 %v191
    %347 = vmatprep.subr.mxu0 0.0
    %348 = vmatpush1.msra.mxu0 %v190
    %349 = vmatprep.subr.mxu0 0.0
    %350 = vmatpush1.msra.mxu0 %v189
    %351 = vmatprep.subr.mxu0 0.0
    %352 = vmatpush1.msra.mxu0 %v188
    %353 = vmatprep.subr.mxu0 0.0
    %354 = vmatpush1.msra.mxu0 %v187
    %355 = vmatprep.subr.mxu0 0.0
    %356 = vmatpush1.msra.mxu0 %v186
    %357 = vmatprep.subr.mxu0 0.0
    %358 = vmatpush1.msra.mxu0 %v185
    %359 = vmatprep.subr.mxu0 0.0
    %360 = vmatpush1.msra.mxu0 %v184
    %361 = vmatprep.subr.mxu0 0.0
    %362 = vmatpush1.msra.mxu0 %v183
    %363 = vmatprep.subr.mxu0 0.0
    %364 = vmatpush1.msra.mxu0 %v182
    %365 = vmatprep.subr.mxu0 0.0
    %366 = vmatpush2.msra.mxu0 %v213
    %367 = vmatprep.subr.mxu0 0.0
    %368 = vmatpush2.msra.mxu0 %v212
    %369 = vmatprep.subr.mxu0 0.0
    %370 = vmatpush2.msra.mxu0 %v211
    %371 = vmatprep.subr.mxu0 0.0
    %372 = vmatpush2.msra.mxu0 %v210
    %373 = vmatprep.subr.mxu0 0.0
    %374 = vmatpush2.msra.mxu0 %v209
    %375 = vmatprep.subr.mxu0 0.0
    %376 = vmatpush2.msra.mxu0 %v208
    %377 = vmatprep.subr.mxu0 0.0
    %378 = vmatpush2.msra.mxu0 %v207
    %379 = vmatprep.subr.mxu0 0.0
    %380 = vmatpush2.msra.mxu0 %v206
    %381 = vmatprep.subr.mxu0 0.0
    %382 = vmatpush2.msra.mxu0 %v205
    %383 = vmatprep.subr.mxu0 0.0
    %384 = vmatpush2.msra.mxu0 %v204
    %385 = vmatprep.subr.mxu0 0.0
    %386 = vmatpush2.msra.mxu0 %v203
    %387 = vmatprep.subr.mxu0 0.0
    %388 = vmatpush2.msra.mxu0 %v202
    %389 = vmatprep.subr.mxu0 0.0
    %390 = vmatpush2.msra.mxu0 %v201
    %391 = vmatprep.subr.mxu0 0.0
    %392 = vmatpush2.msra.mxu0 %v200
    %393 = vmatprep.subr.mxu0 0.0
    %394 = vmatpush2.msra.mxu0 %v199
    %395 = vmatprep.subr.mxu0 0.0
    %396 = vmatpush2.msra.mxu0 %v198
    %397 = vmatprep.mubr.f32.mxu0 %v146
    %398 = vmatmul.mubr.f32.gmra.mxu0 %v145
    %v399 = vpop.f32.mrf.mxu0
    %v400 = vadd.f32 %v330, %v399
    %v401 = vpop.f32.mrf.mxu0
    %402 = vdwg.mxu0
    %403 = vmatprep.subr.mxu0 0.0
    %404 = vmatpush1.msra.mxu0 %v229
    %405 = vmatprep.subr.mxu0 0.0
    %406 = vmatpush1.msra.mxu0 %v228
    %407 = vmatprep.subr.mxu0 0.0
    %408 = vmatpush1.msra.mxu0 %v227
    %409 = vmatprep.subr.mxu0 0.0
    %410 = vmatpush1.msra.mxu0 %v226
    %411 = vmatprep.subr.mxu0 0.0
    %412 = vmatpush1.msra.mxu0 %v225
    %413 = vmatprep.subr.mxu0 0.0
    %414 = vmatpush1.msra.mxu0 %v224
    %415 = vmatprep.subr.mxu0 0.0
    %416 = vmatpush1.msra.mxu0 %v223
    %417 = vmatprep.subr.mxu0 0.0
    %418 = vmatpush1.msra.mxu0 %v222
    %419 = vmatprep.subr.mxu0 0.0
    %420 = vmatpush1.msra.mxu0 %v221
    %421 = vmatprep.subr.mxu0 0.0
    %422 = vmatpush1.msra.mxu0 %v220
    %423 = vmatprep.subr.mxu0 0.0
    %424 = vmatpush1.msra.mxu0 %v219
    %425 = vmatprep.subr.mxu0 0.0
    %426 = vmatpush1.msra.mxu0 %v218
    %427 = vmatprep.subr.mxu0 0.0
    %428 = vmatpush1.msra.mxu0 %v217
    %429 = vmatprep.subr.mxu0 0.0
    %430 = vmatpush1.msra.mxu0 %v216
    %431 = vmatprep.subr.mxu0 0.0
    %432 = vmatpush1.msra.mxu0 %v215
    %433 = vmatprep.subr.mxu0 0.0
    %434 = vmatpush1.msra.mxu0 %v214
    %435 = vmatprep.subr.mxu0 0.0
    %436 = vmatpush2.msra.mxu0 %v245
    %437 = vmatprep.subr.mxu0 0.0
    %438 = vmatpush2.msra.mxu0 %v244
    %439 = vmatprep.subr.mxu0 0.0
    %440 = vmatpush2.msra.mxu0 %v243
    %441 = vmatprep.subr.mxu0 0.0
    %442 = vmatpush2.msra.mxu0 %v242
    %443 = vmatprep.subr.mxu0 0.0
    %444 = vmatpush2.msra.mxu0 %v241
    %445 = vmatprep.subr.mxu0 0.0
    %446 = vmatpush2.msra.mxu0 %v240
    %447 = vmatprep.subr.mxu0 0.0
    %448 = vmatpush2.msra.mxu0 %v239
    %449 = vmatprep.subr.mxu0 0.0
    %450 = vmatpush2.msra.mxu0 %v238
    %451 = vmatprep.subr.mxu0 0.0
    %452 = vmatpush2.msra.mxu0 %v237
    %453 = vmatprep.subr.mxu0 0.0
    %454 = vmatpush2.msra.mxu0 %v236
    %455 = vmatprep.subr.mxu0 0.0
    %456 = vmatpush2.msra.mxu0 %v235
    %457 = vmatprep.subr.mxu0 0.0
    %458 = vmatpush2.msra.mxu0 %v234
    %459 = vmatprep.subr.mxu0 0.0
    %460 = vmatpush2.msra.mxu0 %v233
    %461 = vmatprep.subr.mxu0 0.0
    %462 = vmatpush2.msra.mxu0 %v232
    %463 = vmatprep.subr.mxu0 0.0
    %464 = vmatpush2.msra.mxu0 %v231
    %465 = vmatprep.subr.mxu0 0.0
    %466 = vmatpush2.msra.mxu0 %v230
    %467 = vmatprep.mubr.f32.mxu0 %v148
    %468 = vmatmul.mubr.f32.gmra.mxu0 %v147
    %v469 = vpop.f32.mrf.mxu0
    %v470 = vadd.f32 %v400, %v469
    %v471 = vpop.f32.mrf.mxu0
    %472 = vdwg.mxu0
    %473 = vmatprep.subr.mxu0 0.0
    %474 = vmatpush1.msra.mxu0 %v261
    %475 = vmatprep.subr.mxu0 0.0
    %476 = vmatpush1.msra.mxu0 %v260
    %477 = vmatprep.subr.mxu0 0.0
    %478 = vmatpush1.msra.mxu0 %v259
    %479 = vmatprep.subr.mxu0 0.0
    %480 = vmatpush1.msra.mxu0 %v258
    %481 = vmatprep.subr.mxu0 0.0
    %482 = vmatpush1.msra.mxu0 %v257
    %483 = vmatprep.subr.mxu0 0.0
    %484 = vmatpush1.msra.mxu0 %v256
    %485 = vmatprep.subr.mxu0 0.0
    %486 = vmatpush1.msra.mxu0 %v255
    %487 = vmatprep.subr.mxu0 0.0
    %488 = vmatpush1.msra.mxu0 %v254
    %489 = vmatprep.subr.mxu0 0.0
    %490 = vmatpush1.msra.mxu0 %v253
    %491 = vmatprep.subr.mxu0 0.0
    %492 = vmatpush1.msra.mxu0 %v252
    %493 = vmatprep.subr.mxu0 0.0
    %494 = vmatpush1.msra.mxu0 %v251
    %495 = vmatprep.subr.mxu0 0.0
    %496 = vmatpush1.msra.mxu0 %v250
    %497 = vmatprep.subr.mxu0 0.0
    %498 = vmatpush1.msra.mxu0 %v249
    %499 = vmatprep.subr.mxu0 0.0
    %500 = vmatpush1.msra.mxu0 %v248
    %501 = vmatprep.subr.mxu0 0.0
    %502 = vmatpush1.msra.mxu0 %v247
    %503 = vmatprep.subr.mxu0 0.0
    %504 = vmatpush1.msra.mxu0 %v246
    %505 = vmatprep.subr.mxu0 0.0
    %506 = vmatpush2.msra.mxu0 0.0
    %507 = vmatprep.subr.mxu0 0.0
    %508 = vmatpush2.msra.mxu0 0.0
    %509 = vmatprep.subr.mxu0 0.0
    %510 = vmatpush2.msra.mxu0 0.0
    %511 = vmatprep.subr.mxu0 0.0
    %512 = vmatpush2.msra.mxu0 0.0
    %513 = vmatprep.subr.mxu0 0.0
    %514 = vmatpush2.msra.mxu0 0.0
    %515 = vmatprep.subr.mxu0 0.0
    %516 = vmatpush2.msra.mxu0 0.0
    %517 = vmatprep.subr.mxu0 0.0
    %518 = vmatpush2.msra.mxu0 0.0
    %519 = vmatprep.subr.mxu0 0.0
    %520 = vmatpush2.msra.mxu0 0.0
    %521 = vmatprep.subr.mxu0 0.0
    %522 = vmatpush2.msra.mxu0 0.0
    %523 = vmatprep.subr.mxu0 0.0
    %524 = vmatpush2.msra.mxu0 0.0
    %525 = vmatprep.subr.mxu0 0.0
    %526 = vmatpush2.msra.mxu0 0.0
    %527 = vmatprep.subr.mxu0 0.0
    %528 = vmatpush2.msra.mxu0 0.0
    %529 = vmatprep.subr.mxu0 0.0
    %530 = vmatpush2.msra.mxu0 0.0
    %531 = vmatprep.subr.mxu0 0.0
    %532 = vmatpush2.msra.mxu0 0.0
    %533 = vmatprep.subr.mxu0 0.0
    %534 = vmatpush2.msra.mxu0 0.0
    %535 = vmatprep.subr.mxu0 0.0
    %536 = vmatpush2.msra.mxu0 0.0
    %537 = vmatprep.mubr.f32.mxu0 0.0
    %538 = vmatmul.mubr.f32.gmra.mxu0 %v149
    %v539 = vpop.f32.mrf.mxu0
    %v540 = vadd.f32 %v470, %v539
    %v541 = vpop.f32.mrf.mxu0
    %542 = vdwg.mxu0
    %v543 = vld [vmem:[%s3] sm:$0x1]
    %v544 = vld [vmem:[%s4] sm:$0x1]
    %vm545 = vcmask 261120
    %v546 = vsel %vm545, %v540, 0.0
    %547 = vadd.xlane.f32.xlu0 %v546
    %v548 = vpop.xlane.xlu0 %547
    %v549 = vrcp.pop 32.0
    %v550 = vmul.f32 %v548, %v549
    %v551 = vsub.f32 %v540, %v550
    %v552 = vmul.f32 %v551, %v551
    %v553 = vsel %vm545, %v552, 0.0
    %554 = vadd.xlane.f32.xlu0 %v553
    %v555 = vpop.xlane.xlu0 %554
    %v556 = vmul.f32 %v555, %v549
    %v557 = vadd.f32 %v556, 1e-05
    %v558 = vrsqrt.pop %v557
    %v559 = vmul.f32 %v551, %v558
    %v561 = vlaneseq
    %v562 = vshrl.u32 %v561, 7
    %v563 = vsub.s32 0, %v562
    %v564 = vrot.slane %v543, %v563
    %v566 = vmul.f32 %v559, %v564
    %v568 = vlaneseq
    %v569 = vshrl.u32 %v568, 7
    %v570 = vsub.s32 0, %v569
    %v571 = vrot.slane %v544, %v570
    %v573 = vadd.f32 %v566, %v571
    %v574 = vld [vmem:[%s5] sm:$0xff]
    %v575 = vld [vmem:[%s5 + $0x8] sm:$0xff]
    %v576 = vld [vmem:[%s5 + $0x10] sm:$0xff]
    %v577 = vld [vmem:[%s5 + $0x18] sm:$0xff]
    %v578 = vld [vmem:[%s6] sm:$0x1]
    %v580 = vlaneseq
    %v581 = vshrl.u32 %v580, 7
    %v582 = vsub.s32 0, %v581
    %v583 = vrot.slane %v578, %v582
    %v586 = vsel %vm545, %v573, 0
    %588 = vmatprep.subr.mxu0 0.0
    %589 = vmatpush1.msra.mxu0 0.0
    %590 = vmatprep.subr.mxu0 0.0
    %591 = vmatpush1.msra.mxu0 0.0
    %592 = vmatprep.subr.mxu0 0.0
    %593 = vmatpush1.msra.mxu0 0.0
    %594 = vmatprep.subr.mxu0 0.0
    %595 = vmatpush1.msra.mxu0 0.0
    %596 = vmatprep.subr.mxu0 0.0
    %597 = vmatpush1.msra.mxu0 0.0
    %598 = vmatprep.subr.mxu0 0.0
    %599 = vmatpush1.msra.mxu0 0.0
    %600 = vmatprep.subr.mxu0 0.0
    %601 = vmatpush1.msra.mxu0 0.0
    %602 = vmatprep.subr.mxu0 0.0
    %603 = vmatpush1.msra.mxu0 0.0
    %604 = vmatprep.subr.mxu0 0.0
    %605 = vmatpush1.msra.mxu0 0.0
    %606 = vmatprep.subr.mxu0 0.0
    %607 = vmatpush1.msra.mxu0 0.0
    %608 = vmatprep.subr.mxu0 0.0
    %609 = vmatpush1.msra.mxu0 0.0
    %610 = vmatprep.subr.mxu0 0.0
    %611 = vmatpush1.msra.mxu0 0.0
    %612 = vmatprep.subr.mxu0 0.0
    %613 = vmatpush1.msra.mxu0 %v577
    %614 = vmatprep.subr.mxu0 0.0
    %615 = vmatpush1.msra.mxu0 %v576
    %616 = vmatprep.subr.mxu0 0.0
    %617 = vmatpush1.msra.mxu0 %v575
    %618 = vmatprep.subr.mxu0 0.0
    %619 = vmatpush1.msra.mxu0 %v574
    %620 = vmatprep.subr.mxu0 0.0
    %621 = vmatpush2.msra.mxu0 0.0
    %622 = vmatprep.subr.mxu0 0.0
    %623 = vmatpush2.msra.mxu0 0.0
    %624 = vmatprep.subr.mxu0 0.0
    %625 = vmatpush2.msra.mxu0 0.0
    %626 = vmatprep.subr.mxu0 0.0
    %627 = vmatpush2.msra.mxu0 0.0
    %628 = vmatprep.subr.mxu0 0.0
    %629 = vmatpush2.msra.mxu0 0.0
    %630 = vmatprep.subr.mxu0 0.0
    %631 = vmatpush2.msra.mxu0 0.0
    %632 = vmatprep.subr.mxu0 0.0
    %633 = vmatpush2.msra.mxu0 0.0
    %634 = vmatprep.subr.mxu0 0.0
    %635 = vmatpush2.msra.mxu0 0.0
    %636 = vmatprep.subr.mxu0 0.0
    %637 = vmatpush2.msra.mxu0 0.0
    %638 = vmatprep.subr.mxu0 0.0
    %639 = vmatpush2.msra.mxu0 0.0
    %640 = vmatprep.subr.mxu0 0.0
    %641 = vmatpush2.msra.mxu0 0.0
    %642 = vmatprep.subr.mxu0 0.0
    %643 = vmatpush2.msra.mxu0 0.0
    %644 = vmatprep.subr.mxu0 0.0
    %645 = vmatpush2.msra.mxu0 0.0
    %646 = vmatprep.subr.mxu0 0.0
    %647 = vmatpush2.msra.mxu0 0.0
    %648 = vmatprep.subr.mxu0 0.0
    %649 = vmatpush2.msra.mxu0 0.0
    %650 = vmatprep.subr.mxu0 0.0
    %651 = vmatpush2.msra.mxu0 0.0
    %652 = vmatprep.mubr.f32.mxu0 0.0
    %653 = vmatmul.mubr.f32.gmra.mxu0 %v586
    %v654 = vpop.f32.mrf.mxu0
    %v655 = vadd.f32 %v583, %v654
    %v656 = vpop.f32.mrf.mxu0
    %657 = vdwg.mxu0
    %659 = vrot.lane.b32.xlu0 %v655, 96
    %v660 = vpop.permute.xlu0 %659
    %vm661 = vcmask 130048
    %v662 = vsel %vm661, %v655, 0
    %v664 = vsel %vm661, %v660, 0
    %666 = vmatprep.subr.mxu0 0.0
    %667 = vmatpush1.xpose.msra.mxu0 0.0
    %668 = vmatprep.subr.mxu0 0.0
    %669 = vmatpush1.xpose.msra.mxu0 0.0
    %670 = vmatprep.subr.mxu0 0.0
    %671 = vmatpush1.xpose.msra.mxu0 0.0
    %672 = vmatprep.subr.mxu0 0.0
    %673 = vmatpush1.xpose.msra.mxu0 0.0
    %674 = vmatprep.subr.mxu0 0.0
    %675 = vmatpush1.xpose.msra.mxu0 0.0
    %676 = vmatprep.subr.mxu0 0.0
    %677 = vmatpush1.xpose.msra.mxu0 0.0
    %678 = vmatprep.subr.mxu0 0.0
    %679 = vmatpush1.xpose.msra.mxu0 0.0
    %680 = vmatprep.subr.mxu0 0.0
    %681 = vmatpush1.xpose.msra.mxu0 0.0
    %682 = vmatprep.subr.mxu0 0.0
    %683 = vmatpush1.xpose.msra.mxu0 0.0
    %684 = vmatprep.subr.mxu0 0.0
    %685 = vmatpush1.xpose.msra.mxu0 0.0
    %686 = vmatprep.subr.mxu0 0.0
    %687 = vmatpush1.xpose.msra.mxu0 0.0
    %688 = vmatprep.subr.mxu0 0.0
    %689 = vmatpush1.xpose.msra.mxu0 0.0
    %690 = vmatprep.subr.mxu0 0.0
    %691 = vmatpush1.xpose.msra.mxu0 0.0
    %692 = vmatprep.subr.mxu0 0.0
    %693 = vmatpush1.xpose.msra.mxu0 0.0
    %694 = vmatprep.subr.mxu0 0.0
    %695 = vmatpush1.xpose.msra.mxu0 0.0
    %696 = vmatprep.subr.mxu0 0.0
    %697 = vmatpush1.xpose.msra.mxu0 %v664
    %698 = vmatprep.subr.mxu0 0.0
    %699 = vmatpush2.xpose.msra.mxu0 0.0
    %700 = vmatprep.subr.mxu0 0.0
    %701 = vmatpush2.xpose.msra.mxu0 0.0
    %702 = vmatprep.subr.mxu0 0.0
    %703 = vmatpush2.xpose.msra.mxu0 0.0
    %704 = vmatprep.subr.mxu0 0.0
    %705 = vmatpush2.xpose.msra.mxu0 0.0
    %706 = vmatprep.subr.mxu0 0.0
    %707 = vmatpush2.xpose.msra.mxu0 0.0
    %708 = vmatprep.subr.mxu0 0.0
    %709 = vmatpush2.xpose.msra.mxu0 0.0
    %710 = vmatprep.subr.mxu0 0.0
    %711 = vmatpush2.xpose.msra.mxu0 0.0
    %712 = vmatprep.subr.mxu0 0.0
    %713 = vmatpush2.xpose.msra.mxu0 0.0
    %714 = vmatprep.subr.mxu0 0.0
    %715 = vmatpush2.xpose.msra.mxu0 0.0
    %716 = vmatprep.subr.mxu0 0.0
    %717 = vmatpush2.xpose.msra.mxu0 0.0
    %718 = vmatprep.subr.mxu0 0.0
    %719 = vmatpush2.xpose.msra.mxu0 0.0
    %720 = vmatprep.subr.mxu0 0.0
    %721 = vmatpush2.xpose.msra.mxu0 0.0
    %722 = vmatprep.subr.mxu0 0.0
    %723 = vmatpush2.xpose.msra.mxu0 0.0
    %724 = vmatprep.subr.mxu0 0.0
    %725 = vmatpush2.xpose.msra.mxu0 0.0
    %726 = vmatprep.subr.mxu0 0.0
    %727 = vmatpush2.xpose.msra.mxu0 0.0
    %728 = vmatprep.subr.mxu0 0.0
    %729 = vmatpush2.xpose.msra.mxu0 0.0
    %730 = vmatprep.mubr.f32.mxu0 0.0
    %731 = vmatmul.mubr.f32.gmra.mxu0 %v662
    %v732 = vpop.f32.mrf.mxu0
    %v733 = vadd.f32 0.0, %v732
    %v734 = vpop.f32.mrf.mxu0
    %735 = vdwg.mxu0
    %v736 = vmul.f32 %v733, 0.25
    %vm737 = vcmask 64512
    %v738 = vsel %vm737, %v736, -inf
    %739 = vmax.xlane.f32.xlu0 %v738
    %v740 = vpop.xlane.xlu0 %739
    %v741 = vsub.f32 %v736, %v740
    %v742 = vmul.f32 %v741, 1.442695
    %v743 = vpow.pop %v742
    %v744 = vsel %vm737, %v743, 0.0
    %745 = vadd.xlane.f32.xlu0 %v744
    %v746 = vpop.xlane.xlu0 %745
    %v747 = vrcp.pop %v746
    %v748 = vmul.f32 %v743, %v747
    %749 = vrot.lane.b32.xlu0 %v655, 64
    %v750 = vpop.permute.xlu0 %749
    %v753 = vsel %vm737, %v748, 0
    %755 = vmatprep.subr.mxu0 0.0
    %756 = vmatpush1.msra.mxu0 0.0
    %757 = vmatprep.subr.mxu0 0.0
    %758 = vmatpush1.msra.mxu0 0.0
    %759 = vmatprep.subr.mxu0 0.0
    %760 = vmatpush1.msra.mxu0 0.0
    %761 = vmatprep.subr.mxu0 0.0
    %762 = vmatpush1.msra.mxu0 0.0
    %763 = vmatprep.subr.mxu0 0.0
    %764 = vmatpush1.msra.mxu0 0.0
    %765 = vmatprep.subr.mxu0 0.0
    %766 = vmatpush1.msra.mxu0 0.0
    %767 = vmatprep.subr.mxu0 0.0
    %768 = vmatpush1.msra.mxu0 0.0
    %769 = vmatprep.subr.mxu0 0.0
    %770 = vmatpush1.msra.mxu0 0.0
    %771 = vmatprep.subr.mxu0 0.0
    %772 = vmatpush1.msra.mxu0 0.0
    %773 = vmatprep.subr.mxu0 0.0
    %774 = vmatpush1.msra.mxu0 0.0
    %775 = vmatprep.subr.mxu0 0.0
    %776 = vmatpush1.msra.mxu0 0.0
    %777 = vmatprep.subr.mxu0 0.0
    %778 = vmatpush1.msra.mxu0 0.0
    %779 = vmatprep.subr.mxu0 0.0
    %780 = vmatpush1.msra.mxu0 0.0
    %781 = vmatprep.subr.mxu0 0.0
    %782 = vmatpush1.msra.mxu0 0.0
    %783 = vmatprep.subr.mxu0 0.0
    %784 = vmatpush1.msra.mxu0 0.0
    %785 = vmatprep.subr.mxu0 0.0
    %786 = vmatpush1.msra.mxu0 %v750
    %787 = vmatprep.subr.mxu0 0.0
    %788 = vmatpush2.msra.mxu0 0.0
    %789 = vmatprep.subr.mxu0 0.0
    %790 = vmatpush2.msra.mxu0 0.0
    %791 = vmatprep.subr.mxu0 0.0
    %792 = vmatpush2.msra.mxu0 0.0
    %793 = vmatprep.subr.mxu0 0.0
    %794 = vmatpush2.msra.mxu0 0.0
    %795 = vmatprep.subr.mxu0 0.0
    %796 = vmatpush2.msra.mxu0 0.0
    %797 = vmatprep.subr.mxu0 0.0
    %798 = vmatpush2.msra.mxu0 0.0
    %799 = vmatprep.subr.mxu0 0.0
    %800 = vmatpush2.msra.mxu0 0.0
    %801 = vmatprep.subr.mxu0 0.0
    %802 = vmatpush2.msra.mxu0 0.0
    %803 = vmatprep.subr.mxu0 0.0
    %804 = vmatpush2.msra.mxu0 0.0
    %805 = vmatprep.subr.mxu0 0.0
    %806 = vmatpush2.msra.mxu0 0.0
    %807 = vmatprep.subr.mxu0 0.0
    %808 = vmatpush2.msra.mxu0 0.0
    %809 = vmatprep.subr.mxu0 0.0
    %810 = vmatpush2.msra.mxu0 0.0
    %811 = vmatprep.subr.mxu0 0.0
    %812 = vmatpush2.msra.mxu0 0.0
    %813 = vmatprep.subr.mxu0 0.0
    %814 = vmatpush2.msra.mxu0 0.0
    %815 = vmatprep.subr.mxu0 0.0
    %816 = vmatpush2.msra.mxu0 0.0
    %817 = vmatprep.subr.mxu0 0.0
    %818 = vmatpush2.msra.mxu0 0.0
    %819 = vmatprep.mubr.f32.mxu0 0.0
    %820 = vmatmul.mubr.f32.gmra.mxu0 %v753
    %v821 = vpop.f32.mrf.mxu0
    %v822 = vadd.f32 0.0, %v821
    %v823 = vpop.f32.mrf.mxu0
    %824 = vdwg.mxu0
    %825 = vrot.lane.b32.xlu0 %v655, 112
    %v826 = vpop.permute.xlu0 %825
    %827 = vrot.lane.b32.xlu0 %v655, 80
    %v828 = vpop.permute.xlu0 %827
    %v829 = vsel %vm661, %v826, 0
    %v831 = vsel %vm661, %v828, 0
    %833 = vmatprep.subr.mxu0 0.0
    %834 = vmatpush1.xpose.msra.mxu0 0.0
    %835 = vmatprep.subr.mxu0 0.0
    %836 = vmatpush1.xpose.msra.mxu0 0.0
    %837 = vmatprep.subr.mxu0 0.0
    %838 = vmatpush1.xpose.msra.mxu0 0.0
    %839 = vmatprep.subr.mxu0 0.0
    %840 = vmatpush1.xpose.msra.mxu0 0.0
    %841 = vmatprep.subr.mxu0 0.0
    %842 = vmatpush1.xpose.msra.mxu0 0.0
    %843 = vmatprep.subr.mxu0 0.0
    %844 = vmatpush1.xpose.msra.mxu0 0.0
    %845 = vmatprep.subr.mxu0 0.0
    %846 = vmatpush1.xpose.msra.mxu0 0.0
    %847 = vmatprep.subr.mxu0 0.0
    %848 = vmatpush1.xpose.msra.mxu0 0.0
    %849 = vmatprep.subr.mxu0 0.0
    %850 = vmatpush1.xpose.msra.mxu0 0.0
    %851 = vmatprep.subr.mxu0 0.0
    %852 = vmatpush1.xpose.msra.mxu0 0.0
    %853 = vmatprep.subr.mxu0 0.0
    %854 = vmatpush1.xpose.msra.mxu0 0.0
    %855 = vmatprep.subr.mxu0 0.0
    %856 = vmatpush1.xpose.msra.mxu0 0.0
    %857 = vmatprep.subr.mxu0 0.0
    %858 = vmatpush1.xpose.msra.mxu0 0.0
    %859 = vmatprep.subr.mxu0 0.0
    %860 = vmatpush1.xpose.msra.mxu0 0.0
    %861 = vmatprep.subr.mxu0 0.0
    %862 = vmatpush1.xpose.msra.mxu0 0.0
    %863 = vmatprep.subr.mxu0 0.0
    %864 = vmatpush1.xpose.msra.mxu0 %v831
    %865 = vmatprep.subr.mxu0 0.0
    %866 = vmatpush2.xpose.msra.mxu0 0.0
    %867 = vmatprep.subr.mxu0 0.0
    %868 = vmatpush2.xpose.msra.mxu0 0.0
    %869 = vmatprep.subr.mxu0 0.0
    %870 = vmatpush2.xpose.msra.mxu0 0.0
    %871 = vmatprep.subr.mxu0 0.0
    %872 = vmatpush2.xpose.msra.mxu0 0.0
    %873 = vmatprep.subr.mxu0 0.0
    %874 = vmatpush2.xpose.msra.mxu0 0.0
    %875 = vmatprep.subr.mxu0 0.0
    %876 = vmatpush2.xpose.msra.mxu0 0.0
    %877 = vmatprep.subr.mxu0 0.0
    %878 = vmatpush2.xpose.msra.mxu0 0.0
    %879 = vmatprep.subr.mxu0 0.0
    %880 = vmatpush2.xpose.msra.mxu0 0.0
    %881 = vmatprep.subr.mxu0 0.0
    %882 = vmatpush2.xpose.msra.mxu0 0.0
    %883 = vmatprep.subr.mxu0 0.0
    %884 = vmatpush2.xpose.msra.mxu0 0.0
    %885 = vmatprep.subr.mxu0 0.0
    %886 = vmatpush2.xpose.msra.mxu0 0.0
    %887 = vmatprep.subr.mxu0 0.0
    %888 = vmatpush2.xpose.msra.mxu0 0.0
    %889 = vmatprep.subr.mxu0 0.0
    %890 = vmatpush2.xpose.msra.mxu0 0.0
    %891 = vmatprep.subr.mxu0 0.0
    %892 = vmatpush2.xpose.msra.mxu0 0.0
    %893 = vmatprep.subr.mxu0 0.0
    %894 = vmatpush2.xpose.msra.mxu0 0.0
    %895 = vmatprep.subr.mxu0 0.0
    %896 = vmatpush2.xpose.msra.mxu0 0.0
    %897 = vmatprep.mubr.f32.mxu0 0.0
    %898 = vmatmul.mubr.f32.gmra.mxu0 %v829
    %v899 = vpop.f32.mrf.mxu0
    %v900 = vadd.f32 0.0, %v899
    %v901 = vpop.f32.mrf.mxu0
    %902 = vdwg.mxu0
    %v903 = vmul.f32 %v900, 0.25
    %v904 = vsel %vm737, %v903, -inf
    %905 = vmax.xlane.f32.xlu0 %v904
    %v906 = vpop.xlane.xlu0 %905
    %v907 = vsub.f32 %v903, %v906
    %v908 = vmul.f32 %v907, 1.442695
    %v909 = vpow.pop %v908
    %v910 = vsel %vm737, %v909, 0.0
    %911 = vadd.xlane.f32.xlu0 %v910
    %v912 = vpop.xlane.xlu0 %911
    %v913 = vrcp.pop %v912
    %v914 = vmul.f32 %v909, %v913
    %915 = vrot.lane.b32.xlu0 %v655, 48
    %v916 = vpop.permute.xlu0 %915
    %v919 = vsel %vm737, %v914, 0
    %921 = vmatprep.subr.mxu0 0.0
    %922 = vmatpush1.msra.mxu0 0.0
    %923 = vmatprep.subr.mxu0 0.0
    %924 = vmatpush1.msra.mxu0 0.0
    %925 = vmatprep.subr.mxu0 0.0
    %926 = vmatpush1.msra.mxu0 0.0
    %927 = vmatprep.subr.mxu0 0.0
    %928 = vmatpush1.msra.mxu0 0.0
    %929 = vmatprep.subr.mxu0 0.0
    %930 = vmatpush1.msra.mxu0 0.0
    %931 = vmatprep.subr.mxu0 0.0
    %932 = vmatpush1.msra.mxu0 0.0
    %933 = vmatprep.subr.mxu0 0.0
    %934 = vmatpush1.msra.mxu0 0.0
    %935 = vmatprep.subr.mxu0 0.0
    %936 = vmatpush1.msra.mxu0 0.0
    %937 = vmatprep.subr.mxu0 0.0
    %938 = vmatpush1.msra.mxu0 0.0
    %939 = vmatprep.subr.mxu0 0.0
    %940 = vmatpush1.msra.mxu0 0.0
    %941 = vmatprep.subr.mxu0 0.0
    %942 = vmatpush1.msra.mxu0 0.0
    %943 = vmatprep.subr.mxu0 0.0
    %944 = vmatpush1.msra.mxu0 0.0
    %945 = vmatprep.subr.mxu0 0.0
    %946 = vmatpush1.msra.mxu0 0.0
    %947 = vmatprep.subr.mxu0 0.0
    %948 = vmatpush1.msra.mxu0 0.0
    %949 = vmatprep.subr.mxu0 0.0
    %950 = vmatpush1.msra.mxu0 0.0
    %951 = vmatprep.subr.mxu0 0.0
    %952 = vmatpush1.msra.mxu0 %v916
    %953 = vmatprep.subr.mxu0 0.0
    %954 = vmatpush2.msra.mxu0 0.0
    %955 = vmatprep.subr.mxu0 0.0
    %956 = vmatpush2.msra.mxu0 0.0
    %957 = vmatprep.subr.mxu0 0.0
    %958 = vmatpush2.msra.mxu0 0.0
    %959 = vmatprep.subr.mxu0 0.0
    %960 = vmatpush2.msra.mxu0 0.0
    %961 = vmatprep.subr.mxu0 0.0
    %962 = vmatpush2.msra.mxu0 0.0
    %963 = vmatprep.subr.mxu0 0.0
    %964 = vmatpush2.msra.mxu0 0.0
    %965 = vmatprep.subr.mxu0 0.0
    %966 = vmatpush2.msra.mxu0 0.0
    %967 = vmatprep.subr.mxu0 0.0
    %968 = vmatpush2.msra.mxu0 0.0
    %969 = vmatprep.subr.mxu0 0.0
    %970 = vmatpush2.msra.mxu0 0.0
    %971 = vmatprep.subr.mxu0 0.0
    %972 = vmatpush2.msra.mxu0 0.0
    %973 = vmatprep.subr.mxu0 0.0
    %974 = vmatpush2.msra.mxu0 0.0
    %975 = vmatprep.subr.mxu0 0.0
    %976 = vmatpush2.msra.mxu0 0.0
    %977 = vmatprep.subr.mxu0 0.0
    %978 = vmatpush2.msra.mxu0 0.0
    %979 = vmatprep.subr.mxu0 0.0
    %980 = vmatpush2.msra.mxu0 0.0
    %981 = vmatprep.subr.mxu0 0.0
    %982 = vmatpush2.msra.mxu0 0.0
    %983 = vmatprep.subr.mxu0 0.0
    %984 = vmatpush2.msra.mxu0 0.0
    %985 = vmatprep.mubr.f32.mxu0 0.0
    %986 = vmatmul.mubr.f32.gmra.mxu0 %v919
    %v987 = vpop.f32.mrf.mxu0
    %v988 = vadd.f32 0.0, %v987
    %v989 = vpop.f32.mrf.mxu0
    %990 = vdwg.mxu0
    %992 = vrot.lane.b32.xlu0 %v988, 16
    %v993 = vpop.permute.xlu0 %992
    %v995 = vsel %vm661, %v822, %v993
    %v996 = vld [vmem:[%s7] sm:$0xff]
    %v997 = vld [vmem:[%s7 + $0x8] sm:$0xff]
    %v998 = vld [vmem:[%s7 + $0x10] sm:$0xff]
    %v999 = vld [vmem:[%s7 + $0x18] sm:$0xff]
    %v1000 = vld [vmem:[%s8] sm:$0x1]
    %v1002 = vlaneseq
    %v1003 = vshrl.u32 %v1002, 7
    %v1004 = vsub.s32 0, %v1003
    %v1005 = vrot.slane %v1000, %v1004
    %v1008 = vsel %vm545, %v995, 0
    %1010 = vmatprep.subr.mxu0 0.0
    %1011 = vmatpush1.msra.mxu0 0.0
    %1012 = vmatprep.subr.mxu0 0.0
    %1013 = vmatpush1.msra.mxu0 0.0
    %1014 = vmatprep.subr.mxu0 0.0
    %1015 = vmatpush1.msra.mxu0 0.0
    %1016 = vmatprep.subr.mxu0 0.0
    %1017 = vmatpush1.msra.mxu0 0.0
    %1018 = vmatprep.subr.mxu0 0.0
    %1019 = vmatpush1.msra.mxu0 0.0
    %1020 = vmatprep.subr.mxu0 0.0
    %1021 = vmatpush1.msra.mxu0 0.0
    %1022 = vmatprep.subr.mxu0 0.0
    %1023 = vmatpush1.msra.mxu0 0.0
    %1024 = vmatprep.subr.mxu0 0.0
    %1025 = vmatpush1.msra.mxu0 0.0
    %1026 = vmatprep.subr.mxu0 0.0
    %1027 = vmatpush1.msra.mxu0 0.0
    %1028 = vmatprep.subr.mxu0 0.0
    %1029 = vmatpush1.msra.mxu0 0.0
    %1030 = vmatprep.subr.mxu0 0.0
    %1031 = vmatpush1.msra.mxu0 0.0
    %1032 = vmatprep.subr.mxu0 0.0
    %1033 = vmatpush1.msra.mxu0 0.0
    %1034 = vmatprep.subr.mxu0 0.0
    %1035 = vmatpush1.msra.mxu0 %v999
    %1036 = vmatprep.subr.mxu0 0.0
    %1037 = vmatpush1.msra.mxu0 %v998
    %1038 = vmatprep.subr.mxu0 0.0
    %1039 = vmatpush1.msra.mxu0 %v997
    %1040 = vmatprep.subr.mxu0 0.0
    %1041 = vmatpush1.msra.mxu0 %v996
    %1042 = vmatprep.subr.mxu0 0.0
    %1043 = vmatpush2.msra.mxu0 0.0
    %1044 = vmatprep.subr.mxu0 0.0
    %1045 = vmatpush2.msra.mxu0 0.0
    %1046 = vmatprep.subr.mxu0 0.0
    %1047 = vmatpush2.msra.mxu0 0.0
    %1048 = vmatprep.subr.mxu0 0.0
    %1049 = vmatpush2.msra.mxu0 0.0
    %1050 = vmatprep.subr.mxu0 0.0
    %1051 = vmatpush2.msra.mxu0 0.0
    %1052 = vmatprep.subr.mxu0 0.0
    %1053 = vmatpush2.msra.mxu0 0.0
    %1054 = vmatprep.subr.mxu0 0.0
    %1055 = vmatpush2.msra.mxu0 0.0
    %1056 = vmatprep.subr.mxu0 0.0
    %1057 = vmatpush2.msra.mxu0 0.0
    %1058 = vmatprep.subr.mxu0 0.0
    %1059 = vmatpush2.msra.mxu0 0.0
    %1060 = vmatprep.subr.mxu0 0.0
    %1061 = vmatpush2.msra.mxu0 0.0
    %1062 = vmatprep.subr.mxu0 0.0
    %1063 = vmatpush2.msra.mxu0 0.0
    %1064 = vmatprep.subr.mxu0 0.0
    %1065 = vmatpush2.msra.mxu0 0.0
    %1066 = vmatprep.subr.mxu0 0.0
    %1067 = vmatpush2.msra.mxu0 0.0
    %1068 = vmatprep.subr.mxu0 0.0
    %1069 = vmatpush2.msra.mxu0 0.0
    %1070 = vmatprep.subr.mxu0 0.0
    %1071 = vmatpush2.msra.mxu0 0.0
    %1072 = vmatprep.subr.mxu0 0.0
    %1073 = vmatpush2.msra.mxu0 0.0
    %1074 = vmatprep.mubr.f32.mxu0 0.0
    %1075 = vmatmul.mubr.f32.gmra.mxu0 %v1008
    %v1076 = vpop.f32.mrf.mxu0
    %v1077 = vadd.f32 %v1005, %v1076
    %v1078 = vpop.f32.mrf.mxu0
    %1079 = vdwg.mxu0
    %v1080 = vadd.f32 %v1077, %v573
    %v1081 = vld [vmem:[%s9] sm:$0x1]
    %v1082 = vld [vmem:[%s10] sm:$0x1]
    %v1083 = vsel %vm545, %v1080, 0.0
    %1084 = vadd.xlane.f32.xlu0 %v1083
    %v1085 = vpop.xlane.xlu0 %1084
    %v1086 = vmul.f32 %v1085, %v549
    %v1087 = vsub.f32 %v1080, %v1086
    %v1088 = vmul.f32 %v1087, %v1087
    %v1089 = vsel %vm545, %v1088, 0.0
    %1090 = vadd.xlane.f32.xlu0 %v1089
    %v1091 = vpop.xlane.xlu0 %1090
    %v1092 = vmul.f32 %v1091, %v549
    %v1093 = vadd.f32 %v1092, 1e-05
    %v1094 = vrsqrt.pop %v1093
    %v1095 = vmul.f32 %v1087, %v1094
    %v1097 = vlaneseq
    %v1098 = vshrl.u32 %v1097, 7
    %v1099 = vsub.s32 0, %v1098
    %v1100 = vrot.slane %v1081, %v1099
    %v1102 = vmul.f32 %v1095, %v1100
    %v1104 = vlaneseq
    %v1105 = vshrl.u32 %v1104, 7
    %v1106 = vsub.s32 0, %v1105
    %v1107 = vrot.slane %v1082, %v1106
    %v1109 = vadd.f32 %v1102, %v1107
    %v1110 = vld [vmem:[%s11] sm:$0xff]
    %v1111 = vld [vmem:[%s11 + $0x8] sm:$0xff]
    %v1112 = vld [vmem:[%s11 + $0x10] sm:$0xff]
    %v1113 = vld [vmem:[%s11 + $0x18] sm:$0xff]
    %v1114 = vld [vmem:[%s12] sm:$0x1]
    %v1116 = vlaneseq
    %v1117 = vshrl.u32 %v1116, 7
    %v1118 = vsub.s32 0, %v1117
    %v1119 = vrot.slane %v1114, %v1118
    %v1122 = vsel %vm545, %v1109, 0
    %1124 = vmatprep.subr.mxu0 0.0
    %1125 = vmatpush1.msra.mxu0 0.0
    %1126 = vmatprep.subr.mxu0 0.0
    %1127 = vmatpush1.msra.mxu0 0.0
    %1128 = vmatprep.subr.mxu0 0.0
    %1129 = vmatpush1.msra.mxu0 0.0
    %1130 = vmatprep.subr.mxu0 0.0
    %1131 = vmatpush1.msra.mxu0 0.0
    %1132 = vmatprep.subr.mxu0 0.0
    %1133 = vmatpush1.msra.mxu0 0.0
    %1134 = vmatprep.subr.mxu0 0.0
    %1135 = vmatpush1.msra.mxu0 0.0
    %1136 = vmatprep.subr.mxu0 0.0
    %1137 = vmatpush1.msra.mxu0 0.0
    %1138 = vmatprep.subr.mxu0 0.0
    %1139 = vmatpush1.msra.mxu0 0.0
    %1140 = vmatprep.subr.mxu0 0.0
    %1141 = vmatpush1.msra.mxu0 0.0
    %1142 = vmatprep.subr.mxu0 0.0
    %1143 = vmatpush1.msra.mxu0 0.0
    %1144 = vmatprep.subr.mxu0 0.0
    %1145 = vmatpush1.msra.mxu0 0.0
    %1146 = vmatprep.subr.mxu0 0.0
    %1147 = vmatpush1.msra.mxu0 0.0
    %1148 = vmatprep.subr.mxu0 0.0
    %1149 = vmatpush1.msra.mxu0 %v1113
    %1150 = vmatprep.subr.mxu0 0.0
    %1151 = vmatpush1.msra.mxu0 %v1112
    %1152 = vmatprep.subr.mxu0 0.0
    %1153 = vmatpush1.msra.mxu0 %v1111
    %1154 = vmatprep.subr.mxu0 0.0
    %1155 = vmatpush1.msra.mxu0 %v1110
    %1156 = vmatprep.subr.mxu0 0.0
    %1157 = vmatpush2.msra.mxu0 0.0
    %1158 = vmatprep.subr.mxu0 0.0
    %1159 = vmatpush2.msra.mxu0 0.0
    %1160 = vmatprep.subr.mxu0 0.0
    %1161 = vmatpush2.msra.mxu0 0.0
    %1162 = vmatprep.subr.mxu0 0.0
    %1163 = vmatpush2.msra.mxu0 0.0
    %1164 = vmatprep.subr.mxu0 0.0
    %1165 = vmatpush2.msra.mxu0 0.0
    %1166 = vmatprep.subr.mxu0 0.0
    %1167 = vmatpush2.msra.mxu0 0.0
    %1168 = vmatprep.subr.mxu0 0.0
    %1169 = vmatpush2.msra.mxu0 0.0
    %1170 = vmatprep.subr.mxu0 0.0
    %1171 = vmatpush2.msra.mxu0 0.0
    %1172 = vmatprep.subr.mxu0 0.0
    %1173 = vmatpush2.msra.mxu0 0.0
    %1174 = vmatprep.subr.mxu0 0.0
    %1175 = vmatpush2.msra.mxu0 0.0
    %1176 = vmatprep.subr.mxu0 0.0
    %1177 = vmatpush2.msra.mxu0 0.0
    %1178 = vmatprep.subr.mxu0 0.0
    %1179 = vmatpush2.msra.mxu0 0.0
    %1180 = vmatprep.subr.mxu0 0.0
    %1181 = vmatpush2.msra.mxu0 0.0
    %1182 = vmatprep.subr.mxu0 0.0
    %1183 = vmatpush2.msra.mxu0 0.0
    %1184 = vmatprep.subr.mxu0 0.0
    %1185 = vmatpush2.msra.mxu0 0.0
    %1186 = vmatprep.subr.mxu0 0.0
    %1187 = vmatpush2.msra.mxu0 0.0
    %1188 = vmatprep.mubr.f32.mxu0 0.0
    %1189 = vmatmul.mubr.f32.gmra.mxu0 %v1122
    %v1190 = vpop.f32.mrf.mxu0
    %v1191 = vadd.f32 %v1119, %v1190
    %v1192 = vpop.f32.mrf.mxu0
    %1193 = vdwg.mxu0
    %v1194 = vmul.f32 %v1191, 0.5
    %v1195 = vmul.f32 %v1191, 0.044715
    %v1196 = vmul.f32 %v1195, %v1191
    %v1197 = vmul.f32 %v1196, %v1191
    %v1198 = vadd.f32 %v1191, %v1197
    %v1199 = vmul.f32 %v1198, 0.7978846
    %v1200 = vtanh.pop %v1199
    %v1201 = vadd.f32 %v1200, 1.0
    %v1202 = vmul.f32 %v1194, %v1201
    %v1203 = vld [vmem:[%s13] sm:$0xff]
    %v1204 = vld [vmem:[%s13 + $0x8] sm:$0xff]
    %v1205 = vld [vmem:[%s13 + $0x10] sm:$0xff]
    %v1206 = vld [vmem:[%s13 + $0x18] sm:$0xff]
    %v1207 = vld [vmem:[%s13 + $0x20] sm:$0xff]
    %v1208 = vld [vmem:[%s13 + $0x28] sm:$0xff]
    %v1209 = vld [vmem:[%s13 + $0x30] sm:$0xff]
    %v1210 = vld [vmem:[%s13 + $0x38] sm:$0xff]
    %v1211 = vld [vmem:[%s14] sm:$0x1]
    %v1213 = vlaneseq
    %v1214 = vshrl.u32 %v1213, 7
    %v1215 = vsub.s32 0, %v1214
    %v1216 = vrot.slane %v1211, %v1215
    %vm1218 = vcmask 523264
    %v1220 = vsel %vm1218, %v1202, 0
    %1222 = vmatprep.subr.mxu0 0.0
    %1223 = vmatpush1.msra.mxu0 0.0
    %1224 = vmatprep.subr.mxu0 0.0
    %1225 = vmatpush1.msra.mxu0 0.0
    %1226 = vmatprep.subr.mxu0 0.0
    %1227 = vmatpush1.msra.mxu0 0.0
    %1228 = vmatprep.subr.mxu0 0.0
    %1229 = vmatpush1.msra.mxu0 0.0
    %1230 = vmatprep.subr.mxu0 0.0
    %1231 = vmatpush1.msra.mxu0 0.0
    %1232 = vmatprep.subr.mxu0 0.0
    %1233 = vmatpush1.msra.mxu0 0.0
    %1234 = vmatprep.subr.mxu0 0.0
    %1235 = vmatpush1.msra.mxu0 0.0
    %1236 = vmatprep.subr.mxu0 0.0
    %1237 = vmatpush1.msra.mxu0 0.0
    %1238 = vmatprep.subr.mxu0 0.0
    %1239 = vmatpush1.msra.mxu0 %v1210
    %1240 = vmatprep.subr.mxu0 0.0
    %1241 = vmatpush1.msra.mxu0 %v1209
    %1242 = vmatprep.subr.mxu0 0.0
    %1243 = vmatpush1.msra.mxu0 %v1208
    %1244 = vmatprep.subr.mxu0 0.0
    %1245 = vmatpush1.msra.mxu0 %v1207
    %1246 = vmatprep.subr.mxu0 0.0
    %1247 = vmatpush1.msra.mxu0 %v1206
    %1248 = vmatprep.subr.mxu0 0.0
    %1249 = vmatpush1.msra.mxu0 %v1205
    %1250 = vmatprep.subr.mxu0 0.0
    %1251 = vmatpush1.msra.mxu0 %v1204
    %1252 = vmatprep.subr.mxu0 0.0
    %1253 = vmatpush1.msra.mxu0 %v1203
    %1254 = vmatprep.subr.mxu0 0.0
    %1255 = vmatpush2.msra.mxu0 0.0
    %1256 = vmatprep.subr.mxu0 0.0
    %1257 = vmatpush2.msra.mxu0 0.0
    %1258 = vmatprep.subr.mxu0 0.0
    %1259 = vmatpush2.msra.mxu0 0.0
    %1260 = vmatprep.subr.mxu0 0.0
    %1261 = vmatpush2.msra.mxu0 0.0
    %1262 = vmatprep.subr.mxu0 0.0
    %1263 = vmatpush2.msra.mxu0 0.0
    %1264 = vmatprep.subr.mxu0 0.0
    %1265 = vmatpush2.msra.mxu0 0.0
    %1266 = vmatprep.subr.mxu0 0.0
    %1267 = vmatpush2.msra.mxu0 0.0
    %1268 = vmatprep.subr.mxu0 0.0
    %1269 = vmatpush2.msra.mxu0 0.0
    %1270 = vmatprep.subr.mxu0 0.0
    %1271 = vmatpush2.msra.mxu0 0.0
    %1272 = vmatprep.subr.mxu0 0.0
    %1273 = vmatpush2.msra.mxu0 0.0
    %1274 = vmatprep.subr.mxu0 0.0
    %1275 = vmatpush2.msra.mxu0 0.0
    %1276 = vmatprep.subr.mxu0 0.0
    %1277 = vmatpush2.msra.mxu0 0.0
    %1278 = vmatprep.subr.mxu0 0.0
    %1279 = vmatpush2.msra.mxu0 0.0
    %1280 = vmatprep.subr.mxu0 0.0
    %1281 = vmatpush2.msra.mxu0 0.0
    %1282 = vmatprep.subr.mxu0 0.0
    %1283 = vmatpush2.msra.mxu0 0.0
    %1284 = vmatprep.subr.mxu0 0.0
    %1285 = vmatpush2.msra.mxu0 0.0
    %1286 = vmatprep.mubr.f32.mxu0 0.0
    %1287 = vmatmul.mubr.f32.gmra.mxu0 %v1220
    %v1288 = vpop.f32.mrf.mxu0
    %v1289 = vadd.f32 %v1216, %v1288
    %v1290 = vpop.f32.mrf.mxu0
    %1291 = vdwg.mxu0
    %v1292 = vadd.f32 %v1289, %v1109
    %v1293 = vld [vmem:[%s15] sm:$0x1]
    %v1294 = vld [vmem:[%s16] sm:$0x1]
    %v1295 = vsel %vm545, %v1292, 0.0
    %1296 = vadd.xlane.f32.xlu0 %v1295
    %v1297 = vpop.xlane.xlu0 %1296
    %v1298 = vmul.f32 %v1297, %v549
    %v1299 = vsub.f32 %v1292, %v1298
    %v1300 = vmul.f32 %v1299, %v1299
    %v1301 = vsel %vm545, %v1300, 0.0
    %1302 = vadd.xlane.f32.xlu0 %v1301
    %v1303 = vpop.xlane.xlu0 %1302
    %v1304 = vmul.f32 %v1303, %v549
    %v1305 = vadd.f32 %v1304, 1e-05
    %v1306 = vrsqrt.pop %v1305
    %v1307 = vmul.f32 %v1299, %v1306
    %v1309 = vlaneseq
    %v1310 = vshrl.u32 %v1309, 7
    %v1311 = vsub.s32 0, %v1310
    %v1312 = vrot.slane %v1293, %v1311
    %v1314 = vmul.f32 %v1307, %v1312
    %v1316 = vlaneseq
    %v1317 = vshrl.u32 %v1316, 7
    %v1318 = vsub.s32 0, %v1317
    %v1319 = vrot.slane %v1294, %v1318
    %v1321 = vadd.f32 %v1314, %v1319
    %s1322 = scalar_lea.vmem %s5, 32
    %v1323 = vld [vmem:[%s1322] sm:$0xff]
    %v1324 = vld [vmem:[%s1322 + $0x8] sm:$0xff]
    %v1325 = vld [vmem:[%s1322 + $0x10] sm:$0xff]
    %v1326 = vld [vmem:[%s1322 + $0x18] sm:$0xff]
    %s1327 = scalar_lea.vmem %s6, 1
    %v1328 = vld [vmem:[%s1327] sm:$0x1]
    %v1330 = vlaneseq
    %v1331 = vshrl.u32 %v1330, 7
    %v1332 = vsub.s32 0, %v1331
    %v1333 = vrot.slane %v1328, %v1332
    %v1336 = vsel %vm545, %v1321, 0
    %1338 = vmatprep.subr.mxu0 0.0
    %1339 = vmatpush1.msra.mxu0 0.0
    %1340 = vmatprep.subr.mxu0 0.0
    %1341 = vmatpush1.msra.mxu0 0.0
    %1342 = vmatprep.subr.mxu0 0.0
    %1343 = vmatpush1.msra.mxu0 0.0
    %1344 = vmatprep.subr.mxu0 0.0
    %1345 = vmatpush1.msra.mxu0 0.0
    %1346 = vmatprep.subr.mxu0 0.0
    %1347 = vmatpush1.msra.mxu0 0.0
    %1348 = vmatprep.subr.mxu0 0.0
    %1349 = vmatpush1.msra.mxu0 0.0
    %1350 = vmatprep.subr.mxu0 0.0
    %1351 = vmatpush1.msra.mxu0 0.0
    %1352 = vmatprep.subr.mxu0 0.0
    %1353 = vmatpush1.msra.mxu0 0.0
    %1354 = vmatprep.subr.mxu0 0.0
    %1355 = vmatpush1.msra.mxu0 0.0
    %1356 = vmatprep.subr.mxu0 0.0
    %1357 = vmatpush1.msra.mxu0 0.0
    %1358 = vmatprep.subr.mxu0 0.0
    %1359 = vmatpush1.msra.mxu0 0.0
    %1360 = vmatprep.subr.mxu0 0.0
    %1361 = vmatpush1.msra.mxu0 0.0
    %1362 = vmatprep.subr.mxu0 0.0
    %1363 = vmatpush1.msra.mxu0 %v1326
    %1364 = vmatprep.subr.mxu0 0.0
    %1365 = vmatpush1.msra.mxu0 %v1325
    %1366 = vmatprep.subr.mxu0 0.0
    %1367 = vmatpush1.msra.mxu0 %v1324
    %1368 = vmatprep.subr.mxu0 0.0
    %1369 = vmatpush1.msra.mxu0 %v1323
    %1370 = vmatprep.subr.mxu0 0.0
    %1371 = vmatpush2.msra.mxu0 0.0
    %1372 = vmatprep.subr.mxu0 0.0
    %1373 = vmatpush2.msra.mxu0 0.0
    %1374 = vmatprep.subr.mxu0 0.0
    %1375 = vmatpush2.msra.mxu0 0.0
    %1376 = vmatprep.subr.mxu0 0.0
    %1377 = vmatpush2.msra.mxu0 0.0
    %1378 = vmatprep.subr.mxu0 0.0
    %1379 = vmatpush2.msra.mxu0 0.0
    %1380 = vmatprep.subr.mxu0 0.0
    %1381 = vmatpush2.msra.mxu0 0.0
    %1382 = vmatprep.subr.mxu0 0.0
    %1383 = vmatpush2.msra.mxu0 0.0
    %1384 = vmatprep.subr.mxu0 0.0
    %1385 = vmatpush2.msra.mxu0 0.0
    %1386 = vmatprep.subr.mxu0 0.0
    %1387 = vmatpush2.msra.mxu0 0.0
    %1388 = vmatprep.subr.mxu0 0.0
    %1389 = vmatpush2.msra.mxu0 0.0
    %1390 = vmatprep.subr.mxu0 0.0
    %1391 = vmatpush2.msra.mxu0 0.0
    %1392 = vmatprep.subr.mxu0 0.0
    %1393 = vmatpush2.msra.mxu0 0.0
    %1394 = vmatprep.subr.mxu0 0.0
    %1395 = vmatpush2.msra.mxu0 0.0
    %1396 = vmatprep.subr.mxu0 0.0
    %1397 = vmatpush2.msra.mxu0 0.0
    %1398 = vmatprep.subr.mxu0 0.0
    %1399 = vmatpush2.msra.mxu0 0.0
    %1400 = vmatprep.subr.mxu0 0.0
    %1401 = vmatpush2.msra.mxu0 0.0
    %1402 = vmatprep.mubr.f32.mxu0 0.0
    %1403 = vmatmul.mubr.f32.gmra.mxu0 %v1336
    %v1404 = vpop.f32.mrf.mxu0
    %v1405 = vadd.f32 %v1333, %v1404
    %v1406 = vpop.f32.mrf.mxu0
    %1407 = vdwg.mxu0
    %1409 = vrot.lane.b32.xlu0 %v1405, 96
    %v1410 = vpop.permute.xlu0 %1409
    %v1411 = vsel %vm661, %v1405, 0
    %v1413 = vsel %vm661, %v1410, 0
    %1415 = vmatprep.subr.mxu0 0.0
    %1416 = vmatpush1.xpose.msra.mxu0 0.0
    %1417 = vmatprep.subr.mxu0 0.0
    %1418 = vmatpush1.xpose.msra.mxu0 0.0
    %1419 = vmatprep.subr.mxu0 0.0
    %1420 = vmatpush1.xpose.msra.mxu0 0.0
    %1421 = vmatprep.subr.mxu0 0.0
    %1422 = vmatpush1.xpose.msra.mxu0 0.0
    %1423 = vmatprep.subr.mxu0 0.0
    %1424 = vmatpush1.xpose.msra.mxu0 0.0
    %1425 = vmatprep.subr.mxu0 0.0
    %1426 = vmatpush1.xpose.msra.mxu0 0.0
    %1427 = vmatprep.subr.mxu0 0.0
    %1428 = vmatpush1.xpose.msra.mxu0 0.0
    %1429 = vmatprep.subr.mxu0 0.0
    %1430 = vmatpush1.xpose.msra.mxu0 0.0
    %1431 = vmatprep.subr.mxu0 0.0
    %1432 = vmatpush1.xpose.msra.mxu0 0.0
    %1433 = vmatprep.subr.mxu0 0.0
    %1434 = vmatpush1.xpose.msra.mxu0 0.0
    %1435 = vmatprep.subr.mxu0 0.0
    %1436 = vmatpush1.xpose.msra.mxu0 0.0
    %1437 = vmatprep.subr.mxu0 0.0
    %1438 = vmatpush1.xpose.msra.mxu0 0.0
    %1439 = vmatprep.subr.mxu0 0.0
    %1440 = vmatpush1.xpose.msra.mxu0 0.0
    %1441 = vmatprep.subr.mxu0 0.0
    %1442 = vmatpush1.xpose.msra.mxu0 0.0
    %1443 = vmatprep.subr.mxu0 0.0
    %1444 = vmatpush1.xpose.msra.mxu0 0.0
    %1445 = vmatprep.subr.mxu0 0.0
    %1446 = vmatpush1.xpose.msra.mxu0 %v1413
    %1447 = vmatprep.subr.mxu0 0.0
    %1448 = vmatpush2.xpose.msra.mxu0 0.0
    %1449 = vmatprep.subr.mxu0 0.0
    %1450 = vmatpush2.xpose.msra.mxu0 0.0
    %1451 = vmatprep.subr.mxu0 0.0
    %1452 = vmatpush2.xpose.msra.mxu0 0.0
    %1453 = vmatprep.subr.mxu0 0.0
    %1454 = vmatpush2.xpose.msra.mxu0 0.0
    %1455 = vmatprep.subr.mxu0 0.0
    %1456 = vmatpush2.xpose.msra.mxu0 0.0
    %1457 = vmatprep.subr.mxu0 0.0
    %1458 = vmatpush2.xpose.msra.mxu0 0.0
    %1459 = vmatprep.subr.mxu0 0.0
    %1460 = vmatpush2.xpose.msra.mxu0 0.0
    %1461 = vmatprep.subr.mxu0 0.0
    %1462 = vmatpush2.xpose.msra.mxu0 0.0
    %1463 = vmatprep.subr.mxu0 0.0
    %1464 = vmatpush2.xpose.msra.mxu0 0.0
    %1465 = vmatprep.subr.mxu0 0.0
    %1466 = vmatpush2.xpose.msra.mxu0 0.0
    %1467 = vmatprep.subr.mxu0 0.0
    %1468 = vmatpush2.xpose.msra.mxu0 0.0
    %1469 = vmatprep.subr.mxu0 0.0
    %1470 = vmatpush2.xpose.msra.mxu0 0.0
    %1471 = vmatprep.subr.mxu0 0.0
    %1472 = vmatpush2.xpose.msra.mxu0 0.0
    %1473 = vmatprep.subr.mxu0 0.0
    %1474 = vmatpush2.xpose.msra.mxu0 0.0
    %1475 = vmatprep.subr.mxu0 0.0
    %1476 = vmatpush2.xpose.msra.mxu0 0.0
    %1477 = vmatprep.subr.mxu0 0.0
    %1478 = vmatpush2.xpose.msra.mxu0 0.0
    %1479 = vmatprep.mubr.f32.mxu0 0.0
    %1480 = vmatmul.mubr.f32.gmra.mxu0 %v1411
    %v1481 = vpop.f32.mrf.mxu0
    %v1482 = vadd.f32 0.0, %v1481
    %v1483 = vpop.f32.mrf.mxu0
    %1484 = vdwg.mxu0
    %v1485 = vmul.f32 %v1482, 0.25
    %v1486 = vsel %vm737, %v1485, -inf
    %1487 = vmax.xlane.f32.xlu0 %v1486
    %v1488 = vpop.xlane.xlu0 %1487
    %v1489 = vsub.f32 %v1485, %v1488
    %v1490 = vmul.f32 %v1489, 1.442695
    %v1491 = vpow.pop %v1490
    %v1492 = vsel %vm737, %v1491, 0.0
    %1493 = vadd.xlane.f32.xlu0 %v1492
    %v1494 = vpop.xlane.xlu0 %1493
    %v1495 = vrcp.pop %v1494
    %v1496 = vmul.f32 %v1491, %v1495
    %1497 = vrot.lane.b32.xlu0 %v1405, 64
    %v1498 = vpop.permute.xlu0 %1497
    %v1501 = vsel %vm737, %v1496, 0
    %1503 = vmatprep.subr.mxu0 0.0
    %1504 = vmatpush1.msra.mxu0 0.0
    %1505 = vmatprep.subr.mxu0 0.0
    %1506 = vmatpush1.msra.mxu0 0.0
    %1507 = vmatprep.subr.mxu0 0.0
    %1508 = vmatpush1.msra.mxu0 0.0
    %1509 = vmatprep.subr.mxu0 0.0
    %1510 = vmatpush1.msra.mxu0 0.0
    %1511 = vmatprep.subr.mxu0 0.0
    %1512 = vmatpush1.msra.mxu0 0.0
    %1513 = vmatprep.subr.mxu0 0.0
    %1514 = vmatpush1.msra.mxu0 0.0
    %1515 = vmatprep.subr.mxu0 0.0
    %1516 = vmatpush1.msra.mxu0 0.0
    %1517 = vmatprep.subr.mxu0 0.0
    %1518 = vmatpush1.msra.mxu0 0.0
    %1519 = vmatprep.subr.mxu0 0.0
    %1520 = vmatpush1.msra.mxu0 0.0
    %1521 = vmatprep.subr.mxu0 0.0
    %1522 = vmatpush1.msra.mxu0 0.0
    %1523 = vmatprep.subr.mxu0 0.0
    %1524 = vmatpush1.msra.mxu0 0.0
    %1525 = vmatprep.subr.mxu0 0.0
    %1526 = vmatpush1.msra.mxu0 0.0
    %1527 = vmatprep.subr.mxu0 0.0
    %1528 = vmatpush1.msra.mxu0 0.0
    %1529 = vmatprep.subr.mxu0 0.0
    %1530 = vmatpush1.msra.mxu0 0.0
    %1531 = vmatprep.subr.mxu0 0.0
    %1532 = vmatpush1.msra.mxu0 0.0
    %1533 = vmatprep.subr.mxu0 0.0
    %1534 = vmatpush1.msra.mxu0 %v1498
    %1535 = vmatprep.subr.mxu0 0.0
    %1536 = vmatpush2.msra.mxu0 0.0
    %1537 = vmatprep.subr.mxu0 0.0
    %1538 = vmatpush2.msra.mxu0 0.0
    %1539 = vmatprep.subr.mxu0 0.0
    %1540 = vmatpush2.msra.mxu0 0.0
    %1541 = vmatprep.subr.mxu0 0.0
    %1542 = vmatpush2.msra.mxu0 0.0
    %1543 = vmatprep.subr.mxu0 0.0
    %1544 = vmatpush2.msra.mxu0 0.0
    %1545 = vmatprep.subr.mxu0 0.0
    %1546 = vmatpush2.msra.mxu0 0.0
    %1547 = vmatprep.subr.mxu0 0.0
    %1548 = vmatpush2.msra.mxu0 0.0
    %1549 = vmatprep.subr.mxu0 0.0
    %1550 = vmatpush2.msra.mxu0 0.0
    %1551 = vmatprep.subr.mxu0 0.0
    %1552 = vmatpush2.msra.mxu0 0.0
    %1553 = vmatprep.subr.mxu0 0.0
    %1554 = vmatpush2.msra.mxu0 0.0
    %1555 = vmatprep.subr.mxu0 0.0
    %1556 = vmatpush2.msra.mxu0 0.0
    %1557 = vmatprep.subr.mxu0 0.0
    %1558 = vmatpush2.msra.mxu0 0.0
    %1559 = vmatprep.subr.mxu0 0.0
    %1560 = vmatpush2.msra.mxu0 0.0
    %1561 = vmatprep.subr.mxu0 0.0
    %1562 = vmatpush2.msra.mxu0 0.0
    %1563 = vmatprep.subr.mxu0 0.0
    %1564 = vmatpush2.msra.mxu0 0.0
    %1565 = vmatprep.subr.mxu0 0.0
    %1566 = vmatpush2.msra.mxu0 0.0
    %1567 = vmatprep.mubr.f32.mxu0 0.0
    %1568 = vmatmul.mubr.f32.gmra.mxu0 %v1501
    %v1569 = vpop.f32.mrf.mxu0
    %v1570 = vadd.f32 0.0, %v1569
    %v1571 = vpop.f32.mrf.mxu0
    %1572 = vdwg.mxu0
    %1573 = vrot.lane.b32.xlu0 %v1405, 112
    %v1574 = vpop.permute.xlu0 %1573
    %1575 = vrot.lane.b32.xlu0 %v1405, 80
    %v1576 = vpop.permute.xlu0 %1575
    %v1577 = vsel %vm661, %v1574, 0
    %v1579 = vsel %vm661, %v1576, 0
    %1581 = vmatprep.subr.mxu0 0.0
    %1582 = vmatpush1.xpose.msra.mxu0 0.0
    %1583 = vmatprep.subr.mxu0 0.0
    %1584 = vmatpush1.xpose.msra.mxu0 0.0
    %1585 = vmatprep.subr.mxu0 0.0
    %1586 = vmatpush1.xpose.msra.mxu0 0.0
    %1587 = vmatprep.subr.mxu0 0.0
    %1588 = vmatpush1.xpose.msra.mxu0 0.0
    %1589 = vmatprep.subr.mxu0 0.0
    %1590 = vmatpush1.xpose.msra.mxu0 0.0
    %1591 = vmatprep.subr.mxu0 0.0
    %1592 = vmatpush1.xpose.msra.mxu0 0.0
    %1593 = vmatprep.subr.mxu0 0.0
    %1594 = vmatpush1.xpose.msra.mxu0 0.0
    %1595 = vmatprep.subr.mxu0 0.0
    %1596 = vmatpush1.xpose.msra.mxu0 0.0
    %1597 = vmatprep.subr.mxu0 0.0
    %1598 = vmatpush1.xpose.msra.mxu0 0.0
    %1599 = vmatprep.subr.mxu0 0.0
    %1600 = vmatpush1.xpose.msra.mxu0 0.0
    %1601 = vmatprep.subr.mxu0 0.0
    %1602 = vmatpush1.xpose.msra.mxu0 0.0
    %1603 = vmatprep.subr.mxu0 0.0
    %1604 = vmatpush1.xpose.msra.mxu0 0.0
    %1605 = vmatprep.subr.mxu0 0.0
    %1606 = vmatpush1.xpose.msra.mxu0 0.0
    %1607 = vmatprep.subr.mxu0 0.0
    %1608 = vmatpush1.xpose.msra.mxu0 0.0
    %1609 = vmatprep.subr.mxu0 0.0
    %1610 = vmatpush1.xpose.msra.mxu0 0.0
    %1611 = vmatprep.subr.mxu0 0.0
    %1612 = vmatpush1.xpose.msra.mxu0 %v1579
    %1613 = vmatprep.subr.mxu0 0.0
    %1614 = vmatpush2.xpose.msra.mxu0 0.0
    %1615 = vmatprep.subr.mxu0 0.0
    %1616 = vmatpush2.xpose.msra.mxu0 0.0
    %1617 = vmatprep.subr.mxu0 0.0
    %1618 = vmatpush2.xpose.msra.mxu0 0.0
    %1619 = vmatprep.subr.mxu0 0.0
    %1620 = vmatpush2.xpose.msra.mxu0 0.0
    %1621 = vmatprep.subr.mxu0 0.0
    %1622 = vmatpush2.xpose.msra.mxu0 0.0
    %1623 = vmatprep.subr.mxu0 0.0
    %1624 = vmatpush2.xpose.msra.mxu0 0.0
    %1625 = vmatprep.subr.mxu0 0.0
    %1626 = vmatpush2.xpose.msra.mxu0 0.0
    %1627 = vmatprep.subr.mxu0 0.0
    %1628 = vmatpush2.xpose.msra.mxu0 0.0
    %1629 = vmatprep.subr.mxu0 0.0
    %1630 = vmatpush2.xpose.msra.mxu0 0.0
    %1631 = vmatprep.subr.mxu0 0.0
    %1632 = vmatpush2.xpose.msra.mxu0 0.0
    %1633 = vmatprep.subr.mxu0 0.0
    %1634 = vmatpush2.xpose.msra.mxu0 0.0
    %1635 = vmatprep.subr.mxu0 0.0
    %1636 = vmatpush2.xpose.msra.mxu0 0.0
    %1637 = vmatprep.subr.mxu0 0.0
    %1638 = vmatpush2.xpose.msra.mxu0 0.0
    %1639 = vmatprep.subr.mxu0 0.0
    %1640 = vmatpush2.xpose.msra.mxu0 0.0
    %1641 = vmatprep.subr.mxu0 0.0
    %1642 = vmatpush2.xpose.msra.mxu0 0.0
    %1643 = vmatprep.subr.mxu0 0.0
    %1644 = vmatpush2.xpose.msra.mxu0 0.0
    %1645 = vmatprep.mubr.f32.mxu0 0.0
    %1646 = vmatmul.mubr.f32.gmra.mxu0 %v1577
    %v1647 = vpop.f32.mrf.mxu0
    %v1648 = vadd.f32 0.0, %v1647
    %v1649 = vpop.f32.mrf.mxu0
    %1650 = vdwg.mxu0
    %v1651 = vmul.f32 %v1648, 0.25
    %v1652 = vsel %vm737, %v1651, -inf
    %1653 = vmax.xlane.f32.xlu0 %v1652
    %v1654 = vpop.xlane.xlu0 %1653
    %v1655 = vsub.f32 %v1651, %v1654
    %v1656 = vmul.f32 %v1655, 1.442695
    %v1657 = vpow.pop %v1656
    %v1658 = vsel %vm737, %v1657, 0.0
    %1659 = vadd.xlane.f32.xlu0 %v1658
    %v1660 = vpop.xlane.xlu0 %1659
    %v1661 = vrcp.pop %v1660
    %v1662 = vmul.f32 %v1657, %v1661
    %1663 = vrot.lane.b32.xlu0 %v1405, 48
    %v1664 = vpop.permute.xlu0 %1663
    %v1667 = vsel %vm737, %v1662, 0
    %1669 = vmatprep.subr.mxu0 0.0
    %1670 = vmatpush1.msra.mxu0 0.0
    %1671 = vmatprep.subr.mxu0 0.0
    %1672 = vmatpush1.msra.mxu0 0.0
    %1673 = vmatprep.subr.mxu0 0.0
    %1674 = vmatpush1.msra.mxu0 0.0
    %1675 = vmatprep.subr.mxu0 0.0
    %1676 = vmatpush1.msra.mxu0 0.0
    %1677 = vmatprep.subr.mxu0 0.0
    %1678 = vmatpush1.msra.mxu0 0.0
    %1679 = vmatprep.subr.mxu0 0.0
    %1680 = vmatpush1.msra.mxu0 0.0
    %1681 = vmatprep.subr.mxu0 0.0
    %1682 = vmatpush1.msra.mxu0 0.0
    %1683 = vmatprep.subr.mxu0 0.0
    %1684 = vmatpush1.msra.mxu0 0.0
    %1685 = vmatprep.subr.mxu0 0.0
    %1686 = vmatpush1.msra.mxu0 0.0
    %1687 = vmatprep.subr.mxu0 0.0
    %1688 = vmatpush1.msra.mxu0 0.0
    %1689 = vmatprep.subr.mxu0 0.0
    %1690 = vmatpush1.msra.mxu0 0.0
    %1691 = vmatprep.subr.mxu0 0.0
    %1692 = vmatpush1.msra.mxu0 0.0
    %1693 = vmatprep.subr.mxu0 0.0
    %1694 = vmatpush1.msra.mxu0 0.0
    %1695 = vmatprep.subr.mxu0 0.0
    %1696 = vmatpush1.msra.mxu0 0.0
    %1697 = vmatprep.subr.mxu0 0.0
    %1698 = vmatpush1.msra.mxu0 0.0
    %1699 = vmatprep.subr.mxu0 0.0
    %1700 = vmatpush1.msra.mxu0 %v1664
    %1701 = vmatprep.subr.mxu0 0.0
    %1702 = vmatpush2.msra.mxu0 0.0
    %1703 = vmatprep.subr.mxu0 0.0
    %1704 = vmatpush2.msra.mxu0 0.0
    %1705 = vmatprep.subr.mxu0 0.0
    %1706 = vmatpush2.msra.mxu0 0.0
    %1707 = vmatprep.subr.mxu0 0.0
    %1708 = vmatpush2.msra.mxu0 0.0
    %1709 = vmatprep.subr.mxu0 0.0
    %1710 = vmatpush2.msra.mxu0 0.0
    %1711 = vmatprep.subr.mxu0 0.0
    %1712 = vmatpush2.msra.mxu0 0.0
    %1713 = vmatprep.subr.mxu0 0.0
    %1714 = vmatpush2.msra.mxu0 0.0
    %1715 = vmatprep.subr.mxu0 0.0
    %1716 = vmatpush2.msra.mxu0 0.0
    %1717 = vmatprep.subr.mxu0 0.0
    %1718 = vmatpush2.msra.mxu0 0.0
    %1719 = vmatprep.subr.mxu0 0.0
    %1720 = vmatpush2.msra.mxu0 0.0
    %1721 = vmatprep.subr.mxu0 0.0
    %1722 = vmatpush2.msra.mxu0 0.0
    %1723 = vmatprep.subr.mxu0 0.0
    %1724 = vmatpush2.msra.mxu0 0.0
    %1725 = vmatprep.subr.mxu0 0.0
    %1726 = vmatpush2.msra.mxu0 0.0
    %1727 = vmatprep.subr.mxu0 0.0
    %1728 = vmatpush2.msra.mxu0 0.0
    %1729 = vmatprep.subr.mxu0 0.0
    %1730 = vmatpush2.msra.mxu0 0.0
    %1731 = vmatprep.subr.mxu0 0.0
    %1732 = vmatpush2.msra.mxu0 0.0
    %1733 = vmatprep.mubr.f32.mxu0 0.0
    %1734 = vmatmul.mubr.f32.gmra.mxu0 %v1667
    %v1735 = vpop.f32.mrf.mxu0
    %v1736 = vadd.f32 0.0, %v1735
    %v1737 = vpop.f32.mrf.mxu0
    %1738 = vdwg.mxu0
    %1740 = vrot.lane.b32.xlu0 %v1736, 16
    %v1741 = vpop.permute.xlu0 %1740
    %v1743 = vsel %vm661, %v1570, %v1741
    %s1744 = scalar_lea.vmem %s7, 32
    %v1745 = vld [vmem:[%s1744] sm:$0xff]
    %v1746 = vld [vmem:[%s1744 + $0x8] sm:$0xff]
    %v1747 = vld [vmem:[%s1744 + $0x10] sm:$0xff]
    %v1748 = vld [vmem:[%s1744 + $0x18] sm:$0xff]
    %s1749 = scalar_lea.vmem %s8, 1
    %v1750 = vld [vmem:[%s1749] sm:$0x1]
    %v1752 = vlaneseq
    %v1753 = vshrl.u32 %v1752, 7
    %v1754 = vsub.s32 0, %v1753
    %v1755 = vrot.slane %v1750, %v1754
    %v1758 = vsel %vm545, %v1743, 0
    %1760 = vmatprep.subr.mxu0 0.0
    %1761 = vmatpush1.msra.mxu0 0.0
    %1762 = vmatprep.subr.mxu0 0.0
    %1763 = vmatpush1.msra.mxu0 0.0
    %1764 = vmatprep.subr.mxu0 0.0
    %1765 = vmatpush1.msra.mxu0 0.0
    %1766 = vmatprep.subr.mxu0 0.0
    %1767 = vmatpush1.msra.mxu0 0.0
    %1768 = vmatprep.subr.mxu0 0.0
    %1769 = vmatpush1.msra.mxu0 0.0
    %1770 = vmatprep.subr.mxu0 0.0
    %1771 = vmatpush1.msra.mxu0 0.0
    %1772 = vmatprep.subr.mxu0 0.0
    %1773 = vmatpush1.msra.mxu0 0.0
    %1774 = vmatprep.subr.mxu0 0.0
    %1775 = vmatpush1.msra.mxu0 0.0
    %1776 = vmatprep.subr.mxu0 0.0
    %1777 = vmatpush1.msra.mxu0 0.0
    %1778 = vmatprep.subr.mxu0 0.0
    %1779 = vmatpush1.msra.mxu0 0.0
    %1780 = vmatprep.subr.mxu0 0.0
    %1781 = vmatpush1.msra.mxu0 0.0
    %1782 = vmatprep.subr.mxu0 0.0
    %1783 = vmatpush1.msra.mxu0 0.0
    %1784 = vmatprep.subr.mxu0 0.0
    %1785 = vmatpush1.msra.mxu0 %v1748
    %1786 = vmatprep.subr.mxu0 0.0
    %1787 = vmatpush1.msra.mxu0 %v1747
    %1788 = vmatprep.subr.mxu0 0.0
    %1789 = vmatpush1.msra.mxu0 %v1746
    %1790 = vmatprep.subr.mxu0 0.0
    %1791 = vmatpush1.msra.mxu0 %v1745
    %1792 = vmatprep.subr.mxu0 0.0
    %1793 = vmatpush2.msra.mxu0 0.0
    %1794 = vmatprep.subr.mxu0 0.0
    %1795 = vmatpush2.msra.mxu0 0.0
    %1796 = vmatprep.subr.mxu0 0.0
    %1797 = vmatpush2.msra.mxu0 0.0
    %1798 = vmatprep.subr.mxu0 0.0
    %1799 = vmatpush2.msra.mxu0 0.0
    %1800 = vmatprep.subr.mxu0 0.0
    %1801 = vmatpush2.msra.mxu0 0.0
    %1802 = vmatprep.subr.mxu0 0.0
    %1803 = vmatpush2.msra.mxu0 0.0
    %1804 = vmatprep.subr.mxu0 0.0
    %1805 = vmatpush2.msra.mxu0 0.0
    %1806 = vmatprep.subr.mxu0 0.0
    %1807 = vmatpush2.msra.mxu0 0.0
    %1808 = vmatprep.subr.mxu0 0.0
    %1809 = vmatpush2.msra.mxu0 0.0
    %1810 = vmatprep.subr.mxu0 0.0
    %1811 = vmatpush2.msra.mxu0 0.0
    %1812 = vmatprep.subr.mxu0 0.0
    %1813 = vmatpush2.msra.mxu0 0.0
    %1814 = vmatprep.subr.mxu0 0.0
    %1815 = vmatpush2.msra.mxu0 0.0
    %1816 = vmatprep.subr.mxu0 0.0
    %1817 = vmatpush2.msra.mxu0 0.0
    %1818 = vmatprep.subr.mxu0 0.0
    %1819 = vmatpush2.msra.mxu0 0.0
    %1820 = vmatprep.subr.mxu0 0.0
    %1821 = vmatpush2.msra.mxu0 0.0
    %1822 = vmatprep.subr.mxu0 0.0
    %1823 = vmatpush2.msra.mxu0 0.0
    %1824 = vmatprep.mubr.f32.mxu0 0.0
    %1825 = vmatmul.mubr.f32.gmra.mxu0 %v1758
    %v1826 = vpop.f32.mrf.mxu0
    %v1827 = vadd.f32 %v1755, %v1826
    %v1828 = vpop.f32.mrf.mxu0
    %1829 = vdwg.mxu0
    %v1830 = vadd.f32 %v1827, %v1321
    %s1831 = scalar_lea.vmem %s9, 1
    %v1832 = vld [vmem:[%s1831] sm:$0x1]
    %s1833 = scalar_lea.vmem %s10, 1
    %v1834 = vld [vmem:[%s1833] sm:$0x1]
    %v1835 = vsel %vm545, %v1830, 0.0
    %1836 = vadd.xlane.f32.xlu0 %v1835
    %v1837 = vpop.xlane.xlu0 %1836
    %v1838 = vmul.f32 %v1837, %v549
    %v1839 = vsub.f32 %v1830, %v1838
    %v1840 = vmul.f32 %v1839, %v1839
    %v1841 = vsel %vm545, %v1840, 0.0
    %1842 = vadd.xlane.f32.xlu0 %v1841
    %v1843 = vpop.xlane.xlu0 %1842
    %v1844 = vmul.f32 %v1843, %v549
    %v1845 = vadd.f32 %v1844, 1e-05
    %v1846 = vrsqrt.pop %v1845
    %v1847 = vmul.f32 %v1839, %v1846
    %v1849 = vlaneseq
    %v1850 = vshrl.u32 %v1849, 7
    %v1851 = vsub.s32 0, %v1850
    %v1852 = vrot.slane %v1832, %v1851
    %v1854 = vmul.f32 %v1847, %v1852
    %v1856 = vlaneseq
    %v1857 = vshrl.u32 %v1856, 7
    %v1858 = vsub.s32 0, %v1857
    %v1859 = vrot.slane %v1834, %v1858
    %v1861 = vadd.f32 %v1854, %v1859
    %s1862 = scalar_lea.vmem %s11, 32
    %v1863 = vld [vmem:[%s1862] sm:$0xff]
    %v1864 = vld [vmem:[%s1862 + $0x8] sm:$0xff]
    %v1865 = vld [vmem:[%s1862 + $0x10] sm:$0xff]
    %v1866 = vld [vmem:[%s1862 + $0x18] sm:$0xff]
    %s1867 = scalar_lea.vmem %s12, 1
    %v1868 = vld [vmem:[%s1867] sm:$0x1]
    %v1870 = vlaneseq
    %v1871 = vshrl.u32 %v1870, 7
    %v1872 = vsub.s32 0, %v1871
    %v1873 = vrot.slane %v1868, %v1872
    %v1876 = vsel %vm545, %v1861, 0
    %1878 = vmatprep.subr.mxu0 0.0
    %1879 = vmatpush1.msra.mxu0 0.0
    %1880 = vmatprep.subr.mxu0 0.0
    %1881 = vmatpush1.msra.mxu0 0.0
    %1882 = vmatprep.subr.mxu0 0.0
    %1883 = vmatpush1.msra.mxu0 0.0
    %1884 = vmatprep.subr.mxu0 0.0
    %1885 = vmatpush1.msra.mxu0 0.0
    %1886 = vmatprep.subr.mxu0 0.0
    %1887 = vmatpush1.msra.mxu0 0.0
    %1888 = vmatprep.subr.mxu0 0.0
    %1889 = vmatpush1.msra.mxu0 0.0
    %1890 = vmatprep.subr.mxu0 0.0
    %1891 = vmatpush1.msra.mxu0 0.0
    %1892 = vmatprep.subr.mxu0 0.0
    %1893 = vmatpush1.msra.mxu0 0.0
    %1894 = vmatprep.subr.mxu0 0.0
    %1895 = vmatpush1.msra.mxu0 0.0
    %1896 = vmatprep.subr.mxu0 0.0
    %1897 = vmatpush1.msra.mxu0 0.0
    %1898 = vmatprep.subr.mxu0 0.0
    %1899 = vmatpush1.msra.mxu0 0.0
    %1900 = vmatprep.subr.mxu0 0.0
    %1901 = vmatpush1.msra.mxu0 0.0
    %1902 = vmatprep.subr.mxu0 0.0
    %1903 = vmatpush1.msra.mxu0 %v1866
    %1904 = vmatprep.subr.mxu0 0.0
    %1905 = vmatpush1.msra.mxu0 %v1865
    %1906 = vmatprep.subr.mxu0 0.0
    %1907 = vmatpush1.msra.mxu0 %v1864
    %1908 = vmatprep.subr.mxu0 0.0
    %1909 = vmatpush1.msra.mxu0 %v1863
    %1910 = vmatprep.subr.mxu0 0.0
    %1911 = vmatpush2.msra.mxu0 0.0
    %1912 = vmatprep.subr.mxu0 0.0
    %1913 = vmatpush2.msra.mxu0 0.0
    %1914 = vmatprep.subr.mxu0 0.0
    %1915 = vmatpush2.msra.mxu0 0.0
    %1916 = vmatprep.subr.mxu0 0.0
    %1917 = vmatpush2.msra.mxu0 0.0
    %1918 = vmatprep.subr.mxu0 0.0
    %1919 = vmatpush2.msra.mxu0 0.0
    %1920 = vmatprep.subr.mxu0 0.0
    %1921 = vmatpush2.msra.mxu0 0.0
    %1922 = vmatprep.subr.mxu0 0.0
    %1923 = vmatpush2.msra.mxu0 0.0
    %1924 = vmatprep.subr.mxu0 0.0
    %1925 = vmatpush2.msra.mxu0 0.0
    %1926 = vmatprep.subr.mxu0 0.0
    %1927 = vmatpush2.msra.mxu0 0.0
    %1928 = vmatprep.subr.mxu0 0.0
    %1929 = vmatpush2.msra.mxu0 0.0
    %1930 = vmatprep.subr.mxu0 0.0
    %1931 = vmatpush2.msra.mxu0 0.0
    %1932 = vmatprep.subr.mxu0 0.0
    %1933 = vmatpush2.msra.mxu0 0.0
    %1934 = vmatprep.subr.mxu0 0.0
    %1935 = vmatpush2.msra.mxu0 0.0
    %1936 = vmatprep.subr.mxu0 0.0
    %1937 = vmatpush2.msra.mxu0 0.0
    %1938 = vmatprep.subr.mxu0 0.0
    %1939 = vmatpush2.msra.mxu0 0.0
    %1940 = vmatprep.subr.mxu0 0.0
    %1941 = vmatpush2.msra.mxu0 0.0
    %1942 = vmatprep.mubr.f32.mxu0 0.0
    %1943 = vmatmul.mubr.f32.gmra.mxu0 %v1876
    %v1944 = vpop.f32.mrf.mxu0
    %v1945 = vadd.f32 %v1873, %v1944
    %v1946 = vpop.f32.mrf.mxu0
    %1947 = vdwg.mxu0
    %v1948 = vmul.f32 %v1945, 0.5
    %v1949 = vmul.f32 %v1945, 0.044715
    %v1950 = vmul.f32 %v1949, %v1945
    %v1951 = vmul.f32 %v1950, %v1945
    %v1952 = vadd.f32 %v1945, %v1951
    %v1953 = vmul.f32 %v1952, 0.7978846
    %v1954 = vtanh.pop %v1953
    %v1955 = vadd.f32 %v1954, 1.0
    %v1956 = vmul.f32 %v1948, %v1955
    %s1957 = scalar_lea.vmem %s13, 64
    %v1958 = vld [vmem:[%s1957] sm:$0xff]
    %v1959 = vld [vmem:[%s1957 + $0x8] sm:$0xff]
    %v1960 = vld [vmem:[%s1957 + $0x10] sm:$0xff]
    %v1961 = vld [vmem:[%s1957 + $0x18] sm:$0xff]
    %v1962 = vld [vmem:[%s1957 + $0x20] sm:$0xff]
    %v1963 = vld [vmem:[%s1957 + $0x28] sm:$0xff]
    %v1964 = vld [vmem:[%s1957 + $0x30] sm:$0xff]
    %v1965 = vld [vmem:[%s1957 + $0x38] sm:$0xff]
    %s1966 = scalar_lea.vmem %s14, 1
    %v1967 = vld [vmem:[%s1966] sm:$0x1]
    %v1969 = vlaneseq
    %v1970 = vshrl.u32 %v1969, 7
    %v1971 = vsub.s32 0, %v1970
    %v1972 = vrot.slane %v1967, %v1971
    %v1975 = vsel %vm1218, %v1956, 0
    %1977 = vmatprep.subr.mxu0 0.0
    %1978 = vmatpush1.msra.mxu0 0.0
    %1979 = vmatprep.subr.mxu0 0.0
    %1980 = vmatpush1.msra.mxu0 0.0
    %1981 = vmatprep.subr.mxu0 0.0
    %1982 = vmatpush1.msra.mxu0 0.0
    %1983 = vmatprep.subr.mxu0 0.0
    %1984 = vmatpush1.msra.mxu0 0.0
    %1985 = vmatprep.subr.mxu0 0.0
    %1986 = vmatpush1.msra.mxu0 0.0
    %1987 = vmatprep.subr.mxu0 0.0
    %1988 = vmatpush1.msra.mxu0 0.0
    %1989 = vmatprep.subr.mxu0 0.0
    %1990 = vmatpush1.msra.mxu0 0.0
    %1991 = vmatprep.subr.mxu0 0.0
    %1992 = vmatpush1.msra.mxu0 0.0
    %1993 = vmatprep.subr.mxu0 0.0
    %1994 = vmatpush1.msra.mxu0 %v1965
    %1995 = vmatprep.subr.mxu0 0.0
    %1996 = vmatpush1.msra.mxu0 %v1964
    %1997 = vmatprep.subr.mxu0 0.0
    %1998 = vmatpush1.msra.mxu0 %v1963
    %1999 = vmatprep.subr.mxu0 0.0
    %2000 = vmatpush1.msra.mxu0 %v1962
    %2001 = vmatprep.subr.mxu0 0.0
    %2002 = vmatpush1.msra.mxu0 %v1961
    %2003 = vmatprep.subr.mxu0 0.0
    %2004 = vmatpush1.msra.mxu0 %v1960
    %2005 = vmatprep.subr.mxu0 0.0
    %2006 = vmatpush1.msra.mxu0 %v1959
    %2007 = vmatprep.subr.mxu0 0.0
    %2008 = vmatpush1.msra.mxu0 %v1958
    %2009 = vmatprep.subr.mxu0 0.0
    %2010 = vmatpush2.msra.mxu0 0.0
    %2011 = vmatprep.subr.mxu0 0.0
    %2012 = vmatpush2.msra.mxu0 0.0
    %2013 = vmatprep.subr.mxu0 0.0
    %2014 = vmatpush2.msra.mxu0 0.0
    %2015 = vmatprep.subr.mxu0 0.0
    %2016 = vmatpush2.msra.mxu0 0.0
    %2017 = vmatprep.subr.mxu0 0.0
    %2018 = vmatpush2.msra.mxu0 0.0
    %2019 = vmatprep.subr.mxu0 0.0
    %2020 = vmatpush2.msra.mxu0 0.0
    %2021 = vmatprep.subr.mxu0 0.0
    %2022 = vmatpush2.msra.mxu0 0.0
    %2023 = vmatprep.subr.mxu0 0.0
    %2024 = vmatpush2.msra.mxu0 0.0
    %2025 = vmatprep.subr.mxu0 0.0
    %2026 = vmatpush2.msra.mxu0 0.0
    %2027 = vmatprep.subr.mxu0 0.0
    %2028 = vmatpush2.msra.mxu0 0.0
    %2029 = vmatprep.subr.mxu0 0.0
    %2030 = vmatpush2.msra.mxu0 0.0
    %2031 = vmatprep.subr.mxu0 0.0
    %2032 = vmatpush2.msra.mxu0 0.0
    %2033 = vmatprep.subr.mxu0 0.0
    %2034 = vmatpush2.msra.mxu0 0.0
    %2035 = vmatprep.subr.mxu0 0.0
    %2036 = vmatpush2.msra.mxu0 0.0
    %2037 = vmatprep.subr.mxu0 0.0
    %2038 = vmatpush2.msra.mxu0 0.0
    %2039 = vmatprep.subr.mxu0 0.0
    %2040 = vmatpush2.msra.mxu0 0.0
    %2041 = vmatprep.mubr.f32.mxu0 0.0
    %2042 = vmatmul.mubr.f32.gmra.mxu0 %v1975
    %v2043 = vpop.f32.mrf.mxu0
    %v2044 = vadd.f32 %v1972, %v2043
    %v2045 = vpop.f32.mrf.mxu0
    %2046 = vdwg.mxu0
    %v2047 = vadd.f32 %v2044, %v1861
    %s2048 = scalar_lea.vmem %s15, 1
    %v2049 = vld [vmem:[%s2048] sm:$0x1]
    %s2050 = scalar_lea.vmem %s16, 1
    %v2051 = vld [vmem:[%s2050] sm:$0x1]
    %v2052 = vsel %vm545, %v2047, 0.0
    %2053 = vadd.xlane.f32.xlu0 %v2052
    %v2054 = vpop.xlane.xlu0 %2053
    %v2055 = vmul.f32 %v2054, %v549
    %v2056 = vsub.f32 %v2047, %v2055
    %v2057 = vmul.f32 %v2056, %v2056
    %v2058 = vsel %vm545, %v2057, 0.0
    %2059 = vadd.xlane.f32.xlu0 %v2058
    %v2060 = vpop.xlane.xlu0 %2059
    %v2061 = vmul.f32 %v2060, %v549
    %v2062 = vadd.f32 %v2061, 1e-05
    %v2063 = vrsqrt.pop %v2062
    %v2064 = vmul.f32 %v2056, %v2063
    %v2066 = vlaneseq
    %v2067 = vshrl.u32 %v2066, 7
    %v2068 = vsub.s32 0, %v2067
    %v2069 = vrot.slane %v2049, %v2068
    %v2071 = vmul.f32 %v2064, %v2069
    %v2073 = vlaneseq
    %v2074 = vshrl.u32 %v2073, 7
    %v2075 = vsub.s32 0, %v2074
    %v2076 = vrot.slane %v2051, %v2075
    %v2078 = vadd.f32 %v2071, %v2076
    %v2079 = vld [vmem:[%s17] sm:$0xff]
    %v2080 = vld [vmem:[%s17 + $0x8] sm:$0xff]
    %v2081 = vld [vmem:[%s17 + $0x10] sm:$0xff]
    %v2082 = vld [vmem:[%s17 + $0x18] sm:$0xff]
    %v2083 = vld [vmem:[%s18] sm:$0x1]
    %v2085 = vlaneseq
    %v2086 = vshrl.u32 %v2085, 7
    %v2087 = vsub.s32 0, %v2086
    %v2088 = vrot.slane %v2083, %v2087
    %v2091 = vsel %vm545, %v2078, 0
    %2093 = vmatprep.subr.mxu0 0.0
    %2094 = vmatpush1.msra.mxu0 0.0
    %2095 = vmatprep.subr.mxu0 0.0
    %2096 = vmatpush1.msra.mxu0 0.0
    %2097 = vmatprep.subr.mxu0 0.0
    %2098 = vmatpush1.msra.mxu0 0.0
    %2099 = vmatprep.subr.mxu0 0.0
    %2100 = vmatpush1.msra.mxu0 0.0
    %2101 = vmatprep.subr.mxu0 0.0
    %2102 = vmatpush1.msra.mxu0 0.0
    %2103 = vmatprep.subr.mxu0 0.0
    %2104 = vmatpush1.msra.mxu0 0.0
    %2105 = vmatprep.subr.mxu0 0.0
    %2106 = vmatpush1.msra.mxu0 0.0
    %2107 = vmatprep.subr.mxu0 0.0
    %2108 = vmatpush1.msra.mxu0 0.0
    %2109 = vmatprep.subr.mxu0 0.0
    %2110 = vmatpush1.msra.mxu0 0.0
    %2111 = vmatprep.subr.mxu0 0.0
    %2112 = vmatpush1.msra.mxu0 0.0
    %2113 = vmatprep.subr.mxu0 0.0
    %2114 = vmatpush1.msra.mxu0 0.0
    %2115 = vmatprep.subr.mxu0 0.0
    %2116 = vmatpush1.msra.mxu0 0.0
    %2117 = vmatprep.subr.mxu0 0.0
    %2118 = vmatpush1.msra.mxu0 %v2082
    %2119 = vmatprep.subr.mxu0 0.0
    %2120 = vmatpush1.msra.mxu0 %v2081
    %2121 = vmatprep.subr.mxu0 0.0
    %2122 = vmatpush1.msra.mxu0 %v2080
    %2123 = vmatprep.subr.mxu0 0.0
    %2124 = vmatpush1.msra.mxu0 %v2079
    %2125 = vmatprep.subr.mxu0 0.0
    %2126 = vmatpush2.msra.mxu0 0.0
    %2127 = vmatprep.subr.mxu0 0.0
    %2128 = vmatpush2.msra.mxu0 0.0
    %2129 = vmatprep.subr.mxu0 0.0
    %2130 = vmatpush2.msra.mxu0 0.0
    %2131 = vmatprep.subr.mxu0 0.0
    %2132 = vmatpush2.msra.mxu0 0.0
    %2133 = vmatprep.subr.mxu0 0.0
    %2134 = vmatpush2.msra.mxu0 0.0
    %2135 = vmatprep.subr.mxu0 0.0
    %2136 = vmatpush2.msra.mxu0 0.0
    %2137 = vmatprep.subr.mxu0 0.0
    %2138 = vmatpush2.msra.mxu0 0.0
    %2139 = vmatprep.subr.mxu0 0.0
    %2140 = vmatpush2.msra.mxu0 0.0
    %2141 = vmatprep.subr.mxu0 0.0
    %2142 = vmatpush2.msra.mxu0 0.0
    %2143 = vmatprep.subr.mxu0 0.0
    %2144 = vmatpush2.msra.mxu0 0.0
    %2145 = vmatprep.subr.mxu0 0.0
    %2146 = vmatpush2.msra.mxu0 0.0
    %2147 = vmatprep.subr.mxu0 0.0
    %2148 = vmatpush2.msra.mxu0 0.0
    %2149 = vmatprep.subr.mxu0 0.0
    %2150 = vmatpush2.msra.mxu0 0.0
    %2151 = vmatprep.subr.mxu0 0.0
    %2152 = vmatpush2.msra.mxu0 0.0
    %2153 = vmatprep.subr.mxu0 0.0
    %2154 = vmatpush2.msra.mxu0 0.0
    %2155 = vmatprep.subr.mxu0 0.0
    %2156 = vmatpush2.msra.mxu0 0.0
    %2157 = vmatprep.mubr.f32.mxu0 0.0
    %2158 = vmatmul.mubr.f32.gmra.mxu0 %v2091
    %v2159 = vpop.f32.mrf.mxu0
    %v2160 = vadd.f32 %v2088, %v2159
    %v2161 = vpop.f32.mrf.mxu0
    %2162 = vdwg.mxu0
    %v2163 = vmul.f32 %v2160, 0.5
    %v2164 = vmul.f32 %v2160, 0.044715
    %v2165 = vmul.f32 %v2164, %v2160
    %v2166 = vmul.f32 %v2165, %v2160
    %v2167 = vadd.f32 %v2160, %v2166
    %v2168 = vmul.f32 %v2167, 0.7978846
    %v2169 = vtanh.pop %v2168
    %v2170 = vadd.f32 %v2169, 1.0
    %v2171 = vmul.f32 %v2163, %v2170
    %v2172 = vld [vmem:[%s19] sm:$0x1]
    %v2173 = vld [vmem:[%s20] sm:$0x1]
    %v2174 = vsel %vm545, %v2171, 0.0
    %2175 = vadd.xlane.f32.xlu0 %v2174
    %v2176 = vpop.xlane.xlu0 %2175
    %v2177 = vmul.f32 %v2176, %v549
    %v2178 = vsub.f32 %v2171, %v2177
    %v2179 = vmul.f32 %v2178, %v2178
    %v2180 = vsel %vm545, %v2179, 0.0
    %2181 = vadd.xlane.f32.xlu0 %v2180
    %v2182 = vpop.xlane.xlu0 %2181
    %v2183 = vmul.f32 %v2182, %v549
    %v2184 = vadd.f32 %v2183, 1e-05
    %v2185 = vrsqrt.pop %v2184
    %v2186 = vmul.f32 %v2178, %v2185
    %v2188 = vlaneseq
    %v2189 = vshrl.u32 %v2188, 7
    %v2190 = vsub.s32 0, %v2189
    %v2191 = vrot.slane %v2172, %v2190
    %v2193 = vmul.f32 %v2186, %v2191
    %v2195 = vlaneseq
    %v2196 = vshrl.u32 %v2195, 7
    %v2197 = vsub.s32 0, %v2196
    %v2198 = vrot.slane %v2173, %v2197
    %v2200 = vadd.f32 %v2193, %v2198
    %v2201 = vld [vmem:[%s21] sm:$0xff]
    %v2202 = vld [vmem:[%s21 + $0x8] sm:$0xff]
    %v2203 = vld [vmem:[%s21 + $0x10] sm:$0xff]
    %v2204 = vld [vmem:[%s21 + $0x18] sm:$0xff]
    %v2205 = vld [vmem:[%s21 + $0x20] sm:$0xff]
    %v2206 = vld [vmem:[%s21 + $0x28] sm:$0xff]
    %v2207 = vld [vmem:[%s21 + $0x30] sm:$0xff]
    %v2208 = vld [vmem:[%s21 + $0x38] sm:$0xff]
    %v2209 = vld [vmem:[%s21 + $0x40] sm:$0xff]
    %v2210 = vld [vmem:[%s21 + $0x48] sm:$0xff]
    %v2211 = vld [vmem:[%s21 + $0x50] sm:$0xff]
    %v2212 = vld [vmem:[%s21 + $0x58] sm:$0xff]
    %v2213 = vld [vmem:[%s21 + $0x60] sm:$0xff]
    %v2214 = vld [vmem:[%s21 + $0x68] sm:$0xff]
    %v2215 = vld [vmem:[%s21 + $0x70] sm:$0xff]
    %v2216 = vld [vmem:[%s21 + $0x78] sm:$0xff]
    %v2217 = vld [vmem:[%s21 + $0x80] sm:$0xff]
    %v2218 = vld [vmem:[%s21 + $0x88] sm:$0xff]
    %v2219 = vld [vmem:[%s21 + $0x90] sm:$0xff]
    %v2220 = vld [vmem:[%s21 + $0x98] sm:$0xff]
    %v2221 = vld [vmem:[%s21 + $0xa0] sm:$0xff]
    %v2222 = vld [vmem:[%s21 + $0xa8] sm:$0xff]
    %v2223 = vld [vmem:[%s21 + $0xb0] sm:$0xff]
    %v2224 = vld [vmem:[%s21 + $0xb8] sm:$0xff]
    %v2225 = vld [vmem:[%s21 + $0xc0] sm:$0xff]
    %v2226 = vld [vmem:[%s21 + $0xc8] sm:$0xff]
    %v2227 = vld [vmem:[%s21 + $0xd0] sm:$0xff]
    %v2228 = vld [vmem:[%s21 + $0xd8] sm:$0xff]
    %v2229 = vld [vmem:[%s22] sm:$0xff]
    %v2231 = vlaneseq
    %v2232 = vshrl.u32 %v2231, 7
    %v2233 = vsub.s32 0, %v2232
    %v2234 = vrot.slane %v2229, %v2233
    %v2235 = vlaneseq
    %v2236 = vshrl.u32 %v2235, 7
    %v2237 = vsub.s32 1, %v2236
    %v2238 = vrot.slane %v2229, %v2237
    %v2239 = vlaneseq
    %v2240 = vshrl.u32 %v2239, 7
    %v2241 = vsub.s32 2, %v2240
    %v2242 = vrot.slane %v2229, %v2241
    %v2243 = vlaneseq
    %v2244 = vshrl.u32 %v2243, 7
    %v2245 = vsub.s32 3, %v2244
    %v2246 = vrot.slane %v2229, %v2245
    %v2247 = vlaneseq
    %v2248 = vshrl.u32 %v2247, 7
    %v2249 = vsub.s32 4, %v2248
    %v2250 = vrot.slane %v2229, %v2249
    %v2251 = vlaneseq
    %v2252 = vshrl.u32 %v2251, 7
    %v2253 = vsub.s32 5, %v2252
    %v2254 = vrot.slane %v2229, %v2253
    %v2255 = vlaneseq
    %v2256 = vshrl.u32 %v2255, 7
    %v2257 = vsub.s32 6, %v2256
    %v2258 = vrot.slane %v2229, %v2257
    %v2267 = vsel %vm545, %v2200, 0
    %2269 = vmatprep.subr.mxu0 0.0
    %2270 = vmatpush1.msra.mxu0 0.0
    %2271 = vmatprep.subr.mxu0 0.0
    %2272 = vmatpush1.msra.mxu0 0.0
    %2273 = vmatprep.subr.mxu0 0.0
    %2274 = vmatpush1.msra.mxu0 0.0
    %2275 = vmatprep.subr.mxu0 0.0
    %2276 = vmatpush1.msra.mxu0 0.0
    %2277 = vmatprep.subr.mxu0 0.0
    %2278 = vmatpush1.msra.mxu0 0.0
    %2279 = vmatprep.subr.mxu0 0.0
    %2280 = vmatpush1.msra.mxu0 0.0
    %2281 = vmatprep.subr.mxu0 0.0
    %2282 = vmatpush1.msra.mxu0 0.0
    %2283 = vmatprep.subr.mxu0 0.0
    %2284 = vmatpush1.msra.mxu0 0.0
    %2285 = vmatprep.subr.mxu0 0.0
    %2286 = vmatpush1.msra.mxu0 0.0
    %2287 = vmatprep.subr.mxu0 0.0
    %2288 = vmatpush1.msra.mxu0 0.0
    %2289 = vmatprep.subr.mxu0 0.0
    %2290 = vmatpush1.msra.mxu0 0.0
    %2291 = vmatprep.subr.mxu0 0.0
    %2292 = vmatpush1.msra.mxu0 0.0
    %2293 = vmatprep.subr.mxu0 %v2223
    %2294 = vmatpush1.msra.mxu0 %v2222
    %2295 = vmatprep.subr.mxu0 %v2216
    %2296 = vmatpush1.msra.mxu0 %v2215
    %2297 = vmatprep.subr.mxu0 %v2209
    %2298 = vmatpush1.msra.mxu0 %v2208
    %2299 = vmatprep.subr.mxu0 %v2202
    %2300 = vmatpush1.msra.mxu0 %v2201
    %2301 = vmatprep.subr.mxu0 0.0
    %2302 = vmatpush2.msra.mxu0 0.0
    %2303 = vmatprep.subr.mxu0 0.0
    %2304 = vmatpush2.msra.mxu0 0.0
    %2305 = vmatprep.subr.mxu0 0.0
    %2306 = vmatpush2.msra.mxu0 0.0
    %2307 = vmatprep.subr.mxu0 0.0
    %2308 = vmatpush2.msra.mxu0 0.0
    %2309 = vmatprep.subr.mxu0 0.0
    %2310 = vmatpush2.msra.mxu0 0.0
    %2311 = vmatprep.subr.mxu0 0.0
    %2312 = vmatpush2.msra.mxu0 0.0
    %2313 = vmatprep.subr.mxu0 0.0
    %2314 = vmatpush2.msra.mxu0 0.0
    %2315 = vmatprep.subr.mxu0 0.0
    %2316 = vmatpush2.msra.mxu0 0.0
    %2317 = vmatprep.subr.mxu0 0.0
    %2318 = vmatpush2.msra.mxu0 0.0
    %2319 = vmatprep.subr.mxu0 0.0
    %2320 = vmatpush2.msra.mxu0 0.0
    %2321 = vmatprep.subr.mxu0 0.0
    %2322 = vmatpush2.msra.mxu0 0.0
    %2323 = vmatprep.subr.mxu0 0.0
    %2324 = vmatpush2.msra.mxu0 0.0
    %2325 = vmatprep.subr.mxu0 0.0
    %2326 = vmatpush2.msra.mxu0 0.0
    %2327 = vmatprep.subr.mxu0 0.0
    %2328 = vmatpush2.msra.mxu0 0.0
    %2329 = vmatprep.subr.mxu0 0.0
    %2330 = vmatpush2.msra.mxu0 0.0
    %2331 = vmatprep.subr.mxu0 0.0
    %2332 = vmatpush2.msra.mxu0 0.0
    %2333 = vmatprep.mubr.f32.mxu0 0.0
    %2334 = vmatmul.mubr.f32.gmra.mxu0 %v2267
    %v2335 = vpop.f32.mrf.mxu0
    %v2336 = vadd.f32 %v2234, %v2335
    %v2337 = vpop.f32.mrf.mxu0
    %v2338 = vadd.f32 %v2238, %v2337
    %2339 = vdwg.mxu0
    %2340 = vmatprep.subr.mxu0 0.0
    %2341 = vmatpush1.msra.mxu0 0.0
    %2342 = vmatprep.subr.mxu0 0.0
    %2343 = vmatpush1.msra.mxu0 0.0
    %2344 = vmatprep.subr.mxu0 0.0
    %2345 = vmatpush1.msra.mxu0 0.0
    %2346 = vmatprep.subr.mxu0 0.0
    %2347 = vmatpush1.msra.mxu0 0.0
    %2348 = vmatprep.subr.mxu0 0.0
    %2349 = vmatpush1.msra.mxu0 0.0
    %2350 = vmatprep.subr.mxu0 0.0
    %2351 = vmatpush1.msra.mxu0 0.0
    %2352 = vmatprep.subr.mxu0 0.0
    %2353 = vmatpush1.msra.mxu0 0.0
    %2354 = vmatprep.subr.mxu0 0.0
    %2355 = vmatpush1.msra.mxu0 0.0
    %2356 = vmatprep.subr.mxu0 0.0
    %2357 = vmatpush1.msra.mxu0 0.0
    %2358 = vmatprep.subr.mxu0 0.0
    %2359 = vmatpush1.msra.mxu0 0.0
    %2360 = vmatprep.subr.mxu0 0.0
    %2361 = vmatpush1.msra.mxu0 0.0
    %2362 = vmatprep.subr.mxu0 0.0
    %2363 = vmatpush1.msra.mxu0 0.0
    %2364 = vmatprep.subr.mxu0 %v2225
    %2365 = vmatpush1.msra.mxu0 %v2224
    %2366 = vmatprep.subr.mxu0 %v2218
    %2367 = vmatpush1.msra.mxu0 %v2217
    %2368 = vmatprep.subr.mxu0 %v2211
    %2369 = vmatpush1.msra.mxu0 %v2210
    %2370 = vmatprep.subr.mxu0 %v2204
    %2371 = vmatpush1.msra.mxu0 %v2203
    %2372 = vmatprep.subr.mxu0 0.0
    %2373 = vmatpush2.msra.mxu0 0.0
    %2374 = vmatprep.subr.mxu0 0.0
    %2375 = vmatpush2.msra.mxu0 0.0
    %2376 = vmatprep.subr.mxu0 0.0
    %2377 = vmatpush2.msra.mxu0 0.0
    %2378 = vmatprep.subr.mxu0 0.0
    %2379 = vmatpush2.msra.mxu0 0.0
    %2380 = vmatprep.subr.mxu0 0.0
    %2381 = vmatpush2.msra.mxu0 0.0
    %2382 = vmatprep.subr.mxu0 0.0
    %2383 = vmatpush2.msra.mxu0 0.0
    %2384 = vmatprep.subr.mxu0 0.0
    %2385 = vmatpush2.msra.mxu0 0.0
    %2386 = vmatprep.subr.mxu0 0.0
    %2387 = vmatpush2.msra.mxu0 0.0
    %2388 = vmatprep.subr.mxu0 0.0
    %2389 = vmatpush2.msra.mxu0 0.0
    %2390 = vmatprep.subr.mxu0 0.0
    %2391 = vmatpush2.msra.mxu0 0.0
    %2392 = vmatprep.subr.mxu0 0.0
    %2393 = vmatpush2.msra.mxu0 0.0
    %2394 = vmatprep.subr.mxu0 0.0
    %2395 = vmatpush2.msra.mxu0 0.0
    %2396 = vmatprep.subr.mxu0 0.0
    %2397 = vmatpush2.msra.mxu0 0.0
    %2398 = vmatprep.subr.mxu0 0.0
    %2399 = vmatpush2.msra.mxu0 0.0
    %2400 = vmatprep.subr.mxu0 0.0
    %2401 = vmatpush2.msra.mxu0 0.0
    %2402 = vmatprep.subr.mxu0 0.0
    %2403 = vmatpush2.msra.mxu0 0.0
    %2404 = vmatprep.mubr.f32.mxu0 0.0
    %2405 = vmatmul.mubr.f32.gmra.mxu0 %v2267
    %v2406 = vpop.f32.mrf.mxu0
    %v2407 = vadd.f32 %v2242, %v2406
    %v2408 = vpop.f32.mrf.mxu0
    %v2409 = vadd.f32 %v2246, %v2408
    %2410 = vdwg.mxu0
    %2411 = vmatprep.subr.mxu0 0.0
    %2412 = vmatpush1.msra.mxu0 0.0
    %2413 = vmatprep.subr.mxu0 0.0
    %2414 = vmatpush1.msra.mxu0 0.0
    %2415 = vmatprep.subr.mxu0 0.0
    %2416 = vmatpush1.msra.mxu0 0.0
    %2417 = vmatprep.subr.mxu0 0.0
    %2418 = vmatpush1.msra.mxu0 0.0
    %2419 = vmatprep.subr.mxu0 0.0
    %2420 = vmatpush1.msra.mxu0 0.0
    %2421 = vmatprep.subr.mxu0 0.0
    %2422 = vmatpush1.msra.mxu0 0.0
    %2423 = vmatprep.subr.mxu0 0.0
    %2424 = vmatpush1.msra.mxu0 0.0
    %2425 = vmatprep.subr.mxu0 0.0
    %2426 = vmatpush1.msra.mxu0 0.0
    %2427 = vmatprep.subr.mxu0 0.0
    %2428 = vmatpush1.msra.mxu0 0.0
    %2429 = vmatprep.subr.mxu0 0.0
    %2430 = vmatpush1.msra.mxu0 0.0
    %2431 = vmatprep.subr.mxu0 0.0
    %2432 = vmatpush1.msra.mxu0 0.0
    %2433 = vmatprep.subr.mxu0 0.0
    %2434 = vmatpush1.msra.mxu0 0.0
    %2435 = vmatprep.subr.mxu0 %v2227
    %2436 = vmatpush1.msra.mxu0 %v2226
    %2437 = vmatprep.subr.mxu0 %v2220
    %2438 = vmatpush1.msra.mxu0 %v2219
    %2439 = vmatprep.subr.mxu0 %v2213
    %2440 = vmatpush1.msra.mxu0 %v2212
    %2441 = vmatprep.subr.mxu0 %v2206
    %2442 = vmatpush1.msra.mxu0 %v2205
    %2443 = vmatprep.subr.mxu0 0.0
    %2444 = vmatpush2.msra.mxu0 0.0
    %2445 = vmatprep.subr.mxu0 0.0
    %2446 = vmatpush2.msra.mxu0 0.0
    %2447 = vmatprep.subr.mxu0 0.0
    %2448 = vmatpush2.msra.mxu0 0.0
    %2449 = vmatprep.subr.mxu0 0.0
    %2450 = vmatpush2.msra.mxu0 0.0
    %2451 = vmatprep.subr.mxu0 0.0
    %2452 = vmatpush2.msra.mxu0 0.0
    %2453 = vmatprep.subr.mxu0 0.0
    %2454 = vmatpush2.msra.mxu0 0.0
    %2455 = vmatprep.subr.mxu0 0.0
    %2456 = vmatpush2.msra.mxu0 0.0
    %2457 = vmatprep.subr.mxu0 0.0
    %2458 = vmatpush2.msra.mxu0 0.0
    %2459 = vmatprep.subr.mxu0 0.0
    %2460 = vmatpush2.msra.mxu0 0.0
    %2461 = vmatprep.subr.mxu0 0.0
    %2462 = vmatpush2.msra.mxu0 0.0
    %2463 = vmatprep.subr.mxu0 0.0
    %2464 = vmatpush2.msra.mxu0 0.0
    %2465 = vmatprep.subr.mxu0 0.0
    %2466 = vmatpush2.msra.mxu0 0.0
    %2467 = vmatprep.subr.mxu0 0.0
    %2468 = vmatpush2.msra.mxu0 0.0
    %2469 = vmatprep.subr.mxu0 0.0
    %2470 = vmatpush2.msra.mxu0 0.0
    %2471 = vmatprep.subr.mxu0 0.0
    %2472 = vmatpush2.msra.mxu0 0.0
    %2473 = vmatprep.subr.mxu0 0.0
    %2474 = vmatpush2.msra.mxu0 0.0
    %2475 = vmatprep.mubr.f32.mxu0 0.0
    %2476 = vmatmul.mubr.f32.gmra.mxu0 %v2267
    %v2477 = vpop.f32.mrf.mxu0
    %v2478 = vadd.f32 %v2250, %v2477
    %v2479 = vpop.f32.mrf.mxu0
    %v2480 = vadd.f32 %v2254, %v2479
    %2481 = vdwg.mxu0
    %2482 = vmatprep.subr.mxu0 0.0
    %2483 = vmatpush1.msra.mxu0 0.0
    %2484 = vmatprep.subr.mxu0 0.0
    %2485 = vmatpush1.msra.mxu0 0.0
    %2486 = vmatprep.subr.mxu0 0.0
    %2487 = vmatpush1.msra.mxu0 0.0
    %2488 = vmatprep.subr.mxu0 0.0
    %2489 = vmatpush1.msra.mxu0 0.0
    %2490 = vmatprep.subr.mxu0 0.0
    %2491 = vmatpush1.msra.mxu0 0.0
    %2492 = vmatprep.subr.mxu0 0.0
    %2493 = vmatpush1.msra.mxu0 0.0
    %2494 = vmatprep.subr.mxu0 0.0
    %2495 = vmatpush1.msra.mxu0 0.0
    %2496 = vmatprep.subr.mxu0 0.0
    %2497 = vmatpush1.msra.mxu0 0.0
    %2498 = vmatprep.subr.mxu0 0.0
    %2499 = vmatpush1.msra.mxu0 0.0
    %2500 = vmatprep.subr.mxu0 0.0
    %2501 = vmatpush1.msra.mxu0 0.0
    %2502 = vmatprep.subr.mxu0 0.0
    %2503 = vmatpush1.msra.mxu0 0.0
    %2504 = vmatprep.subr.mxu0 0.0
    %2505 = vmatpush1.msra.mxu0 0.0
    %2506 = vmatprep.subr.mxu0 0.0
    %2507 = vmatpush1.msra.mxu0 %v2228
    %2508 = vmatprep.subr.mxu0 0.0
    %2509 = vmatpush1.msra.mxu0 %v2221
    %2510 = vmatprep.subr.mxu0 0.0
    %2511 = vmatpush1.msra.mxu0 %v2214
    %2512 = vmatprep.subr.mxu0 0.0
    %2513 = vmatpush1.msra.mxu0 %v2207
    %2514 = vmatprep.subr.mxu0 0.0
    %2515 = vmatpush2.msra.mxu0 0.0
    %2516 = vmatprep.subr.mxu0 0.0
    %2517 = vmatpush2.msra.mxu0 0.0
    %2518 = vmatprep.subr.mxu0 0.0
    %2519 = vmatpush2.msra.mxu0 0.0
    %2520 = vmatprep.subr.mxu0 0.0
    %2521 = vmatpush2.msra.mxu0 0.0
    %2522 = vmatprep.subr.mxu0 0.0
    %2523 = vmatpush2.msra.mxu0 0.0
    %2524 = vmatprep.subr.mxu0 0.0
    %2525 = vmatpush2.msra.mxu0 0.0
    %2526 = vmatprep.subr.mxu0 0.0
    %2527 = vmatpush2.msra.mxu0 0.0
    %2528 = vmatprep.subr.mxu0 0.0
    %2529 = vmatpush2.msra.mxu0 0.0
    %2530 = vmatprep.subr.mxu0 0.0
    %2531 = vmatpush2.msra.mxu0 0.0
    %2532 = vmatprep.subr.mxu0 0.0
    %2533 = vmatpush2.msra.mxu0 0.0
    %2534 = vmatprep.subr.mxu0 0.0
    %2535 = vmatpush2.msra.mxu0 0.0
    %2536 = vmatprep.subr.mxu0 0.0
    %2537 = vmatpush2.msra.mxu0 0.0
    %2538 = vmatprep.subr.mxu0 0.0
    %2539 = vmatpush2.msra.mxu0 0.0
    %2540 = vmatprep.subr.mxu0 0.0
    %2541 = vmatpush2.msra.mxu0 0.0
    %2542 = vmatprep.subr.mxu0 0.0
    %2543 = vmatpush2.msra.mxu0 0.0
    %2544 = vmatprep.subr.mxu0 0.0
    %2545 = vmatpush2.msra.mxu0 0.0
    %2546 = vmatprep.mubr.f32.mxu0 0.0
    %2547 = vmatmul.mubr.f32.gmra.mxu0 %v2267
    %v2548 = vpop.f32.mrf.mxu0
    %v2549 = vadd.f32 %v2258, %v2548
    %v2550 = vpop.f32.mrf.mxu0
    %2551 = vdwg.mxu0
    %2552 = vst [vmem:[#allocation5] sm:$0xff] %v2336
    %2553 = vst [vmem:[#allocation5 + $0x8] sm:$0xff] %v2338
    %2554 = vst [vmem:[#allocation5 + $0x10] sm:$0xff] %v2407
    %2555 = vst [vmem:[#allocation5 + $0x18] sm:$0xff] %v2409
    %2556 = vst [vmem:[#allocation5 + $0x20] sm:$0xff] %v2478
    %2557 = vst [vmem:[#allocation5 + $0x28] sm:$0xff] %v2480
    %2558 = vst [vmem:[#allocation5 + $0x30] sm:$0xff] %v2549
    // Predicated region
    $region98: #{pre_chemberta_forward.1} parent=1 // pred_check
      _
    $region99: #{pre_chemberta_forward.1} parent=1 // pred_check_branch
      %2560 = sbr.rel (0) target = $region101
    $region100: #{pre_chemberta_forward.1} parent=1 // pred_region
      %s2562 = ssub.s32 896, 896
      %2563 = vsyncadd [#allocation3], %s2562
      %s2565 = sshll.u32 [#allocation5], 4
      %s2566 = int_to_ptr.vmem [resolvable:$true] %s2565
      %2568 = dma.vmem_to_hbm [thread:$0]  %s2566, 896, %s23, [#allocation3]
    $region101: #{pre_chemberta_forward.1} parent=1 // pred_fallthru
      _
    // Predicated region
    $region102: #{pre_chemberta_forward.1} parent=1 // pred_check
      _
    $region103: #{pre_chemberta_forward.1} parent=1 // pred_check_branch
      %2570 = sbr.rel (0) target = $region105
    $region104: #{pre_chemberta_forward.1} parent=1 // pred_region
      %2571 = dma.done [#allocation3], 896
    $region105: #{pre_chemberta_forward.1} parent=1 // pred_fallthru
      _
    %2572 = vsyncpa [#allocation3], 1
    %2573 = vsyncpa [#allocation4], 1

</llo_original>
